<compile_context>
chip_gen: v7x
topology: tpu7x:2x2x1
jax: 0.10.0
libtpu: 0.0.40
codegen_flags: <defaults>
</compile_context>

<pallas_src>
import jax
import jax.numpy as jnp
from jax.experimental import pallas as pl
from jax.experimental.pallas import tpu as pltpu


def _round_up(x, m):
    return (x + m - 1) // m * m


def _leaky_relu(x, slope=0.2):
    return jnp.where(x > 0, x, slope * x)


def _pad_cols(a, n):
    return jnp.zeros(a.shape[:-1] + (n,), a.dtype).at[..., : a.shape[-1]].set(a)


# --------------------------- fused VAE kernel ------------------------------
# (bm, d2) -> 512 -> 512 -> 256 -> (mu, logvar) each (bm, nzp)
#  -> z = mu + eps*exp(0.5*logvar) -> 256 -> 512 -> 512 -> (bm, d2), sigmoid.
# Weights are bf16 (MXU, f32 accumulation); activations cast to bf16 only at
# the MXU boundary, element-wise math stays f32.
def vae_fused_kernel(x_ref, eps_ref,
                     ew1, eb1, ew2, eb2, ew3, eb3, ewm, ebm, ewl, ebl,
                     dw1, db1, dw2, db2, dw3, db3, dw4, db4,
                     mu_ref, lv_ref, xrec_ref):
    f32, bf16 = jnp.float32, jnp.bfloat16

    # ----- encoder -----
    h = x_ref[...]                                                       # bf16
    h = _leaky_relu(jnp.dot(h, ew1[...], preferred_element_type=f32) + eb1[...])
    h = _leaky_relu(jnp.dot(h.astype(bf16), ew2[...],
                            preferred_element_type=f32) + eb2[...])
    h = _leaky_relu(jnp.dot(h.astype(bf16), ew3[...],
                            preferred_element_type=f32) + eb3[...])
    hb = h.astype(bf16)
    mu = jnp.dot(hb, ewm[...], preferred_element_type=f32) + ebm[...]
    logvar = jnp.dot(hb, ewl[...], preferred_element_type=f32) + ebl[...]
    mu_ref[...] = mu
    lv_ref[...] = logvar

    # ----- reparameterize (padded latent lanes are zero -> harmless) -----
    z = mu + eps_ref[...] * jnp.exp(0.5 * logvar)

    # ----- decoder -----
    h = _leaky_relu(jnp.dot(z.astype(bf16), dw1[...],
                            preferred_element_type=f32) + db1[...])
    h = _leaky_relu(jnp.dot(h.astype(bf16), dw2[...],
                            preferred_element_type=f32) + db2[...])
    h = _leaky_relu(jnp.dot(h.astype(bf16), dw3[...],
                            preferred_element_type=f32) + db3[...])
    logits = jnp.dot(h.astype(bf16), dw4[...],
                     preferred_element_type=f32) + db4[...]
    xrec_ref[...] = jax.nn.sigmoid(logits)


# Pure-JAX reference with the same bf16/f32 mixed precision, for self-check.
def _reference_forward(params, xb, epsb):
    (ew1, eb1, ew2, eb2, ew3, eb3, ewm, ebm, ewl, ebl,
     dw1, db1, dw2, db2, dw3, db3, dw4, db4) = params
    f32, bf16 = jnp.float32, jnp.bfloat16
    h = _leaky_relu(jnp.dot(xb, ew1, preferred_element_type=f32) + eb1)
    h = _leaky_relu(jnp.dot(h.astype(bf16), ew2, preferred_element_type=f32) + eb2)
    h = _leaky_relu(jnp.dot(h.astype(bf16), ew3, preferred_element_type=f32) + eb3)
    hb = h.astype(bf16)
    mu = jnp.dot(hb, ewm, preferred_element_type=f32) + ebm
    logvar = jnp.dot(hb, ewl, preferred_element_type=f32) + ebl
    z = mu + epsb * jnp.exp(0.5 * logvar)
    h = _leaky_relu(jnp.dot(z.astype(bf16), dw1, preferred_element_type=f32) + db1)
    h = _leaky_relu(jnp.dot(h.astype(bf16), dw2, preferred_element_type=f32) + db2)
    h = _leaky_relu(jnp.dot(h.astype(bf16), dw3, preferred_element_type=f32) + db3)
    logits = jnp.dot(h.astype(bf16), dw4, preferred_element_type=f32) + db4
    return mu, logvar, jax.nn.sigmoid(logits)


def _init_linear(key, fan_in, fan_out, pad_in=None, pad_out=None,
                 w_dtype=jnp.bfloat16):
    # Deterministic init mimicking torch.nn.Linear: U(-1/sqrt(fan_in), +...).
    kw, kb = jax.random.split(key)
    bound = 1.0 / (fan_in ** 0.5)
    w = jax.random.uniform(kw, (fan_in, fan_out), jnp.float32, -bound, bound)
    b = jax.random.uniform(kb, (1, fan_out), jnp.float32, -bound, bound)
    pin = fan_in if pad_in is None else pad_in
    pout = fan_out if pad_out is None else pad_out
    if (pin, pout) != (fan_in, fan_out):
        w = jnp.zeros((pin, pout), jnp.float32).at[:fan_in, :fan_out].set(w)
        b = jnp.zeros((1, pout), jnp.float32).at[:, :fan_out].set(b)
    return w.astype(w_dtype), b  # weights bf16, biases f32


class VAEPallas:
    def __init__(self, image_size, nz=100, seed=0):
        self.image_size = int(image_size)
        self.nz = int(nz)
        self.nzp = _round_up(self.nz, 128)   # lane-dense latent width
        self.d2 = self.image_size ** 2
        d2, nz, nzp = self.d2, self.nz, self.nzp

        keys = jax.random.split(jax.random.PRNGKey(seed), 8)

        # Encoder trunk: d2 -> 512 -> 512 -> 256.
        ew1, eb1 = _init_linear(keys[0], d2, 512)
        ew2, eb2 = _init_linear(keys[1], 512, 512)
        ew3, eb3 = _init_linear(keys[2], 512, 256)
        # Encoder head Linear(256, 2*nz), split into mu/logvar heads, each
        # zero-padded to nzp columns (equivalent to torch.chunk(., 2, dim=1)).
        w4, b4 = _init_linear(keys[3], 256, 2 * nz, w_dtype=jnp.float32)
        ewm = _pad_cols(w4[:, :nz], nzp).astype(jnp.bfloat16)
        ewl = _pad_cols(w4[:, nz:], nzp).astype(jnp.bfloat16)
        ebm = _pad_cols(b4[:, :nz], nzp)
        ebl = _pad_cols(b4[:, nz:], nzp)

        # Decoder: nz -> 256 -> 512 -> 512 -> d2 (first layer zero-padded on K).
        dw1, db1 = _init_linear(keys[4], nz, 256, pad_in=nzp)
        dw2, db2 = _init_linear(keys[5], 256, 512)
        dw3, db3 = _init_linear(keys[6], 512, 512)
        dw4, db4 = _init_linear(keys[7], 512, d2)

        self.params = [ew1, eb1, ew2, eb2, ew3, eb3, ewm, ebm, ewl, ebl,
                       dw1, db1, dw2, db2, dw3, db3, dw4, db4]

    # ---- input prep: flatten, cast to bf16, pad batch/latent to tile sizes ----
    def _pad_inputs(self, x, eps_key):
        B = x.shape[0]
        bm = 256 if B >= 256 else _round_up(B, 8)
        Bp = _round_up(B, bm)
        x_flat = x.reshape(B, self.d2).astype(jnp.float32)    # nn.Flatten(1)
        xb = jnp.zeros((Bp, self.d2), jnp.bfloat16).at[:B].set(
            x_flat.astype(jnp.bfloat16))
        # eps = torch.randn_like(logvar); deterministic via eps_key here.
        eps = jax.random.normal(eps_key, (B, self.nz), jnp.float32)
        epsb = jnp.zeros((Bp, self.nzp), jnp.float32).at[:B, :self.nz].set(eps)
        return xb, epsb, B, bm, Bp

    def _cost(self, Bp):
        d2, nzp = self.d2, self.nzp
        dims = [(d2, 512), (512, 512), (512, 256), (256, nzp), (256, nzp),
                (nzp, 256), (256, 512), (512, 512), (512, d2)]
        flops = 2 * Bp * sum(k * n for k, n in dims)
        transcendentals = Bp * (nzp + d2)          # exp (reparam) + sigmoid
        bytes_accessed = (
            sum(int(p.size) * p.dtype.itemsize for p in self.params)
            + Bp * (d2 * 2 + nzp * 4)              # x (bf16) + eps (f32)
            + Bp * (2 * nzp + d2) * 4)             # outputs (f32)
        return pl.CostEstimate(flops=flops, transcendentals=transcendentals,
                               bytes_accessed=bytes_accessed)

    def _pallas_forward(self, xb, epsb, bm, Bp):
        d2, nzp = self.d2, self.nzp
        grid = (Bp // bm,)

        batch_in_specs = [
            pl.BlockSpec((bm, d2), lambda i: (i, 0)),     # x
            pl.BlockSpec((bm, nzp), lambda i: (i, 0)),    # eps
        ]
        # Weights/biases: full-array blocks, constant block index -> DMA'd once
        # and revisited across batch-grid steps.
        weight_specs = [pl.BlockSpec(p.shape, lambda i: (0, 0))
                        for p in self.params]
        out_specs = [
            pl.BlockSpec((bm, nzp), lambda i: (i, 0)),    # mu (padded)
            pl.BlockSpec((bm, nzp), lambda i: (i, 0)),    # logvar (padded)
            pl.BlockSpec((bm, d2), lambda i: (i, 0)),     # x_rec (flat)
        ]
        out_shape = (
            jax.ShapeDtypeStruct((Bp, nzp), jnp.float32),
            jax.ShapeDtypeStruct((Bp, nzp), jnp.float32),
            jax.ShapeDtypeStruct((Bp, d2), jnp.float32),
        )

        return pl.pallas_call(
            vae_fused_kernel,
            out_shape=out_shape,
            grid=grid,
            in_specs=batch_in_specs + weight_specs,
            out_specs=out_specs,
            compiler_params=pltpu.CompilerParams(
                dimension_semantics=("parallel",)),
            cost_estimate=self._cost(Bp),
        )(xb, epsb, *self.params)

    def __call__(self, x, eps_key):
        xb, epsb, B, bm, Bp = self._pad_inputs(x, eps_key)
        mu_p, lv_p, xr_p = self._pallas_forward(xb, epsb, bm, Bp)
        mu = mu_p[:B, : self.nz]
        logvar = lv_p[:B, : self.nz]
        # nn.Unflatten(1, (1, image_size, image_size))
        x_rec = xr_p[:B].reshape(B, 1, self.image_size, self.image_size)
        return x_rec, mu, logvar


if __name__ == "__main__":
    image_size = 16
    nz = 16
    batch = 2

    key = jax.random.PRNGKey(0)
    k_x, k_eps = jax.random.split(key)
    # NCHW input, single channel, like the PyTorch module expects.
    x = jax.random.uniform(k_x, (batch, 1, image_size, image_size), jnp.float32)

    model = VAEPallas(image_size=image_size, nz=nz, seed=0)
    x_rec, mu, logvar = model(x, k_eps)
    jax.block_until_ready((x_rec, mu, logvar))

    assert x_rec.shape == (batch, 1, image_size, image_size)
    assert mu.shape == (batch, nz)
    assert logvar.shape == (batch, nz)
    assert bool(jnp.all(jnp.isfinite(x_rec)))
    assert bool(jnp.all((x_rec >= 0.0) & (x_rec <= 1.0)))

    # Cross-check against a pure-JAX reference with the same bf16 weights and
    # mixed-precision contraction pattern.
    xb, epsb, B, bm, Bp = model._pad_inputs(x, k_eps)
    mu_r, lv_r, xr_r = _reference_forward(model.params, xb, epsb)
    assert bool(jnp.allclose(mu, mu_r[:batch, :nz], atol=5e-2))
    assert bool(jnp.allclose(logvar, lv_r[:batch, :nz], atol=5e-2))
    assert bool(jnp.allclose(x_rec.reshape(batch, -1), xr_r[:batch], atol=2e-2))

    print("KERNEL_OK")
</pallas_src>

<mosaic_0001>
module attributes {stable_mosaic.version = 11 : i64} {
  func.func @vae_fused_kernel(%arg0: i32, %arg1: memref<8x256xbf16, #tpu.memory_space<vmem>>, %arg2: memref<8x128xf32, #tpu.memory_space<vmem>>, %arg3: memref<256x512xbf16, #tpu.memory_space<vmem>>, %arg4: memref<1x512xf32, #tpu.memory_space<vmem>>, %arg5: memref<512x512xbf16, #tpu.memory_space<vmem>>, %arg6: memref<1x512xf32, #tpu.memory_space<vmem>>, %arg7: memref<512x256xbf16, #tpu.memory_space<vmem>>, %arg8: memref<1x256xf32, #tpu.memory_space<vmem>>, %arg9: memref<256x128xbf16, #tpu.memory_space<vmem>>, %arg10: memref<1x128xf32, #tpu.memory_space<vmem>>, %arg11: memref<256x128xbf16, #tpu.memory_space<vmem>>, %arg12: memref<1x128xf32, #tpu.memory_space<vmem>>, %arg13: memref<128x256xbf16, #tpu.memory_space<vmem>>, %arg14: memref<1x256xf32, #tpu.memory_space<vmem>>, %arg15: memref<256x512xbf16, #tpu.memory_space<vmem>>, %arg16: memref<1x512xf32, #tpu.memory_space<vmem>>, %arg17: memref<512x512xbf16, #tpu.memory_space<vmem>>, %arg18: memref<1x512xf32, #tpu.memory_space<vmem>>, %arg19: memref<512x256xbf16, #tpu.memory_space<vmem>>, %arg20: memref<1x256xf32, #tpu.memory_space<vmem>>, %arg21: memref<8x128xf32, #tpu.memory_space<vmem>>, %arg22: memref<8x128xf32, #tpu.memory_space<vmem>>, %arg23: memref<8x256xf32, #tpu.memory_space<vmem>>) attributes {dimension_semantics = [#tpu.dimension_semantics<parallel>], iteration_bounds = array<i64: 1>, scalar_prefetch = 0 : i64, scratch_operands = 0 : i64, tpu.core_type = #tpu.core_type<tc>, window_params = [{transform_indices = @transform_0, window_bounds = array<i64: 8, 256>}, {transform_indices = @transform_1, window_bounds = array<i64: 8, 128>}, {pipeline_mode = #tpu.pipeline_mode<synchronous>, transform_indices = @transform_2, window_bounds = array<i64: 256, 512>}, {pipeline_mode = #tpu.pipeline_mode<synchronous>, transform_indices = @transform_3, window_bounds = array<i64: 1, 512>}, {pipeline_mode = #tpu.pipeline_mode<synchronous>, transform_indices = @transform_4, window_bounds = array<i64: 512, 512>}, {pipeline_mode = #tpu.pipeline_mode<synchronous>, transform_indices = @transform_5, window_bounds = array<i64: 1, 512>}, {pipeline_mode = #tpu.pipeline_mode<synchronous>, transform_indices = @transform_6, window_bounds = array<i64: 512, 256>}, {pipeline_mode = #tpu.pipeline_mode<synchronous>, transform_indices = @transform_7, window_bounds = array<i64: 1, 256>}, {pipeline_mode = #tpu.pipeline_mode<synchronous>, transform_indices = @transform_8, window_bounds = array<i64: 256, 128>}, {pipeline_mode = #tpu.pipeline_mode<synchronous>, transform_indices = @transform_9, window_bounds = array<i64: 1, 128>}, {pipeline_mode = #tpu.pipeline_mode<synchronous>, transform_indices = @transform_10, window_bounds = array<i64: 256, 128>}, {pipeline_mode = #tpu.pipeline_mode<synchronous>, transform_indices = @transform_11, window_bounds = array<i64: 1, 128>}, {pipeline_mode = #tpu.pipeline_mode<synchronous>, transform_indices = @transform_12, window_bounds = array<i64: 128, 256>}, {pipeline_mode = #tpu.pipeline_mode<synchronous>, transform_indices = @transform_13, window_bounds = array<i64: 1, 256>}, {pipeline_mode = #tpu.pipeline_mode<synchronous>, transform_indices = @transform_14, window_bounds = array<i64: 256, 512>}, {pipeline_mode = #tpu.pipeline_mode<synchronous>, transform_indices = @transform_15, window_bounds = array<i64: 1, 512>}, {pipeline_mode = #tpu.pipeline_mode<synchronous>, transform_indices = @transform_16, window_bounds = array<i64: 512, 512>}, {pipeline_mode = #tpu.pipeline_mode<synchronous>, transform_indices = @transform_17, window_bounds = array<i64: 1, 512>}, {pipeline_mode = #tpu.pipeline_mode<synchronous>, transform_indices = @transform_18, window_bounds = array<i64: 512, 256>}, {pipeline_mode = #tpu.pipeline_mode<synchronous>, transform_indices = @transform_19, window_bounds = array<i64: 1, 256>}, {transform_indices = @transform_20, window_bounds = array<i64: 8, 128>}, {transform_indices = @transform_21, window_bounds = array<i64: 8, 128>}, {transform_indices = @transform_22, window_bounds = array<i64: 8, 256>}]} {
    %c0 = arith.constant 0 : index
    %c0_0 = arith.constant 0 : index
    %0 = vector.load %arg1[%c0, %c0_0] : memref<8x256xbf16, #tpu.memory_space<vmem>>, vector<8x256xbf16>
    %c0_1 = arith.constant 0 : index
    %c0_2 = arith.constant 0 : index
    %1 = vector.load %arg3[%c0_1, %c0_2] : memref<256x512xbf16, #tpu.memory_space<vmem>>, vector<256x512xbf16>
    %cst = arith.constant dense<0.000000e+00> : vector<8x512xf32>
    %2 = tpu.matmul %0, %1, %cst {dimension_numbers = #tpu.dot_dimension_numbers<[1], [0], [0], [1], [0, 0, 1, 1], [], []>} : vector<8x256xbf16>, vector<256x512xbf16>, vector<8x512xf32> -> vector<8x512xf32>
    %c0_3 = arith.constant 0 : index
    %c0_4 = arith.constant 0 : index
    %3 = vector.load %arg4[%c0_3, %c0_4] : memref<1x512xf32, #tpu.memory_space<vmem>>, vector<1x512xf32>
    %4 = vector.broadcast %3 : vector<1x512xf32> to vector<8x512xf32>
    %5 = arith.addf %2, %4 : vector<8x512xf32>
    %cst_5 = arith.constant 0.000000e+00 : f32
    %6 = vector.broadcast %cst_5 : f32 to vector<8x512xf32>
    %7 = arith.cmpf ogt, %5, %6 : vector<8x512xf32>
    %cst_6 = arith.constant 2.000000e-01 : f32
    %8 = vector.broadcast %cst_6 : f32 to vector<8x512xf32>
    %9 = arith.mulf %8, %5 : vector<8x512xf32>
    %10 = arith.select %7, %5, %9 : vector<8x512xi1>, vector<8x512xf32>
    %11 = arith.truncf %10 : vector<8x512xf32> to vector<8x512xbf16>
    %c0_7 = arith.constant 0 : index
    %c0_8 = arith.constant 0 : index
    %12 = vector.load %arg5[%c0_7, %c0_8] : memref<512x512xbf16, #tpu.memory_space<vmem>>, vector<512x512xbf16>
    %cst_9 = arith.constant dense<0.000000e+00> : vector<8x512xf32>
    %13 = tpu.matmul %11, %12, %cst_9 {dimension_numbers = #tpu.dot_dimension_numbers<[1], [0], [0], [1], [0, 0, 1, 1], [], []>} : vector<8x512xbf16>, vector<512x512xbf16>, vector<8x512xf32> -> vector<8x512xf32>
    %c0_10 = arith.constant 0 : index
    %c0_11 = arith.constant 0 : index
    %14 = vector.load %arg6[%c0_10, %c0_11] : memref<1x512xf32, #tpu.memory_space<vmem>>, vector<1x512xf32>
    %15 = vector.broadcast %14 : vector<1x512xf32> to vector<8x512xf32>
    %16 = arith.addf %13, %15 : vector<8x512xf32>
    %cst_12 = arith.constant 0.000000e+00 : f32
    %17 = vector.broadcast %cst_12 : f32 to vector<8x512xf32>
    %18 = arith.cmpf ogt, %16, %17 : vector<8x512xf32>
    %cst_13 = arith.constant 2.000000e-01 : f32
    %19 = vector.broadcast %cst_13 : f32 to vector<8x512xf32>
    %20 = arith.mulf %19, %16 : vector<8x512xf32>
    %21 = arith.select %18, %16, %20 : vector<8x512xi1>, vector<8x512xf32>
    %22 = arith.truncf %21 : vector<8x512xf32> to vector<8x512xbf16>
    %c0_14 = arith.constant 0 : index
    %c0_15 = arith.constant 0 : index
    %23 = vector.load %arg7[%c0_14, %c0_15] : memref<512x256xbf16, #tpu.memory_space<vmem>>, vector<512x256xbf16>
    %cst_16 = arith.constant dense<0.000000e+00> : vector<8x256xf32>
    %24 = tpu.matmul %22, %23, %cst_16 {dimension_numbers = #tpu.dot_dimension_numbers<[1], [0], [0], [1], [0, 0, 1, 1], [], []>} : vector<8x512xbf16>, vector<512x256xbf16>, vector<8x256xf32> -> vector<8x256xf32>
    %c0_17 = arith.constant 0 : index
    %c0_18 = arith.constant 0 : index
    %25 = vector.load %arg8[%c0_17, %c0_18] : memref<1x256xf32, #tpu.memory_space<vmem>>, vector<1x256xf32>
    %26 = vector.broadcast %25 : vector<1x256xf32> to vector<8x256xf32>
    %27 = arith.addf %24, %26 : vector<8x256xf32>
    %cst_19 = arith.constant 0.000000e+00 : f32
    %28 = vector.broadcast %cst_19 : f32 to vector<8x256xf32>
    %29 = arith.cmpf ogt, %27, %28 : vector<8x256xf32>
    %cst_20 = arith.constant 2.000000e-01 : f32
    %30 = vector.broadcast %cst_20 : f32 to vector<8x256xf32>
    %31 = arith.mulf %30, %27 : vector<8x256xf32>
    %32 = arith.select %29, %27, %31 : vector<8x256xi1>, vector<8x256xf32>
    %33 = arith.truncf %32 : vector<8x256xf32> to vector<8x256xbf16>
    %c0_21 = arith.constant 0 : index
    %c0_22 = arith.constant 0 : index
    %34 = vector.load %arg9[%c0_21, %c0_22] : memref<256x128xbf16, #tpu.memory_space<vmem>>, vector<256x128xbf16>
    %cst_23 = arith.constant dense<0.000000e+00> : vector<8x128xf32>
    %35 = tpu.matmul %33, %34, %cst_23 {dimension_numbers = #tpu.dot_dimension_numbers<[1], [0], [0], [1], [0, 0, 1, 1], [], []>} : vector<8x256xbf16>, vector<256x128xbf16>, vector<8x128xf32> -> vector<8x128xf32>
    %c0_24 = arith.constant 0 : index
    %c0_25 = arith.constant 0 : index
    %36 = vector.load %arg10[%c0_24, %c0_25] : memref<1x128xf32, #tpu.memory_space<vmem>>, vector<1x128xf32>
    %37 = vector.broadcast %36 : vector<1x128xf32> to vector<8x128xf32>
    %38 = arith.addf %35, %37 : vector<8x128xf32>
    %c0_26 = arith.constant 0 : index
    %c0_27 = arith.constant 0 : index
    %39 = vector.load %arg11[%c0_26, %c0_27] : memref<256x128xbf16, #tpu.memory_space<vmem>>, vector<256x128xbf16>
    %cst_28 = arith.constant dense<0.000000e+00> : vector<8x128xf32>
    %40 = tpu.matmul %33, %39, %cst_28 {dimension_numbers = #tpu.dot_dimension_numbers<[1], [0], [0], [1], [0, 0, 1, 1], [], []>} : vector<8x256xbf16>, vector<256x128xbf16>, vector<8x128xf32> -> vector<8x128xf32>
    %c0_29 = arith.constant 0 : index
    %c0_30 = arith.constant 0 : index
    %41 = vector.load %arg12[%c0_29, %c0_30] : memref<1x128xf32, #tpu.memory_space<vmem>>, vector<1x128xf32>
    %42 = vector.broadcast %41 : vector<1x128xf32> to vector<8x128xf32>
    %43 = arith.addf %40, %42 : vector<8x128xf32>
    %c0_31 = arith.constant 0 : index
    %c0_32 = arith.constant 0 : index
    %44 = vector.load %arg21[%c0_31, %c0_32] : memref<8x128xf32, #tpu.memory_space<vmem>>, vector<8x128xf32>
    tpu.vector_store %arg21[%c0_31, %c0_32], %38 {strides = array<i32>} : memref<8x128xf32, #tpu.memory_space<vmem>>, vector<8x128xf32>,
    %c0_33 = arith.constant 0 : index
    %c0_34 = arith.constant 0 : index
    %45 = vector.load %arg22[%c0_33, %c0_34] : memref<8x128xf32, #tpu.memory_space<vmem>>, vector<8x128xf32>
    tpu.vector_store %arg22[%c0_33, %c0_34], %43 {strides = array<i32>} : memref<8x128xf32, #tpu.memory_space<vmem>>, vector<8x128xf32>,
    %c0_35 = arith.constant 0 : index
    %c0_36 = arith.constant 0 : index
    %46 = vector.load %arg2[%c0_35, %c0_36] : memref<8x128xf32, #tpu.memory_space<vmem>>, vector<8x128xf32>
    %cst_37 = arith.constant 5.000000e-01 : f32
    %47 = vector.broadcast %cst_37 : f32 to vector<8x128xf32>
    %48 = arith.mulf %47, %43 : vector<8x128xf32>
    %49 = math.exp %48 : vector<8x128xf32>
    %50 = arith.mulf %46, %49 : vector<8x128xf32>
    %51 = arith.addf %38, %50 : vector<8x128xf32>
    %52 = arith.truncf %51 : vector<8x128xf32> to vector<8x128xbf16>
    %c0_38 = arith.constant 0 : index
    %c0_39 = arith.constant 0 : index
    %53 = vector.load %arg13[%c0_38, %c0_39] : memref<128x256xbf16, #tpu.memory_space<vmem>>, vector<128x256xbf16>
    %cst_40 = arith.constant dense<0.000000e+00> : vector<8x256xf32>
    %54 = tpu.matmul %52, %53, %cst_40 {dimension_numbers = #tpu.dot_dimension_numbers<[1], [0], [0], [1], [0, 0, 1, 1], [], []>} : vector<8x128xbf16>, vector<128x256xbf16>, vector<8x256xf32> -> vector<8x256xf32>
    %c0_41 = arith.constant 0 : index
    %c0_42 = arith.constant 0 : index
    %55 = vector.load %arg14[%c0_41, %c0_42] : memref<1x256xf32, #tpu.memory_space<vmem>>, vector<1x256xf32>
    %56 = vector.broadcast %55 : vector<1x256xf32> to vector<8x256xf32>
    %57 = arith.addf %54, %56 : vector<8x256xf32>
    %cst_43 = arith.constant 0.000000e+00 : f32
    %58 = vector.broadcast %cst_43 : f32 to vector<8x256xf32>
    %59 = arith.cmpf ogt, %57, %58 : vector<8x256xf32>
    %cst_44 = arith.constant 2.000000e-01 : f32
    %60 = vector.broadcast %cst_44 : f32 to vector<8x256xf32>
    %61 = arith.mulf %60, %57 : vector<8x256xf32>
    %62 = arith.select %59, %57, %61 : vector<8x256xi1>, vector<8x256xf32>
    %63 = arith.truncf %62 : vector<8x256xf32> to vector<8x256xbf16>
    %c0_45 = arith.constant 0 : index
    %c0_46 = arith.constant 0 : index
    %64 = vector.load %arg15[%c0_45, %c0_46] : memref<256x512xbf16, #tpu.memory_space<vmem>>, vector<256x512xbf16>
    %cst_47 = arith.constant dense<0.000000e+00> : vector<8x512xf32>
    %65 = tpu.matmul %63, %64, %cst_47 {dimension_numbers = #tpu.dot_dimension_numbers<[1], [0], [0], [1], [0, 0, 1, 1], [], []>} : vector<8x256xbf16>, vector<256x512xbf16>, vector<8x512xf32> -> vector<8x512xf32>
    %c0_48 = arith.constant 0 : index
    %c0_49 = arith.constant 0 : index
    %66 = vector.load %arg16[%c0_48, %c0_49] : memref<1x512xf32, #tpu.memory_space<vmem>>, vector<1x512xf32>
    %67 = vector.broadcast %66 : vector<1x512xf32> to vector<8x512xf32>
    %68 = arith.addf %65, %67 : vector<8x512xf32>
    %cst_50 = arith.constant 0.000000e+00 : f32
    %69 = vector.broadcast %cst_50 : f32 to vector<8x512xf32>
    %70 = arith.cmpf ogt, %68, %69 : vector<8x512xf32>
    %cst_51 = arith.constant 2.000000e-01 : f32
    %71 = vector.broadcast %cst_51 : f32 to vector<8x512xf32>
    %72 = arith.mulf %71, %68 : vector<8x512xf32>
    %73 = arith.select %70, %68, %72 : vector<8x512xi1>, vector<8x512xf32>
    %74 = arith.truncf %73 : vector<8x512xf32> to vector<8x512xbf16>
    %c0_52 = arith.constant 0 : index
    %c0_53 = arith.constant 0 : index
    %75 = vector.load %arg17[%c0_52, %c0_53] : memref<512x512xbf16, #tpu.memory_space<vmem>>, vector<512x512xbf16>
    %cst_54 = arith.constant dense<0.000000e+00> : vector<8x512xf32>
    %76 = tpu.matmul %74, %75, %cst_54 {dimension_numbers = #tpu.dot_dimension_numbers<[1], [0], [0], [1], [0, 0, 1, 1], [], []>} : vector<8x512xbf16>, vector<512x512xbf16>, vector<8x512xf32> -> vector<8x512xf32>
    %c0_55 = arith.constant 0 : index
    %c0_56 = arith.constant 0 : index
    %77 = vector.load %arg18[%c0_55, %c0_56] : memref<1x512xf32, #tpu.memory_space<vmem>>, vector<1x512xf32>
    %78 = vector.broadcast %77 : vector<1x512xf32> to vector<8x512xf32>
    %79 = arith.addf %76, %78 : vector<8x512xf32>
    %cst_57 = arith.constant 0.000000e+00 : f32
    %80 = vector.broadcast %cst_57 : f32 to vector<8x512xf32>
    %81 = arith.cmpf ogt, %79, %80 : vector<8x512xf32>
    %cst_58 = arith.constant 2.000000e-01 : f32
    %82 = vector.broadcast %cst_58 : f32 to vector<8x512xf32>
    %83 = arith.mulf %82, %79 : vector<8x512xf32>
    %84 = arith.select %81, %79, %83 : vector<8x512xi1>, vector<8x512xf32>
    %85 = arith.truncf %84 : vector<8x512xf32> to vector<8x512xbf16>
    %c0_59 = arith.constant 0 : index
    %c0_60 = arith.constant 0 : index
    %86 = vector.load %arg19[%c0_59, %c0_60] : memref<512x256xbf16, #tpu.memory_space<vmem>>, vector<512x256xbf16>
    %cst_61 = arith.constant dense<0.000000e+00> : vector<8x256xf32>
    %87 = tpu.matmul %85, %86, %cst_61 {dimension_numbers = #tpu.dot_dimension_numbers<[1], [0], [0], [1], [0, 0, 1, 1], [], []>} : vector<8x512xbf16>, vector<512x256xbf16>, vector<8x256xf32> -> vector<8x256xf32>
    %c0_62 = arith.constant 0 : index
    %c0_63 = arith.constant 0 : index
    %88 = vector.load %arg20[%c0_62, %c0_63] : memref<1x256xf32, #tpu.memory_space<vmem>>, vector<1x256xf32>
    %89 = vector.broadcast %88 : vector<1x256xf32> to vector<8x256xf32>
    %90 = arith.addf %87, %89 : vector<8x256xf32>
    %91 = arith.negf %90 : vector<8x256xf32>
    %92 = math.exp %91 : vector<8x256xf32>
    %cst_64 = arith.constant 1.000000e+00 : f32
    %93 = vector.broadcast %cst_64 : f32 to vector<8x256xf32>
    %94 = arith.addf %93, %92 : vector<8x256xf32>
    %95 = arith.divf %93, %94 : vector<8x256xf32>
    %c0_65 = arith.constant 0 : index
    %c0_66 = arith.constant 0 : index
    %96 = vector.load %arg23[%c0_65, %c0_66] : memref<8x256xf32, #tpu.memory_space<vmem>>, vector<8x256xf32>
    tpu.vector_store %arg23[%c0_65, %c0_66], %95 {strides = array<i32>} : memref<8x256xf32, #tpu.memory_space<vmem>>, vector<8x256xf32>,
    return
  }
  func.func @transform_0(%arg0: i32) -> (i32, i32) {
    %c0_i32 = arith.constant 0 : i32
    %c0_i32_0 = arith.constant 0 : i32
    return %arg0, %c0_i32 : i32, i32
  }
  func.func @transform_1(%arg0: i32) -> (i32, i32) {
    %c0_i32 = arith.constant 0 : i32
    %c0_i32_0 = arith.constant 0 : i32
    return %arg0, %c0_i32 : i32, i32
  }
  func.func @transform_2(%arg0: i32) -> (i32, i32) {
    %c0_i32 = arith.constant 0 : i32
    %c0_i32_0 = arith.constant 0 : i32
    %c0_i32_1 = arith.constant 0 : i32
    return %c0_i32, %c0_i32_0 : i32, i32
  }
  func.func @transform_3(%arg0: i32) -> (i32, i32) {
    %c0_i32 = arith.constant 0 : i32
    %c0_i32_0 = arith.constant 0 : i32
    %c0_i32_1 = arith.constant 0 : i32
    return %c0_i32, %c0_i32_0 : i32, i32
  }
  func.func @transform_4(%arg0: i32) -> (i32, i32) {
    %c0_i32 = arith.constant 0 : i32
    %c0_i32_0 = arith.constant 0 : i32
    %c0_i32_1 = arith.constant 0 : i32
    return %c0_i32, %c0_i32_0 : i32, i32
  }
  func.func @transform_5(%arg0: i32) -> (i32, i32) {
    %c0_i32 = arith.constant 0 : i32
    %c0_i32_0 = arith.constant 0 : i32
    %c0_i32_1 = arith.constant 0 : i32
    return %c0_i32, %c0_i32_0 : i32, i32
  }
  func.func @transform_6(%arg0: i32) -> (i32, i32) {
    %c0_i32 = arith.constant 0 : i32
    %c0_i32_0 = arith.constant 0 : i32
    %c0_i32_1 = arith.constant 0 : i32
    return %c0_i32, %c0_i32_0 : i32, i32
  }
  func.func @transform_7(%arg0: i32) -> (i32, i32) {
    %c0_i32 = arith.constant 0 : i32
    %c0_i32_0 = arith.constant 0 : i32
    %c0_i32_1 = arith.constant 0 : i32
    return %c0_i32, %c0_i32_0 : i32, i32
  }
  func.func @transform_8(%arg0: i32) -> (i32, i32) {
    %c0_i32 = arith.constant 0 : i32
    %c0_i32_0 = arith.constant 0 : i32
    %c0_i32_1 = arith.constant 0 : i32
    return %c0_i32, %c0_i32_0 : i32, i32
  }
  func.func @transform_9(%arg0: i32) -> (i32, i32) {
    %c0_i32 = arith.constant 0 : i32
    %c0_i32_0 = arith.constant 0 : i32
    %c0_i32_1 = arith.constant 0 : i32
    return %c0_i32, %c0_i32_0 : i32, i32
  }
  func.func @transform_10(%arg0: i32) -> (i32, i32) {
    %c0_i32 = arith.constant 0 : i32
    %c0_i32_0 = arith.constant 0 : i32
    %c0_i32_1 = arith.constant 0 : i32
    return %c0_i32, %c0_i32_0 : i32, i32
  }
  func.func @transform_11(%arg0: i32) -> (i32, i32) {
    %c0_i32 = arith.constant 0 : i32
    %c0_i32_0 = arith.constant 0 : i32
    %c0_i32_1 = arith.constant 0 : i32
    return %c0_i32, %c0_i32_0 : i32, i32
  }
  func.func @transform_12(%arg0: i32) -> (i32, i32) {
    %c0_i32 = arith.constant 0 : i32
    %c0_i32_0 = arith.constant 0 : i32
    %c0_i32_1 = arith.constant 0 : i32
    return %c0_i32, %c0_i32_0 : i32, i32
  }
  func.func @transform_13(%arg0: i32) -> (i32, i32) {
    %c0_i32 = arith.constant 0 : i32
    %c0_i32_0 = arith.constant 0 : i32
    %c0_i32_1 = arith.constant 0 : i32
    return %c0_i32, %c0_i32_0 : i32, i32
  }
  func.func @transform_14(%arg0: i32) -> (i32, i32) {
    %c0_i32 = arith.constant 0 : i32
    %c0_i32_0 = arith.constant 0 : i32
    %c0_i32_1 = arith.constant 0 : i32
    return %c0_i32, %c0_i32_0 : i32, i32
  }
  func.func @transform_15(%arg0: i32) -> (i32, i32) {
    %c0_i32 = arith.constant 0 : i32
    %c0_i32_0 = arith.constant 0 : i32
    %c0_i32_1 = arith.constant 0 : i32
    return %c0_i32, %c0_i32_0 : i32, i32
  }
  func.func @transform_16(%arg0: i32) -> (i32, i32) {
    %c0_i32 = arith.constant 0 : i32
    %c0_i32_0 = arith.constant 0 : i32
    %c0_i32_1 = arith.constant 0 : i32
    return %c0_i32, %c0_i32_0 : i32, i32
  }
  func.func @transform_17(%arg0: i32) -> (i32, i32) {
    %c0_i32 = arith.constant 0 : i32
    %c0_i32_0 = arith.constant 0 : i32
    %c0_i32_1 = arith.constant 0 : i32
    return %c0_i32, %c0_i32_0 : i32, i32
  }
  func.func @transform_18(%arg0: i32) -> (i32, i32) {
    %c0_i32 = arith.constant 0 : i32
    %c0_i32_0 = arith.constant 0 : i32
    %c0_i32_1 = arith.constant 0 : i32
    return %c0_i32, %c0_i32_0 : i32, i32
  }
  func.func @transform_19(%arg0: i32) -> (i32, i32) {
    %c0_i32 = arith.constant 0 : i32
    %c0_i32_0 = arith.constant 0 : i32
    %c0_i32_1 = arith.constant 0 : i32
    return %c0_i32, %c0_i32_0 : i32, i32
  }
  func.func @transform_20(%arg0: i32) -> (i32, i32) {
    %c0_i32 = arith.constant 0 : i32
    %c0_i32_0 = arith.constant 0 : i32
    return %arg0, %c0_i32 : i32, i32
  }
  func.func @transform_21(%arg0: i32) -> (i32, i32) {
    %c0_i32 = arith.constant 0 : i32
    %c0_i32_0 = arith.constant 0 : i32
    return %arg0, %c0_i32 : i32, i32
  }
  func.func @transform_22(%arg0: i32) -> (i32, i32) {
    %c0_i32 = arith.constant 0 : i32
    %c0_i32_0 = arith.constant 0 : i32
    return %arg0, %c0_i32 : i32, i32
  }
}

</mosaic_0001>

<llo_original>
// kernel: tpu_custom_call.1
$region0: #{tpu_custom_call.1}
  #allocation0 [shape = 'u32[]', space=smem, size = 0x4, offset = 0x4, fixed_abs, tag = 'smem constant byte address 0x4 - core index']
  #allocation1 [shape = 'u32[144,128]{1,0:T(1,128)}', space=vmem, size = 0x12000, scoped, tag = 'internal scratch']
  %s0 = inlined_call_operand.hbm [shape: bf16[8,256], index: 0, kind: input, shape index: {}]
  %s1 = inlined_call_operand.hbm [shape: f32[8,128], index: 1, kind: input, shape index: {}]
  %s2 = inlined_call_operand.hbm [shape: bf16[256,512], index: 2, kind: input, shape index: {}]
  %s3 = inlined_call_operand.vmem [shape: f32[1,512], index: 3, kind: input, shape index: {}]
  %s4 = inlined_call_operand.hbm [shape: bf16[512,512], index: 4, kind: input, shape index: {}]
  %s5 = inlined_call_operand.vmem [shape: f32[1,512], index: 5, kind: input, shape index: {}]
  %s6 = inlined_call_operand.hbm [shape: bf16[512,256], index: 6, kind: input, shape index: {}]
  %s7 = inlined_call_operand.vmem [shape: f32[1,256], index: 7, kind: input, shape index: {}]
  %s8 = inlined_call_operand.hbm [shape: bf16[256,128], index: 8, kind: input, shape index: {}]
  %s9 = inlined_call_operand.vmem [shape: f32[1,128], index: 9, kind: input, shape index: {}]
  %s10 = inlined_call_operand.hbm [shape: bf16[256,128], index: 10, kind: input, shape index: {}]
  %s11 = inlined_call_operand.vmem [shape: f32[1,128], index: 11, kind: input, shape index: {}]
  %s12 = inlined_call_operand.hbm [shape: bf16[128,256], index: 12, kind: input, shape index: {}]
  %s13 = inlined_call_operand.vmem [shape: f32[1,256], index: 13, kind: input, shape index: {}]
  %s14 = inlined_call_operand.hbm [shape: bf16[256,512], index: 14, kind: input, shape index: {}]
  %s15 = inlined_call_operand.vmem [shape: f32[1,512], index: 15, kind: input, shape index: {}]
  %s16 = inlined_call_operand.hbm [shape: bf16[512,512], index: 16, kind: input, shape index: {}]
  %s17 = inlined_call_operand.vmem [shape: f32[1,512], index: 17, kind: input, shape index: {}]
  %s18 = inlined_call_operand.hbm [shape: bf16[512,256], index: 18, kind: input, shape index: {}]
  %s19 = inlined_call_operand.vmem [shape: f32[1,256], index: 19, kind: input, shape index: {}]
  %s20 = inlined_call_operand.hbm [shape: f32[8,128], index: 20, kind: output, shape index: {0}]
  %s21 = inlined_call_operand.hbm [shape: f32[8,128], index: 21, kind: output, shape index: {1}]
  %s22 = inlined_call_operand.hbm [shape: f32[8,256], index: 22, kind: output, shape index: {2}]
  %23 = xla_tuple %s20, %s21, %s22
  %s24 = sld [smem:[#allocation0]]
  $region150: #{tpu_custom_call.1} parent=0
    _
  %s26 = ssub.s32 1, %s24
  %s27 = scalar_select 0, %s26, %s24
  $region1: #{tpu_custom_call.1} parent=0
    #allocation2 [shape = 'u8[4096]{0}', space=vmem, size = 0x1000, scoped, tag = 'input window, operand 0, single buffered']
    #allocation3 [shape = 's32[1]{0}', space=sflag, size = 0x4, scoped, tag = 'scoped memory for tpu_custom_call.1']
    #allocation4 [shape = 's32[1]{0}', space=sflag, size = 0x4, scoped, tag = 'scoped memory for tpu_custom_call.1']
    #allocation5 [shape = 'u8[4096]{0}', space=vmem, size = 0x1000, scoped, tag = 'input window, operand 1, single buffered']
    #allocation6 [shape = 's32[1]{0}', space=sflag, size = 0x4, scoped, tag = 'scoped memory for tpu_custom_call.1']
    #allocation7 [shape = 'u8[262144]{0}', space=vmem, size = 0x40000, scoped, tag = 'input window, operand 2, single buffered']
    #allocation8 [shape = 'u8[524288]{0}', space=vmem, size = 0x80000, scoped, tag = 'input window, operand 4, single buffered']
    #allocation9 [shape = 's32[1]{0}', space=sflag, size = 0x4, scoped, tag = 'scoped memory for tpu_custom_call.1']
    #allocation10 [shape = 'u8[262144]{0}', space=vmem, size = 0x40000, scoped, tag = 'input window, operand 6, single buffered']
    #allocation11 [shape = 'u8[65536]{0}', space=vmem, size = 0x10000, scoped, tag = 'input window, operand 8, single buffered']
    #allocation12 [shape = 's32[1]{0}', space=sflag, size = 0x4, scoped, tag = 'scoped memory for tpu_custom_call.1']
    #allocation13 [shape = 'u8[65536]{0}', space=vmem, size = 0x10000, scoped, tag = 'input window, operand 10, single buffered']
    #allocation14 [shape = 'u8[65536]{0}', space=vmem, size = 0x10000, scoped, tag = 'input window, operand 12, single buffered']
    #allocation15 [shape = 's32[1]{0}', space=sflag, size = 0x4, scoped, tag = 'scoped memory for tpu_custom_call.1']
    #allocation16 [shape = 'u8[262144]{0}', space=vmem, size = 0x40000, scoped, tag = 'input window, operand 14, single buffered']
    #allocation17 [shape = 'u8[524288]{0}', space=vmem, size = 0x80000, scoped, tag = 'input window, operand 16, single buffered']
    #allocation18 [shape = 's32[1]{0}', space=sflag, size = 0x4, scoped, tag = 'scoped memory for tpu_custom_call.1']
    #allocation19 [shape = 'u8[262144]{0}', space=vmem, size = 0x40000, scoped, tag = 'input window, operand 18, single buffered']
    #allocation20 [shape = 'u8[4096]{0}', space=vmem, size = 0x1000, scoped, tag = 'output window, operand 0, single buffered']
    #allocation21 [shape = 'u8[4096]{0}', space=vmem, size = 0x1000, scoped, tag = 'output window, operand 1, single buffered']
    #allocation22 [shape = 's32[1]{0}', space=sflag, size = 0x4, scoped, tag = 'scoped memory for tpu_custom_call.1']
    #allocation23 [shape = 'u8[8192]{0}', space=vmem, size = 0x2000, scoped, tag = 'output window, operand 2, single buffered']
    %28 = vsyncpa [#allocation3], 0
    %29 = vsyncpa [#allocation6], 0
    %30 = vsyncpa [#allocation9], 0
    %31 = vsyncpa [#allocation12], 0
    %32 = vsyncpa [#allocation15], 0
    %33 = vsyncpa [#allocation18], 0
    %34 = vsyncpa [#allocation4], 0
    %35 = vsyncpa [#allocation22], 0
    // Predicated region
    $region2: #{tpu_custom_call.1} parent=1 // pred_check
      _
    $region3: #{tpu_custom_call.1} parent=1 // pred_check_branch
      %37 = sbr.rel (0) target = $region5
    $region4: #{tpu_custom_call.1} parent=1 // pred_region
      %s39 = ssub.s32 128, 128
      %40 = vsyncadd [#allocation3], %s39
      %s42 = sshll.u32 [#allocation2], 4
      %s43 = int_to_ptr.vmem [resolvable:$true] %s42
      %45 = dma.hbm_to_vmem [thread:$0]  %s0, 128, %s43, [#allocation3]
    $region5: #{tpu_custom_call.1} parent=1 // pred_fallthru
      _
    // Predicated region
    $region6: #{tpu_custom_call.1} parent=1 // pred_check
      _
    $region7: #{tpu_custom_call.1} parent=1 // pred_check_branch
      %47 = sbr.rel (0) target = $region9
    $region8: #{tpu_custom_call.1} parent=1 // pred_region
      %s49 = ssub.s32 128, 128
      %50 = vsyncadd [#allocation6], %s49
      %s52 = sshll.u32 [#allocation5], 4
      %s53 = int_to_ptr.vmem [resolvable:$true] %s52
      %55 = dma.hbm_to_vmem [thread:$0]  %s1, 128, %s53, [#allocation6]
    $region9: #{tpu_custom_call.1} parent=1 // pred_fallthru
      _
    // Predicated region
    $region10: #{tpu_custom_call.1} parent=1 // pred_check
      _
    $region11: #{tpu_custom_call.1} parent=1 // pred_check_branch
      %57 = sbr.rel (0) target = $region13
    $region12: #{tpu_custom_call.1} parent=1 // pred_region
      %s59 = ssub.s32 8192, 8192
      %60 = vsyncadd [#allocation6], %s59
      %s61 = sshll.u32 [#allocation7], 4
      %s62 = int_to_ptr.vmem [resolvable:$true] %s61
      %67 = dma.hbm_to_vmem [thread:$0]  %s2, 8192, %s62, [#allocation6], 256, 256, 16
    $region13: #{tpu_custom_call.1} parent=1 // pred_fallthru
      _
    // Predicated region
    $region14: #{tpu_custom_call.1} parent=1 // pred_check
      _
    $region15: #{tpu_custom_call.1} parent=1 // pred_check_branch
      %69 = sbr.rel (0) target = $region17
    $region16: #{tpu_custom_call.1} parent=1 // pred_region
      _
    $region17: #{tpu_custom_call.1} parent=1 // pred_fallthru
      _
    // Predicated region
    $region18: #{tpu_custom_call.1} parent=1 // pred_check
      _
    $region19: #{tpu_custom_call.1} parent=1 // pred_check_branch
      %71 = sbr.rel (0) target = $region21
    $region20: #{tpu_custom_call.1} parent=1 // pred_region
      %s73 = ssub.s32 16384, 16384
      %74 = vsyncadd [#allocation9], %s73
      %s75 = sshll.u32 [#allocation8], 4
      %s76 = int_to_ptr.vmem [resolvable:$true] %s75
      %81 = dma.hbm_to_vmem [thread:$0]  %s4, 16384, %s76, [#allocation9], 256, 256, 16
    $region21: #{tpu_custom_call.1} parent=1 // pred_fallthru
      _
    // Predicated region
    $region22: #{tpu_custom_call.1} parent=1 // pred_check
      _
    $region23: #{tpu_custom_call.1} parent=1 // pred_check_branch
      %83 = sbr.rel (0) target = $region25
    $region24: #{tpu_custom_call.1} parent=1 // pred_region
      _
    $region25: #{tpu_custom_call.1} parent=1 // pred_fallthru
      _
    // Predicated region
    $region26: #{tpu_custom_call.1} parent=1 // pred_check
      _
    $region27: #{tpu_custom_call.1} parent=1 // pred_check_branch
      %85 = sbr.rel (0) target = $region29
    $region28: #{tpu_custom_call.1} parent=1 // pred_region
      %s87 = ssub.s32 8192, 8192
      %88 = vsyncadd [#allocation9], %s87
      %s89 = sshll.u32 [#allocation10], 4
      %s90 = int_to_ptr.vmem [resolvable:$true] %s89
      %95 = dma.hbm_to_vmem [thread:$0]  %s6, 8192, %s90, [#allocation9], 128, 128, 8
    $region29: #{tpu_custom_call.1} parent=1 // pred_fallthru
      _
    // Predicated region
    $region30: #{tpu_custom_call.1} parent=1 // pred_check
      _
    $region31: #{tpu_custom_call.1} parent=1 // pred_check_branch
      %97 = sbr.rel (0) target = $region33
    $region32: #{tpu_custom_call.1} parent=1 // pred_region
      _
    $region33: #{tpu_custom_call.1} parent=1 // pred_fallthru
      _
    // Predicated region
    $region34: #{tpu_custom_call.1} parent=1 // pred_check
      _
    $region35: #{tpu_custom_call.1} parent=1 // pred_check_branch
      %99 = sbr.rel (0) target = $region37
    $region36: #{tpu_custom_call.1} parent=1 // pred_region
      %s101 = ssub.s32 2048, 2048
      %102 = vsyncadd [#allocation12], %s101
      %s103 = sshll.u32 [#allocation11], 4
      %s104 = int_to_ptr.vmem [resolvable:$true] %s103
      %109 = dma.hbm_to_vmem [thread:$0]  %s8, 2048, %s104, [#allocation12], 64, 64, 4
    $region37: #{tpu_custom_call.1} parent=1 // pred_fallthru
      _
    // Predicated region
    $region38: #{tpu_custom_call.1} parent=1 // pred_check
      _
    $region39: #{tpu_custom_call.1} parent=1 // pred_check_branch
      %111 = sbr.rel (0) target = $region41
    $region40: #{tpu_custom_call.1} parent=1 // pred_region
      _
    $region41: #{tpu_custom_call.1} parent=1 // pred_fallthru
      _
    // Predicated region
    $region42: #{tpu_custom_call.1} parent=1 // pred_check
      _
    $region43: #{tpu_custom_call.1} parent=1 // pred_check_branch
      %113 = sbr.rel (0) target = $region45
    $region44: #{tpu_custom_call.1} parent=1 // pred_region
      %s115 = ssub.s32 2048, 2048
      %116 = vsyncadd [#allocation12], %s115
      %s117 = sshll.u32 [#allocation13], 4
      %s118 = int_to_ptr.vmem [resolvable:$true] %s117
      %123 = dma.hbm_to_vmem [thread:$0]  %s10, 2048, %s118, [#allocation12], 64, 64, 4
    $region45: #{tpu_custom_call.1} parent=1 // pred_fallthru
      _
    // Predicated region
    $region46: #{tpu_custom_call.1} parent=1 // pred_check
      _
    $region47: #{tpu_custom_call.1} parent=1 // pred_check_branch
      %125 = sbr.rel (0) target = $region49
    $region48: #{tpu_custom_call.1} parent=1 // pred_region
      _
    $region49: #{tpu_custom_call.1} parent=1 // pred_fallthru
      _
    // Predicated region
    $region50: #{tpu_custom_call.1} parent=1 // pred_check
      _
    $region51: #{tpu_custom_call.1} parent=1 // pred_check_branch
      %127 = sbr.rel (0) target = $region53
    $region52: #{tpu_custom_call.1} parent=1 // pred_region
      %s129 = ssub.s32 2048, 2048
      %130 = vsyncadd [#allocation15], %s129
      %s131 = sshll.u32 [#allocation14], 4
      %s132 = int_to_ptr.vmem [resolvable:$true] %s131
      %137 = dma.hbm_to_vmem [thread:$0]  %s12, 2048, %s132, [#allocation15], 128, 128, 8
    $region53: #{tpu_custom_call.1} parent=1 // pred_fallthru
      _
    // Predicated region
    $region54: #{tpu_custom_call.1} parent=1 // pred_check
      _
    $region55: #{tpu_custom_call.1} parent=1 // pred_check_branch
      %139 = sbr.rel (0) target = $region57
    $region56: #{tpu_custom_call.1} parent=1 // pred_region
      _
    $region57: #{tpu_custom_call.1} parent=1 // pred_fallthru
      _
    // Predicated region
    $region58: #{tpu_custom_call.1} parent=1 // pred_check
      _
    $region59: #{tpu_custom_call.1} parent=1 // pred_check_branch
      %141 = sbr.rel (0) target = $region61
    $region60: #{tpu_custom_call.1} parent=1 // pred_region
      %s143 = ssub.s32 8192, 8192
      %144 = vsyncadd [#allocation15], %s143
      %s145 = sshll.u32 [#allocation16], 4
      %s146 = int_to_ptr.vmem [resolvable:$true] %s145
      %151 = dma.hbm_to_vmem [thread:$0]  %s14, 8192, %s146, [#allocation15], 256, 256, 16
    $region61: #{tpu_custom_call.1} parent=1 // pred_fallthru
      _
    // Predicated region
    $region62: #{tpu_custom_call.1} parent=1 // pred_check
      _
    $region63: #{tpu_custom_call.1} parent=1 // pred_check_branch
      %153 = sbr.rel (0) target = $region65
    $region64: #{tpu_custom_call.1} parent=1 // pred_region
      _
    $region65: #{tpu_custom_call.1} parent=1 // pred_fallthru
      _
    // Predicated region
    $region66: #{tpu_custom_call.1} parent=1 // pred_check
      _
    $region67: #{tpu_custom_call.1} parent=1 // pred_check_branch
      %155 = sbr.rel (0) target = $region69
    $region68: #{tpu_custom_call.1} parent=1 // pred_region
      %s157 = ssub.s32 16384, 16384
      %158 = vsyncadd [#allocation18], %s157
      %s159 = sshll.u32 [#allocation17], 4
      %s160 = int_to_ptr.vmem [resolvable:$true] %s159
      %165 = dma.hbm_to_vmem [thread:$0]  %s16, 16384, %s160, [#allocation18], 256, 256, 16
    $region69: #{tpu_custom_call.1} parent=1 // pred_fallthru
      _
    // Predicated region
    $region70: #{tpu_custom_call.1} parent=1 // pred_check
      _
    $region71: #{tpu_custom_call.1} parent=1 // pred_check_branch
      %167 = sbr.rel (0) target = $region73
    $region72: #{tpu_custom_call.1} parent=1 // pred_region
      _
    $region73: #{tpu_custom_call.1} parent=1 // pred_fallthru
      _
    // Predicated region
    $region74: #{tpu_custom_call.1} parent=1 // pred_check
      _
    $region75: #{tpu_custom_call.1} parent=1 // pred_check_branch
      %169 = sbr.rel (0) target = $region77
    $region76: #{tpu_custom_call.1} parent=1 // pred_region
      %s171 = ssub.s32 8192, 8192
      %172 = vsyncadd [#allocation18], %s171
      %s173 = sshll.u32 [#allocation19], 4
      %s174 = int_to_ptr.vmem [resolvable:$true] %s173
      %179 = dma.hbm_to_vmem [thread:$0]  %s18, 8192, %s174, [#allocation18], 128, 128, 8
    $region77: #{tpu_custom_call.1} parent=1 // pred_fallthru
      _
    // Predicated region
    $region78: #{tpu_custom_call.1} parent=1 // pred_check
      _
    $region79: #{tpu_custom_call.1} parent=1 // pred_check_branch
      %181 = sbr.rel (0) target = $region81
    $region80: #{tpu_custom_call.1} parent=1 // pred_region
      _
    $region81: #{tpu_custom_call.1} parent=1 // pred_fallthru
      _
    // Predicated region
    $region82: #{tpu_custom_call.1} parent=1 // pred_check
      _
    $region83: #{tpu_custom_call.1} parent=1 // pred_check_branch
      %183 = sbr.rel (0) target = $region85
    $region84: #{tpu_custom_call.1} parent=1 // pred_region
      %184 = dma.done [#allocation3], 128
    $region85: #{tpu_custom_call.1} parent=1 // pred_fallthru
      _
    // Predicated region
    $region86: #{tpu_custom_call.1} parent=1 // pred_check
      _
    $region87: #{tpu_custom_call.1} parent=1 // pred_check_branch
      %186 = sbr.rel (0) target = $region89
    $region88: #{tpu_custom_call.1} parent=1 // pred_region
      %187 = dma.done [#allocation6], 128
    $region89: #{tpu_custom_call.1} parent=1 // pred_fallthru
      _
    // Predicated region
    $region90: #{tpu_custom_call.1} parent=1 // pred_check
      _
    $region91: #{tpu_custom_call.1} parent=1 // pred_check_branch
      %189 = sbr.rel (0) target = $region93
    $region92: #{tpu_custom_call.1} parent=1 // pred_region
      %190 = dma.done [#allocation6], 8192
    $region93: #{tpu_custom_call.1} parent=1 // pred_fallthru
      _
    // Predicated region
    $region94: #{tpu_custom_call.1} parent=1 // pred_check
      _
    $region95: #{tpu_custom_call.1} parent=1 // pred_check_branch
      %192 = sbr.rel (0) target = $region97
    $region96: #{tpu_custom_call.1} parent=1 // pred_region
      %193 = dma.done [#allocation9], 16384
    $region97: #{tpu_custom_call.1} parent=1 // pred_fallthru
      _
    // Predicated region
    $region98: #{tpu_custom_call.1} parent=1 // pred_check
      _
    $region99: #{tpu_custom_call.1} parent=1 // pred_check_branch
      %195 = sbr.rel (0) target = $region101
    $region100: #{tpu_custom_call.1} parent=1 // pred_region
      %196 = dma.done [#allocation9], 8192
    $region101: #{tpu_custom_call.1} parent=1 // pred_fallthru
      _
    // Predicated region
    $region102: #{tpu_custom_call.1} parent=1 // pred_check
      _
    $region103: #{tpu_custom_call.1} parent=1 // pred_check_branch
      %198 = sbr.rel (0) target = $region105
    $region104: #{tpu_custom_call.1} parent=1 // pred_region
      %199 = dma.done [#allocation12], 2048
    $region105: #{tpu_custom_call.1} parent=1 // pred_fallthru
      _
    // Predicated region
    $region106: #{tpu_custom_call.1} parent=1 // pred_check
      _
    $region107: #{tpu_custom_call.1} parent=1 // pred_check_branch
      %201 = sbr.rel (0) target = $region109
    $region108: #{tpu_custom_call.1} parent=1 // pred_region
      %202 = dma.done [#allocation12], 2048
    $region109: #{tpu_custom_call.1} parent=1 // pred_fallthru
      _
    // Predicated region
    $region110: #{tpu_custom_call.1} parent=1 // pred_check
      _
    $region111: #{tpu_custom_call.1} parent=1 // pred_check_branch
      %204 = sbr.rel (0) target = $region113
    $region112: #{tpu_custom_call.1} parent=1 // pred_region
      %205 = dma.done [#allocation15], 2048
    $region113: #{tpu_custom_call.1} parent=1 // pred_fallthru
      _
    // Predicated region
    $region114: #{tpu_custom_call.1} parent=1 // pred_check
      _
    $region115: #{tpu_custom_call.1} parent=1 // pred_check_branch
      %207 = sbr.rel (0) target = $region117
    $region116: #{tpu_custom_call.1} parent=1 // pred_region
      %208 = dma.done [#allocation15], 8192
    $region117: #{tpu_custom_call.1} parent=1 // pred_fallthru
      _
    // Predicated region
    $region118: #{tpu_custom_call.1} parent=1 // pred_check
      _
    $region119: #{tpu_custom_call.1} parent=1 // pred_check_branch
      %210 = sbr.rel (0) target = $region121
    $region120: #{tpu_custom_call.1} parent=1 // pred_region
      %211 = dma.done [#allocation18], 16384
    $region121: #{tpu_custom_call.1} parent=1 // pred_fallthru
      _
    // Predicated region
    $region122: #{tpu_custom_call.1} parent=1 // pred_check
      _
    $region123: #{tpu_custom_call.1} parent=1 // pred_check_branch
      %213 = sbr.rel (0) target = $region125
    $region124: #{tpu_custom_call.1} parent=1 // pred_region
      %214 = dma.done [#allocation18], 8192
    $region125: #{tpu_custom_call.1} parent=1 // pred_fallthru
      _
    %v216 = vld [vmem:[#allocation2] sm:$0xff]
    %v217 = vld [vmem:[#allocation7] sm:$0xff]
    %v218 = vld [vmem:[#allocation7 + $0x8] sm:$0xff]
    %v219 = vld [vmem:[#allocation7 + $0x10] sm:$0xff]
    %v220 = vld [vmem:[#allocation7 + $0x18] sm:$0xff]
    %v221 = vld [vmem:[#allocation7 + $0x20] sm:$0xff]
    %v222 = vld [vmem:[#allocation7 + $0x28] sm:$0xff]
    %v223 = vld [vmem:[#allocation7 + $0x30] sm:$0xff]
    %v224 = vld [vmem:[#allocation7 + $0x38] sm:$0xff]
    %v225 = vld [vmem:[#allocation7 + $0x40] sm:$0xff]
    %v226 = vld [vmem:[#allocation7 + $0x48] sm:$0xff]
    %v227 = vld [vmem:[#allocation7 + $0x50] sm:$0xff]
    %v228 = vld [vmem:[#allocation7 + $0x58] sm:$0xff]
    %v229 = vld [vmem:[#allocation7 + $0x60] sm:$0xff]
    %v230 = vld [vmem:[#allocation7 + $0x68] sm:$0xff]
    %v231 = vld [vmem:[#allocation7 + $0x70] sm:$0xff]
    %v232 = vld [vmem:[#allocation7 + $0x78] sm:$0xff]
    %v233 = vld [vmem:[#allocation7 + $0x80] sm:$0xff]
    %v234 = vld [vmem:[#allocation7 + $0x88] sm:$0xff]
    %v235 = vld [vmem:[#allocation7 + $0x90] sm:$0xff]
    %v236 = vld [vmem:[#allocation7 + $0x98] sm:$0xff]
    %v237 = vld [vmem:[#allocation7 + $0xa0] sm:$0xff]
    %v238 = vld [vmem:[#allocation7 + $0xa8] sm:$0xff]
    %v239 = vld [vmem:[#allocation7 + $0xb0] sm:$0xff]
    %v240 = vld [vmem:[#allocation7 + $0xb8] sm:$0xff]
    %v241 = vld [vmem:[#allocation7 + $0xc0] sm:$0xff]
    %v242 = vld [vmem:[#allocation7 + $0xc8] sm:$0xff]
    %v243 = vld [vmem:[#allocation7 + $0xd0] sm:$0xff]
    %v244 = vld [vmem:[#allocation7 + $0xd8] sm:$0xff]
    %v245 = vld [vmem:[#allocation7 + $0xe0] sm:$0xff]
    %v246 = vld [vmem:[#allocation7 + $0xe8] sm:$0xff]
    %v247 = vld [vmem:[#allocation7 + $0xf0] sm:$0xff]
    %v248 = vld [vmem:[#allocation7 + $0xf8] sm:$0xff]
    %v249 = vld [vmem:[#allocation7 + $0x100] sm:$0xff]
    %v250 = vld [vmem:[#allocation7 + $0x108] sm:$0xff]
    %v251 = vld [vmem:[#allocation7 + $0x110] sm:$0xff]
    %v252 = vld [vmem:[#allocation7 + $0x118] sm:$0xff]
    %v253 = vld [vmem:[#allocation7 + $0x120] sm:$0xff]
    %v254 = vld [vmem:[#allocation7 + $0x128] sm:$0xff]
    %v255 = vld [vmem:[#allocation7 + $0x130] sm:$0xff]
    %v256 = vld [vmem:[#allocation7 + $0x138] sm:$0xff]
    %v257 = vld [vmem:[#allocation7 + $0x140] sm:$0xff]
    %v258 = vld [vmem:[#allocation7 + $0x148] sm:$0xff]
    %v259 = vld [vmem:[#allocation7 + $0x150] sm:$0xff]
    %v260 = vld [vmem:[#allocation7 + $0x158] sm:$0xff]
    %v261 = vld [vmem:[#allocation7 + $0x160] sm:$0xff]
    %v262 = vld [vmem:[#allocation7 + $0x168] sm:$0xff]
    %v263 = vld [vmem:[#allocation7 + $0x170] sm:$0xff]
    %v264 = vld [vmem:[#allocation7 + $0x178] sm:$0xff]
    %v265 = vld [vmem:[#allocation7 + $0x180] sm:$0xff]
    %v266 = vld [vmem:[#allocation7 + $0x188] sm:$0xff]
    %v267 = vld [vmem:[#allocation7 + $0x190] sm:$0xff]
    %v268 = vld [vmem:[#allocation7 + $0x198] sm:$0xff]
    %v269 = vld [vmem:[#allocation7 + $0x1a0] sm:$0xff]
    %v270 = vld [vmem:[#allocation7 + $0x1a8] sm:$0xff]
    %v271 = vld [vmem:[#allocation7 + $0x1b0] sm:$0xff]
    %v272 = vld [vmem:[#allocation7 + $0x1b8] sm:$0xff]
    %v273 = vld [vmem:[#allocation7 + $0x1c0] sm:$0xff]
    %v274 = vld [vmem:[#allocation7 + $0x1c8] sm:$0xff]
    %v275 = vld [vmem:[#allocation7 + $0x1d0] sm:$0xff]
    %v276 = vld [vmem:[#allocation7 + $0x1d8] sm:$0xff]
    %v277 = vld [vmem:[#allocation7 + $0x1e0] sm:$0xff]
    %v278 = vld [vmem:[#allocation7 + $0x1e8] sm:$0xff]
    %v279 = vld [vmem:[#allocation7 + $0x1f0] sm:$0xff]
    %v280 = vld [vmem:[#allocation7 + $0x1f8] sm:$0xff]
    %v281 = vld [vmem:[%s3] sm:$0xf]
    %v283 = vlaneseq
    %v284 = vshrl.u32 %v283, 7
    %v285 = vsub.s32 0, %v284
    %v286 = vrot.slane %v281, %v285
    %v287 = vlaneseq
    %v288 = vshrl.u32 %v287, 7
    %v289 = vsub.s32 1, %v288
    %v290 = vrot.slane %v281, %v289
    %v291 = vlaneseq
    %v292 = vshrl.u32 %v291, 7
    %v293 = vsub.s32 2, %v292
    %v294 = vrot.slane %v281, %v293
    %v295 = vlaneseq
    %v296 = vshrl.u32 %v295, 7
    %v297 = vsub.s32 3, %v296
    %v298 = vrot.slane %v281, %v297
    %v304 = vunpack.c.l.b16 %v216
    %v305 = vunpack.c.h.b16 %v216
    %v306 = vpack.c.b16 %v304, %v304
    %v307 = vpack.c.b16 %v305, %v305
    %v374 = vunpack.c.l.b16 %v217
    %v375 = vunpack.c.h.b16 %v217
    %v376 = vunpack.c.l.b16 %v218
    %v377 = vunpack.c.h.b16 %v218
    %v378 = vunpack.c.l.b16 %v219
    %v379 = vunpack.c.h.b16 %v219
    %v380 = vunpack.c.l.b16 %v220
    %v381 = vunpack.c.h.b16 %v220
    %v382 = vunpack.c.l.b16 %v221
    %v383 = vunpack.c.h.b16 %v221
    %v384 = vunpack.c.l.b16 %v222
    %v385 = vunpack.c.h.b16 %v222
    %v386 = vunpack.c.l.b16 %v223
    %v387 = vunpack.c.h.b16 %v223
    %v388 = vunpack.c.l.b16 %v224
    %v389 = vunpack.c.h.b16 %v224
    %v390 = vunpack.c.l.b16 %v225
    %v391 = vunpack.c.h.b16 %v225
    %v392 = vunpack.c.l.b16 %v226
    %v393 = vunpack.c.h.b16 %v226
    %v394 = vunpack.c.l.b16 %v227
    %v395 = vunpack.c.h.b16 %v227
    %v396 = vunpack.c.l.b16 %v228
    %v397 = vunpack.c.h.b16 %v228
    %v398 = vunpack.c.l.b16 %v229
    %v399 = vunpack.c.h.b16 %v229
    %v400 = vunpack.c.l.b16 %v230
    %v401 = vunpack.c.h.b16 %v230
    %v402 = vunpack.c.l.b16 %v231
    %v403 = vunpack.c.h.b16 %v231
    %v404 = vunpack.c.l.b16 %v232
    %v405 = vunpack.c.h.b16 %v232
    %v406 = vunpack.c.l.b16 %v233
    %v407 = vunpack.c.h.b16 %v233
    %v408 = vunpack.c.l.b16 %v234
    %v409 = vunpack.c.h.b16 %v234
    %v410 = vunpack.c.l.b16 %v235
    %v411 = vunpack.c.h.b16 %v235
    %v412 = vunpack.c.l.b16 %v236
    %v413 = vunpack.c.h.b16 %v236
    %v414 = vunpack.c.l.b16 %v237
    %v415 = vunpack.c.h.b16 %v237
    %v416 = vunpack.c.l.b16 %v238
    %v417 = vunpack.c.h.b16 %v238
    %v418 = vunpack.c.l.b16 %v239
    %v419 = vunpack.c.h.b16 %v239
    %v420 = vunpack.c.l.b16 %v240
    %v421 = vunpack.c.h.b16 %v240
    %v422 = vunpack.c.l.b16 %v241
    %v423 = vunpack.c.h.b16 %v241
    %v424 = vunpack.c.l.b16 %v242
    %v425 = vunpack.c.h.b16 %v242
    %v426 = vunpack.c.l.b16 %v243
    %v427 = vunpack.c.h.b16 %v243
    %v428 = vunpack.c.l.b16 %v244
    %v429 = vunpack.c.h.b16 %v244
    %v430 = vunpack.c.l.b16 %v245
    %v431 = vunpack.c.h.b16 %v245
    %v432 = vunpack.c.l.b16 %v246
    %v433 = vunpack.c.h.b16 %v246
    %v434 = vunpack.c.l.b16 %v247
    %v435 = vunpack.c.h.b16 %v247
    %v436 = vunpack.c.l.b16 %v248
    %v437 = vunpack.c.h.b16 %v248
    %v438 = vunpack.c.l.b16 %v249
    %v439 = vunpack.c.h.b16 %v249
    %v440 = vunpack.c.l.b16 %v250
    %v441 = vunpack.c.h.b16 %v250
    %v442 = vunpack.c.l.b16 %v251
    %v443 = vunpack.c.h.b16 %v251
    %v444 = vunpack.c.l.b16 %v252
    %v445 = vunpack.c.h.b16 %v252
    %v446 = vunpack.c.l.b16 %v253
    %v447 = vunpack.c.h.b16 %v253
    %v448 = vunpack.c.l.b16 %v254
    %v449 = vunpack.c.h.b16 %v254
    %v450 = vunpack.c.l.b16 %v255
    %v451 = vunpack.c.h.b16 %v255
    %v452 = vunpack.c.l.b16 %v256
    %v453 = vunpack.c.h.b16 %v256
    %v454 = vunpack.c.l.b16 %v257
    %v455 = vunpack.c.h.b16 %v257
    %v456 = vunpack.c.l.b16 %v258
    %v457 = vunpack.c.h.b16 %v258
    %v458 = vunpack.c.l.b16 %v259
    %v459 = vunpack.c.h.b16 %v259
    %v460 = vunpack.c.l.b16 %v260
    %v461 = vunpack.c.h.b16 %v260
    %v462 = vunpack.c.l.b16 %v261
    %v463 = vunpack.c.h.b16 %v261
    %v464 = vunpack.c.l.b16 %v262
    %v465 = vunpack.c.h.b16 %v262
    %v466 = vunpack.c.l.b16 %v263
    %v467 = vunpack.c.h.b16 %v263
    %v468 = vunpack.c.l.b16 %v264
    %v469 = vunpack.c.h.b16 %v264
    %v470 = vunpack.c.l.b16 %v265
    %v471 = vunpack.c.h.b16 %v265
    %v472 = vunpack.c.l.b16 %v266
    %v473 = vunpack.c.h.b16 %v266
    %v474 = vunpack.c.l.b16 %v267
    %v475 = vunpack.c.h.b16 %v267
    %v476 = vunpack.c.l.b16 %v268
    %v477 = vunpack.c.h.b16 %v268
    %v478 = vunpack.c.l.b16 %v269
    %v479 = vunpack.c.h.b16 %v269
    %v480 = vunpack.c.l.b16 %v270
    %v481 = vunpack.c.h.b16 %v270
    %v482 = vunpack.c.l.b16 %v271
    %v483 = vunpack.c.h.b16 %v271
    %v484 = vunpack.c.l.b16 %v272
    %v485 = vunpack.c.h.b16 %v272
    %v486 = vunpack.c.l.b16 %v273
    %v487 = vunpack.c.h.b16 %v273
    %v488 = vunpack.c.l.b16 %v274
    %v489 = vunpack.c.h.b16 %v274
    %v490 = vunpack.c.l.b16 %v275
    %v491 = vunpack.c.h.b16 %v275
    %v492 = vunpack.c.l.b16 %v276
    %v493 = vunpack.c.h.b16 %v276
    %v494 = vunpack.c.l.b16 %v277
    %v495 = vunpack.c.h.b16 %v277
    %v496 = vunpack.c.l.b16 %v278
    %v497 = vunpack.c.h.b16 %v278
    %v498 = vunpack.c.l.b16 %v279
    %v499 = vunpack.c.h.b16 %v279
    %v500 = vunpack.c.l.b16 %v280
    %v501 = vunpack.c.h.b16 %v280
    %v502 = vpack.c.b16 %v378, %v374
    %v503 = vpack.c.b16 %v379, %v375
    %v504 = vpack.c.b16 %v380, %v376
    %v505 = vpack.c.b16 %v381, %v377
    %v506 = vpack.c.b16 %v386, %v382
    %v507 = vpack.c.b16 %v387, %v383
    %v508 = vpack.c.b16 %v388, %v384
    %v509 = vpack.c.b16 %v389, %v385
    %v510 = vpack.c.b16 %v394, %v390
    %v511 = vpack.c.b16 %v395, %v391
    %v512 = vpack.c.b16 %v396, %v392
    %v513 = vpack.c.b16 %v397, %v393
    %v514 = vpack.c.b16 %v402, %v398
    %v515 = vpack.c.b16 %v403, %v399
    %v516 = vpack.c.b16 %v404, %v400
    %v517 = vpack.c.b16 %v405, %v401
    %v518 = vpack.c.b16 %v410, %v406
    %v519 = vpack.c.b16 %v411, %v407
    %v520 = vpack.c.b16 %v412, %v408
    %v521 = vpack.c.b16 %v413, %v409
    %v522 = vpack.c.b16 %v418, %v414
    %v523 = vpack.c.b16 %v419, %v415
    %v524 = vpack.c.b16 %v420, %v416
    %v525 = vpack.c.b16 %v421, %v417
    %v526 = vpack.c.b16 %v426, %v422
    %v527 = vpack.c.b16 %v427, %v423
    %v528 = vpack.c.b16 %v428, %v424
    %v529 = vpack.c.b16 %v429, %v425
    %v530 = vpack.c.b16 %v434, %v430
    %v531 = vpack.c.b16 %v435, %v431
    %v532 = vpack.c.b16 %v436, %v432
    %v533 = vpack.c.b16 %v437, %v433
    %v534 = vpack.c.b16 %v442, %v438
    %v535 = vpack.c.b16 %v443, %v439
    %v536 = vpack.c.b16 %v444, %v440
    %v537 = vpack.c.b16 %v445, %v441
    %v538 = vpack.c.b16 %v450, %v446
    %v539 = vpack.c.b16 %v451, %v447
    %v540 = vpack.c.b16 %v452, %v448
    %v541 = vpack.c.b16 %v453, %v449
    %v542 = vpack.c.b16 %v458, %v454
    %v543 = vpack.c.b16 %v459, %v455
    %v544 = vpack.c.b16 %v460, %v456
    %v545 = vpack.c.b16 %v461, %v457
    %v546 = vpack.c.b16 %v466, %v462
    %v547 = vpack.c.b16 %v467, %v463
    %v548 = vpack.c.b16 %v468, %v464
    %v549 = vpack.c.b16 %v469, %v465
    %v550 = vpack.c.b16 %v474, %v470
    %v551 = vpack.c.b16 %v475, %v471
    %v552 = vpack.c.b16 %v476, %v472
    %v553 = vpack.c.b16 %v477, %v473
    %v554 = vpack.c.b16 %v482, %v478
    %v555 = vpack.c.b16 %v483, %v479
    %v556 = vpack.c.b16 %v484, %v480
    %v557 = vpack.c.b16 %v485, %v481
    %v558 = vpack.c.b16 %v490, %v486
    %v559 = vpack.c.b16 %v491, %v487
    %v560 = vpack.c.b16 %v492, %v488
    %v561 = vpack.c.b16 %v493, %v489
    %v562 = vpack.c.b16 %v498, %v494
    %v563 = vpack.c.b16 %v499, %v495
    %v564 = vpack.c.b16 %v500, %v496
    %v565 = vpack.c.b16 %v501, %v497
    %630 = vmatprep.subr.bf16.mxu0 %v503
    %631 = vmatpush1.bf16.msra.mxu0 %v502
    %632 = vmatprep.subr.bf16.mxu0 %v507
    %633 = vmatpush1.bf16.msra.mxu0 %v506
    %634 = vmatprep.subr.bf16.mxu0 %v511
    %635 = vmatpush1.bf16.msra.mxu0 %v510
    %636 = vmatprep.subr.bf16.mxu0 %v515
    %637 = vmatpush1.bf16.msra.mxu0 %v514
    %638 = vmatprep.subr.bf16.mxu0 %v519
    %639 = vmatpush1.bf16.msra.mxu0 %v518
    %640 = vmatprep.subr.bf16.mxu0 %v523
    %641 = vmatpush1.bf16.msra.mxu0 %v522
    %642 = vmatprep.subr.bf16.mxu0 %v527
    %643 = vmatpush1.bf16.msra.mxu0 %v526
    %644 = vmatprep.subr.bf16.mxu0 %v531
    %645 = vmatpush1.bf16.msra.mxu0 %v530
    %646 = vmatprep.subr.bf16.mxu0 %v535
    %647 = vmatpush1.bf16.msra.mxu0 %v534
    %648 = vmatprep.subr.bf16.mxu0 %v539
    %649 = vmatpush1.bf16.msra.mxu0 %v538
    %650 = vmatprep.subr.bf16.mxu0 %v543
    %651 = vmatpush1.bf16.msra.mxu0 %v542
    %652 = vmatprep.subr.bf16.mxu0 %v547
    %653 = vmatpush1.bf16.msra.mxu0 %v546
    %654 = vmatprep.subr.bf16.mxu0 %v551
    %655 = vmatpush1.bf16.msra.mxu0 %v550
    %656 = vmatprep.subr.bf16.mxu0 %v555
    %657 = vmatpush1.bf16.msra.mxu0 %v554
    %658 = vmatprep.subr.bf16.mxu0 %v559
    %659 = vmatpush1.bf16.msra.mxu0 %v558
    %660 = vmatprep.subr.bf16.mxu0 %v563
    %661 = vmatpush1.bf16.msra.mxu0 %v562
    %662 = vmatprep.mubr.bf16.mxu0 %v307
    %663 = vmatmul.mubr.bf16.gmra.mrb[0].mxu0 %v306
    %v664 = vpop.f32.mrb[0].mxu0
    %v665 = vadd.f32 %v286, %v664
    %v666 = vpop.f32.mrb[0].mxu0
    %v667 = vadd.f32 %v290, %v666
    %v668 = vpop.f32.mrb[0].mxu0
    %v669 = vpop.f32.mrb[0].mxu0
    %670 = vdwg.mxu0
    %671 = vmatprep.subr.bf16.mxu0 %v505
    %672 = vmatpush1.bf16.msra.mxu0 %v504
    %673 = vmatprep.subr.bf16.mxu0 %v509
    %674 = vmatpush1.bf16.msra.mxu0 %v508
    %675 = vmatprep.subr.bf16.mxu0 %v513
    %676 = vmatpush1.bf16.msra.mxu0 %v512
    %677 = vmatprep.subr.bf16.mxu0 %v517
    %678 = vmatpush1.bf16.msra.mxu0 %v516
    %679 = vmatprep.subr.bf16.mxu0 %v521
    %680 = vmatpush1.bf16.msra.mxu0 %v520
    %681 = vmatprep.subr.bf16.mxu0 %v525
    %682 = vmatpush1.bf16.msra.mxu0 %v524
    %683 = vmatprep.subr.bf16.mxu0 %v529
    %684 = vmatpush1.bf16.msra.mxu0 %v528
    %685 = vmatprep.subr.bf16.mxu0 %v533
    %686 = vmatpush1.bf16.msra.mxu0 %v532
    %687 = vmatprep.subr.bf16.mxu0 %v537
    %688 = vmatpush1.bf16.msra.mxu0 %v536
    %689 = vmatprep.subr.bf16.mxu0 %v541
    %690 = vmatpush1.bf16.msra.mxu0 %v540
    %691 = vmatprep.subr.bf16.mxu0 %v545
    %692 = vmatpush1.bf16.msra.mxu0 %v544
    %693 = vmatprep.subr.bf16.mxu0 %v549
    %694 = vmatpush1.bf16.msra.mxu0 %v548
    %695 = vmatprep.subr.bf16.mxu0 %v553
    %696 = vmatpush1.bf16.msra.mxu0 %v552
    %697 = vmatprep.subr.bf16.mxu0 %v557
    %698 = vmatpush1.bf16.msra.mxu0 %v556
    %699 = vmatprep.subr.bf16.mxu0 %v561
    %700 = vmatpush1.bf16.msra.mxu0 %v560
    %701 = vmatprep.subr.bf16.mxu0 %v565
    %702 = vmatpush1.bf16.msra.mxu0 %v564
    %703 = vmatprep.mubr.bf16.mxu0 %v307
    %704 = vmatmul.mubr.bf16.gmra.mrb[0].mxu0 %v306
    %v705 = vpop.f32.mrb[0].mxu0
    %v706 = vadd.f32 %v294, %v705
    %v707 = vpop.f32.mrb[0].mxu0
    %v708 = vadd.f32 %v298, %v707
    %v709 = vpop.f32.mrb[0].mxu0
    %v710 = vpop.f32.mrb[0].mxu0
    %711 = vdwg.mxu0
    %vm712 = vcmp.gt.f32.partialorder %v665, 0.0
    %vm713 = vcmp.gt.f32.partialorder %v667, 0.0
    %vm714 = vcmp.gt.f32.partialorder %v706, 0.0
    %vm715 = vcmp.gt.f32.partialorder %v708, 0.0
    %v716 = vmul.f32 %v665, 0.2
    %v717 = vmul.f32 %v667, 0.2
    %v718 = vmul.f32 %v706, 0.2
    %v719 = vmul.f32 %v708, 0.2
    %v720 = vsel %vm712, %v665, %v716
    %v721 = vsel %vm713, %v667, %v717
    %v722 = vsel %vm714, %v706, %v718
    %v723 = vsel %vm715, %v708, %v719
    %v724 = vpack.c.bf16 %v720, %v720
    %v725 = vpack.c.bf16 %v721, %v721
    %v726 = vpack.c.bf16 %v722, %v722
    %v727 = vpack.c.bf16 %v723, %v723
    %v728 = vld [vmem:[#allocation8] sm:$0xff]
    %v729 = vld [vmem:[#allocation8 + $0x8] sm:$0xff]
    %v730 = vld [vmem:[#allocation8 + $0x10] sm:$0xff]
    %v731 = vld [vmem:[#allocation8 + $0x18] sm:$0xff]
    %v732 = vld [vmem:[#allocation8 + $0x20] sm:$0xff]
    %v733 = vld [vmem:[#allocation8 + $0x28] sm:$0xff]
    %v734 = vld [vmem:[#allocation8 + $0x30] sm:$0xff]
    %v735 = vld [vmem:[#allocation8 + $0x38] sm:$0xff]
    %v736 = vld [vmem:[#allocation8 + $0x40] sm:$0xff]
    %v737 = vld [vmem:[#allocation8 + $0x48] sm:$0xff]
    %v738 = vld [vmem:[#allocation8 + $0x50] sm:$0xff]
    %v739 = vld [vmem:[#allocation8 + $0x58] sm:$0xff]
    %v740 = vld [vmem:[#allocation8 + $0x60] sm:$0xff]
    %v741 = vld [vmem:[#allocation8 + $0x68] sm:$0xff]
    %v742 = vld [vmem:[#allocation8 + $0x70] sm:$0xff]
    %v743 = vld [vmem:[#allocation8 + $0x78] sm:$0xff]
    %v744 = vld [vmem:[#allocation8 + $0x80] sm:$0xff]
    %v745 = vld [vmem:[#allocation8 + $0x88] sm:$0xff]
    %v746 = vld [vmem:[#allocation8 + $0x90] sm:$0xff]
    %v747 = vld [vmem:[#allocation8 + $0x98] sm:$0xff]
    %v748 = vld [vmem:[#allocation8 + $0xa0] sm:$0xff]
    %v749 = vld [vmem:[#allocation8 + $0xa8] sm:$0xff]
    %v750 = vld [vmem:[#allocation8 + $0xb0] sm:$0xff]
    %v751 = vld [vmem:[#allocation8 + $0xb8] sm:$0xff]
    %v752 = vld [vmem:[#allocation8 + $0xc0] sm:$0xff]
    %v753 = vld [vmem:[#allocation8 + $0xc8] sm:$0xff]
    %v754 = vld [vmem:[#allocation8 + $0xd0] sm:$0xff]
    %v755 = vld [vmem:[#allocation8 + $0xd8] sm:$0xff]
    %v756 = vld [vmem:[#allocation8 + $0xe0] sm:$0xff]
    %v757 = vld [vmem:[#allocation8 + $0xe8] sm:$0xff]
    %v758 = vld [vmem:[#allocation8 + $0xf0] sm:$0xff]
    %v759 = vld [vmem:[#allocation8 + $0xf8] sm:$0xff]
    %v760 = vld [vmem:[#allocation8 + $0x100] sm:$0xff]
    %v761 = vld [vmem:[#allocation8 + $0x108] sm:$0xff]
    %v762 = vld [vmem:[#allocation8 + $0x110] sm:$0xff]
    %v763 = vld [vmem:[#allocation8 + $0x118] sm:$0xff]
    %v764 = vld [vmem:[#allocation8 + $0x120] sm:$0xff]
    %v765 = vld [vmem:[#allocation8 + $0x128] sm:$0xff]
    %v766 = vld [vmem:[#allocation8 + $0x130] sm:$0xff]
    %v767 = vld [vmem:[#allocation8 + $0x138] sm:$0xff]
    %v768 = vld [vmem:[#allocation8 + $0x140] sm:$0xff]
    %v769 = vld [vmem:[#allocation8 + $0x148] sm:$0xff]
    %v770 = vld [vmem:[#allocation8 + $0x150] sm:$0xff]
    %v771 = vld [vmem:[#allocation8 + $0x158] sm:$0xff]
    %v772 = vld [vmem:[#allocation8 + $0x160] sm:$0xff]
    %v773 = vld [vmem:[#allocation8 + $0x168] sm:$0xff]
    %v774 = vld [vmem:[#allocation8 + $0x170] sm:$0xff]
    %v775 = vld [vmem:[#allocation8 + $0x178] sm:$0xff]
    %v776 = vld [vmem:[#allocation8 + $0x180] sm:$0xff]
    %v777 = vld [vmem:[#allocation8 + $0x188] sm:$0xff]
    %v778 = vld [vmem:[#allocation8 + $0x190] sm:$0xff]
    %v779 = vld [vmem:[#allocation8 + $0x198] sm:$0xff]
    %v780 = vld [vmem:[#allocation8 + $0x1a0] sm:$0xff]
    %v781 = vld [vmem:[#allocation8 + $0x1a8] sm:$0xff]
    %v782 = vld [vmem:[#allocation8 + $0x1b0] sm:$0xff]
    %v783 = vld [vmem:[#allocation8 + $0x1b8] sm:$0xff]
    %v784 = vld [vmem:[#allocation8 + $0x1c0] sm:$0xff]
    %v785 = vld [vmem:[#allocation8 + $0x1c8] sm:$0xff]
    %v786 = vld [vmem:[#allocation8 + $0x1d0] sm:$0xff]
    %v787 = vld [vmem:[#allocation8 + $0x1d8] sm:$0xff]
    %v788 = vld [vmem:[#allocation8 + $0x1e0] sm:$0xff]
    %v789 = vld [vmem:[#allocation8 + $0x1e8] sm:$0xff]
    %v790 = vld [vmem:[#allocation8 + $0x1f0] sm:$0xff]
    %v791 = vld [vmem:[#allocation8 + $0x1f8] sm:$0xff]
    %v792 = vld [vmem:[#allocation8 + $0x200] sm:$0xff]
    %v793 = vld [vmem:[#allocation8 + $0x208] sm:$0xff]
    %v794 = vld [vmem:[#allocation8 + $0x210] sm:$0xff]
    %v795 = vld [vmem:[#allocation8 + $0x218] sm:$0xff]
    %v796 = vld [vmem:[#allocation8 + $0x220] sm:$0xff]
    %v797 = vld [vmem:[#allocation8 + $0x228] sm:$0xff]
    %v798 = vld [vmem:[#allocation8 + $0x230] sm:$0xff]
    %v799 = vld [vmem:[#allocation8 + $0x238] sm:$0xff]
    %v800 = vld [vmem:[#allocation8 + $0x240] sm:$0xff]
    %v801 = vld [vmem:[#allocation8 + $0x248] sm:$0xff]
    %v802 = vld [vmem:[#allocation8 + $0x250] sm:$0xff]
    %v803 = vld [vmem:[#allocation8 + $0x258] sm:$0xff]
    %v804 = vld [vmem:[#allocation8 + $0x260] sm:$0xff]
    %v805 = vld [vmem:[#allocation8 + $0x268] sm:$0xff]
    %v806 = vld [vmem:[#allocation8 + $0x270] sm:$0xff]
    %v807 = vld [vmem:[#allocation8 + $0x278] sm:$0xff]
    %v808 = vld [vmem:[#allocation8 + $0x280] sm:$0xff]
    %v809 = vld [vmem:[#allocation8 + $0x288] sm:$0xff]
    %v810 = vld [vmem:[#allocation8 + $0x290] sm:$0xff]
    %v811 = vld [vmem:[#allocation8 + $0x298] sm:$0xff]
    %v812 = vld [vmem:[#allocation8 + $0x2a0] sm:$0xff]
    %v813 = vld [vmem:[#allocation8 + $0x2a8] sm:$0xff]
    %v814 = vld [vmem:[#allocation8 + $0x2b0] sm:$0xff]
    %v815 = vld [vmem:[#allocation8 + $0x2b8] sm:$0xff]
    %v816 = vld [vmem:[#allocation8 + $0x2c0] sm:$0xff]
    %v817 = vld [vmem:[#allocation8 + $0x2c8] sm:$0xff]
    %v818 = vld [vmem:[#allocation8 + $0x2d0] sm:$0xff]
    %v819 = vld [vmem:[#allocation8 + $0x2d8] sm:$0xff]
    %v820 = vld [vmem:[#allocation8 + $0x2e0] sm:$0xff]
    %v821 = vld [vmem:[#allocation8 + $0x2e8] sm:$0xff]
    %v822 = vld [vmem:[#allocation8 + $0x2f0] sm:$0xff]
    %v823 = vld [vmem:[#allocation8 + $0x2f8] sm:$0xff]
    %v824 = vld [vmem:[#allocation8 + $0x300] sm:$0xff]
    %v825 = vld [vmem:[#allocation8 + $0x308] sm:$0xff]
    %v826 = vld [vmem:[#allocation8 + $0x310] sm:$0xff]
    %v827 = vld [vmem:[#allocation8 + $0x318] sm:$0xff]
    %v828 = vld [vmem:[#allocation8 + $0x320] sm:$0xff]
    %v829 = vld [vmem:[#allocation8 + $0x328] sm:$0xff]
    %v830 = vld [vmem:[#allocation8 + $0x330] sm:$0xff]
    %v831 = vld [vmem:[#allocation8 + $0x338] sm:$0xff]
    %v832 = vld [vmem:[#allocation8 + $0x340] sm:$0xff]
    %v833 = vld [vmem:[#allocation8 + $0x348] sm:$0xff]
    %v834 = vld [vmem:[#allocation8 + $0x350] sm:$0xff]
    %v835 = vld [vmem:[#allocation8 + $0x358] sm:$0xff]
    %v836 = vld [vmem:[#allocation8 + $0x360] sm:$0xff]
    %v837 = vld [vmem:[#allocation8 + $0x368] sm:$0xff]
    %v838 = vld [vmem:[#allocation8 + $0x370] sm:$0xff]
    %v839 = vld [vmem:[#allocation8 + $0x378] sm:$0xff]
    %v840 = vld [vmem:[#allocation8 + $0x380] sm:$0xff]
    %v841 = vld [vmem:[#allocation8 + $0x388] sm:$0xff]
    %v842 = vld [vmem:[#allocation8 + $0x390] sm:$0xff]
    %v843 = vld [vmem:[#allocation8 + $0x398] sm:$0xff]
    %v844 = vld [vmem:[#allocation8 + $0x3a0] sm:$0xff]
    %v845 = vld [vmem:[#allocation8 + $0x3a8] sm:$0xff]
    %v846 = vld [vmem:[#allocation8 + $0x3b0] sm:$0xff]
    %v847 = vld [vmem:[#allocation8 + $0x3b8] sm:$0xff]
    %v848 = vld [vmem:[#allocation8 + $0x3c0] sm:$0xff]
    %v849 = vld [vmem:[#allocation8 + $0x3c8] sm:$0xff]
    %v850 = vld [vmem:[#allocation8 + $0x3d0] sm:$0xff]
    %v851 = vld [vmem:[#allocation8 + $0x3d8] sm:$0xff]
    %v852 = vld [vmem:[#allocation8 + $0x3e0] sm:$0xff]
    %v853 = vld [vmem:[#allocation8 + $0x3e8] sm:$0xff]
    %v854 = vld [vmem:[#allocation8 + $0x3f0] sm:$0xff]
    %v855 = vld [vmem:[#allocation8 + $0x3f8] sm:$0xff]
    %v856 = vld [vmem:[%s5] sm:$0xf]
    %v858 = vlaneseq
    %v859 = vshrl.u32 %v858, 7
    %v860 = vsub.s32 0, %v859
    %v861 = vrot.slane %v856, %v860
    %v862 = vlaneseq
    %v863 = vshrl.u32 %v862, 7
    %v864 = vsub.s32 1, %v863
    %v865 = vrot.slane %v856, %v864
    %v866 = vlaneseq
    %v867 = vshrl.u32 %v866, 7
    %v868 = vsub.s32 2, %v867
    %v869 = vrot.slane %v856, %v868
    %v870 = vlaneseq
    %v871 = vshrl.u32 %v870, 7
    %v872 = vsub.s32 3, %v871
    %v873 = vrot.slane %v856, %v872
    %v1006 = vunpack.c.l.b16 %v728
    %v1007 = vunpack.c.h.b16 %v728
    %v1008 = vunpack.c.l.b16 %v729
    %v1009 = vunpack.c.h.b16 %v729
    %v1010 = vunpack.c.l.b16 %v730
    %v1011 = vunpack.c.h.b16 %v730
    %v1012 = vunpack.c.l.b16 %v731
    %v1013 = vunpack.c.h.b16 %v731
    %v1014 = vunpack.c.l.b16 %v732
    %v1015 = vunpack.c.h.b16 %v732
    %v1016 = vunpack.c.l.b16 %v733
    %v1017 = vunpack.c.h.b16 %v733
    %v1018 = vunpack.c.l.b16 %v734
    %v1019 = vunpack.c.h.b16 %v734
    %v1020 = vunpack.c.l.b16 %v735
    %v1021 = vunpack.c.h.b16 %v735
    %v1022 = vunpack.c.l.b16 %v736
    %v1023 = vunpack.c.h.b16 %v736
    %v1024 = vunpack.c.l.b16 %v737
    %v1025 = vunpack.c.h.b16 %v737
    %v1026 = vunpack.c.l.b16 %v738
    %v1027 = vunpack.c.h.b16 %v738
    %v1028 = vunpack.c.l.b16 %v739
    %v1029 = vunpack.c.h.b16 %v739
    %v1030 = vunpack.c.l.b16 %v740
    %v1031 = vunpack.c.h.b16 %v740
    %v1032 = vunpack.c.l.b16 %v741
    %v1033 = vunpack.c.h.b16 %v741
    %v1034 = vunpack.c.l.b16 %v742
    %v1035 = vunpack.c.h.b16 %v742
    %v1036 = vunpack.c.l.b16 %v743
    %v1037 = vunpack.c.h.b16 %v743
    %v1038 = vunpack.c.l.b16 %v744
    %v1039 = vunpack.c.h.b16 %v744
    %v1040 = vunpack.c.l.b16 %v745
    %v1041 = vunpack.c.h.b16 %v745
    %v1042 = vunpack.c.l.b16 %v746
    %v1043 = vunpack.c.h.b16 %v746
    %v1044 = vunpack.c.l.b16 %v747
    %v1045 = vunpack.c.h.b16 %v747
    %v1046 = vunpack.c.l.b16 %v748
    %v1047 = vunpack.c.h.b16 %v748
    %v1048 = vunpack.c.l.b16 %v749
    %v1049 = vunpack.c.h.b16 %v749
    %v1050 = vunpack.c.l.b16 %v750
    %v1051 = vunpack.c.h.b16 %v750
    %v1052 = vunpack.c.l.b16 %v751
    %v1053 = vunpack.c.h.b16 %v751
    %v1054 = vunpack.c.l.b16 %v752
    %v1055 = vunpack.c.h.b16 %v752
    %v1056 = vunpack.c.l.b16 %v753
    %v1057 = vunpack.c.h.b16 %v753
    %v1058 = vunpack.c.l.b16 %v754
    %v1059 = vunpack.c.h.b16 %v754
    %v1060 = vunpack.c.l.b16 %v755
    %v1061 = vunpack.c.h.b16 %v755
    %v1062 = vunpack.c.l.b16 %v756
    %v1063 = vunpack.c.h.b16 %v756
    %v1064 = vunpack.c.l.b16 %v757
    %v1065 = vunpack.c.h.b16 %v757
    %v1066 = vunpack.c.l.b16 %v758
    %v1067 = vunpack.c.h.b16 %v758
    %v1068 = vunpack.c.l.b16 %v759
    %v1069 = vunpack.c.h.b16 %v759
    %v1070 = vunpack.c.l.b16 %v760
    %v1071 = vunpack.c.h.b16 %v760
    %v1072 = vunpack.c.l.b16 %v761
    %v1073 = vunpack.c.h.b16 %v761
    %v1074 = vunpack.c.l.b16 %v762
    %v1075 = vunpack.c.h.b16 %v762
    %v1076 = vunpack.c.l.b16 %v763
    %v1077 = vunpack.c.h.b16 %v763
    %v1078 = vunpack.c.l.b16 %v764
    %v1079 = vunpack.c.h.b16 %v764
    %v1080 = vunpack.c.l.b16 %v765
    %v1081 = vunpack.c.h.b16 %v765
    %v1082 = vunpack.c.l.b16 %v766
    %v1083 = vunpack.c.h.b16 %v766
    %v1084 = vunpack.c.l.b16 %v767
    %v1085 = vunpack.c.h.b16 %v767
    %v1086 = vunpack.c.l.b16 %v768
    %v1087 = vunpack.c.h.b16 %v768
    %v1088 = vunpack.c.l.b16 %v769
    %v1089 = vunpack.c.h.b16 %v769
    %v1090 = vunpack.c.l.b16 %v770
    %v1091 = vunpack.c.h.b16 %v770
    %v1092 = vunpack.c.l.b16 %v771
    %v1093 = vunpack.c.h.b16 %v771
    %v1094 = vunpack.c.l.b16 %v772
    %v1095 = vunpack.c.h.b16 %v772
    %v1096 = vunpack.c.l.b16 %v773
    %v1097 = vunpack.c.h.b16 %v773
    %v1098 = vunpack.c.l.b16 %v774
    %v1099 = vunpack.c.h.b16 %v774
    %v1100 = vunpack.c.l.b16 %v775
    %v1101 = vunpack.c.h.b16 %v775
    %v1102 = vunpack.c.l.b16 %v776
    %v1103 = vunpack.c.h.b16 %v776
    %v1104 = vunpack.c.l.b16 %v777
    %v1105 = vunpack.c.h.b16 %v777
    %v1106 = vunpack.c.l.b16 %v778
    %v1107 = vunpack.c.h.b16 %v778
    %v1108 = vunpack.c.l.b16 %v779
    %v1109 = vunpack.c.h.b16 %v779
    %v1110 = vunpack.c.l.b16 %v780
    %v1111 = vunpack.c.h.b16 %v780
    %v1112 = vunpack.c.l.b16 %v781
    %v1113 = vunpack.c.h.b16 %v781
    %v1114 = vunpack.c.l.b16 %v782
    %v1115 = vunpack.c.h.b16 %v782
    %v1116 = vunpack.c.l.b16 %v783
    %v1117 = vunpack.c.h.b16 %v783
    %v1118 = vunpack.c.l.b16 %v784
    %v1119 = vunpack.c.h.b16 %v784
    %v1120 = vunpack.c.l.b16 %v785
    %v1121 = vunpack.c.h.b16 %v785
    %v1122 = vunpack.c.l.b16 %v786
    %v1123 = vunpack.c.h.b16 %v786
    %v1124 = vunpack.c.l.b16 %v787
    %v1125 = vunpack.c.h.b16 %v787
    %v1126 = vunpack.c.l.b16 %v788
    %v1127 = vunpack.c.h.b16 %v788
    %v1128 = vunpack.c.l.b16 %v789
    %v1129 = vunpack.c.h.b16 %v789
    %v1130 = vunpack.c.l.b16 %v790
    %v1131 = vunpack.c.h.b16 %v790
    %v1132 = vunpack.c.l.b16 %v791
    %v1133 = vunpack.c.h.b16 %v791
    %v1134 = vunpack.c.l.b16 %v792
    %v1135 = vunpack.c.h.b16 %v792
    %v1136 = vunpack.c.l.b16 %v793
    %v1137 = vunpack.c.h.b16 %v793
    %v1138 = vunpack.c.l.b16 %v794
    %v1139 = vunpack.c.h.b16 %v794
    %v1140 = vunpack.c.l.b16 %v795
    %v1141 = vunpack.c.h.b16 %v795
    %v1142 = vunpack.c.l.b16 %v796
    %v1143 = vunpack.c.h.b16 %v796
    %v1144 = vunpack.c.l.b16 %v797
    %v1145 = vunpack.c.h.b16 %v797
    %v1146 = vunpack.c.l.b16 %v798
    %v1147 = vunpack.c.h.b16 %v798
    %v1148 = vunpack.c.l.b16 %v799
    %v1149 = vunpack.c.h.b16 %v799
    %v1150 = vunpack.c.l.b16 %v800
    %v1151 = vunpack.c.h.b16 %v800
    %v1152 = vunpack.c.l.b16 %v801
    %v1153 = vunpack.c.h.b16 %v801
    %v1154 = vunpack.c.l.b16 %v802
    %v1155 = vunpack.c.h.b16 %v802
    %v1156 = vunpack.c.l.b16 %v803
    %v1157 = vunpack.c.h.b16 %v803
    %v1158 = vunpack.c.l.b16 %v804
    %v1159 = vunpack.c.h.b16 %v804
    %v1160 = vunpack.c.l.b16 %v805
    %v1161 = vunpack.c.h.b16 %v805
    %v1162 = vunpack.c.l.b16 %v806
    %v1163 = vunpack.c.h.b16 %v806
    %v1164 = vunpack.c.l.b16 %v807
    %v1165 = vunpack.c.h.b16 %v807
    %v1166 = vunpack.c.l.b16 %v808
    %v1167 = vunpack.c.h.b16 %v808
    %v1168 = vunpack.c.l.b16 %v809
    %v1169 = vunpack.c.h.b16 %v809
    %v1170 = vunpack.c.l.b16 %v810
    %v1171 = vunpack.c.h.b16 %v810
    %v1172 = vunpack.c.l.b16 %v811
    %v1173 = vunpack.c.h.b16 %v811
    %v1174 = vunpack.c.l.b16 %v812
    %v1175 = vunpack.c.h.b16 %v812
    %v1176 = vunpack.c.l.b16 %v813
    %v1177 = vunpack.c.h.b16 %v813
    %v1178 = vunpack.c.l.b16 %v814
    %v1179 = vunpack.c.h.b16 %v814
    %v1180 = vunpack.c.l.b16 %v815
    %v1181 = vunpack.c.h.b16 %v815
    %v1182 = vunpack.c.l.b16 %v816
    %v1183 = vunpack.c.h.b16 %v816
    %v1184 = vunpack.c.l.b16 %v817
    %v1185 = vunpack.c.h.b16 %v817
    %v1186 = vunpack.c.l.b16 %v818
    %v1187 = vunpack.c.h.b16 %v818
    %v1188 = vunpack.c.l.b16 %v819
    %v1189 = vunpack.c.h.b16 %v819
    %v1190 = vunpack.c.l.b16 %v820
    %v1191 = vunpack.c.h.b16 %v820
    %v1192 = vunpack.c.l.b16 %v821
    %v1193 = vunpack.c.h.b16 %v821
    %v1194 = vunpack.c.l.b16 %v822
    %v1195 = vunpack.c.h.b16 %v822
    %v1196 = vunpack.c.l.b16 %v823
    %v1197 = vunpack.c.h.b16 %v823
    %v1198 = vunpack.c.l.b16 %v824
    %v1199 = vunpack.c.h.b16 %v824
    %v1200 = vunpack.c.l.b16 %v825
    %v1201 = vunpack.c.h.b16 %v825
    %v1202 = vunpack.c.l.b16 %v826
    %v1203 = vunpack.c.h.b16 %v826
    %v1204 = vunpack.c.l.b16 %v827
    %v1205 = vunpack.c.h.b16 %v827
    %v1206 = vunpack.c.l.b16 %v828
    %v1207 = vunpack.c.h.b16 %v828
    %v1208 = vunpack.c.l.b16 %v829
    %v1209 = vunpack.c.h.b16 %v829
    %v1210 = vunpack.c.l.b16 %v830
    %v1211 = vunpack.c.h.b16 %v830
    %v1212 = vunpack.c.l.b16 %v831
    %v1213 = vunpack.c.h.b16 %v831
    %v1214 = vunpack.c.l.b16 %v832
    %v1215 = vunpack.c.h.b16 %v832
    %v1216 = vunpack.c.l.b16 %v833
    %v1217 = vunpack.c.h.b16 %v833
    %v1218 = vunpack.c.l.b16 %v834
    %v1219 = vunpack.c.h.b16 %v834
    %v1220 = vunpack.c.l.b16 %v835
    %v1221 = vunpack.c.h.b16 %v835
    %v1222 = vunpack.c.l.b16 %v836
    %v1223 = vunpack.c.h.b16 %v836
    %v1224 = vunpack.c.l.b16 %v837
    %v1225 = vunpack.c.h.b16 %v837
    %v1226 = vunpack.c.l.b16 %v838
    %v1227 = vunpack.c.h.b16 %v838
    %v1228 = vunpack.c.l.b16 %v839
    %v1229 = vunpack.c.h.b16 %v839
    %v1230 = vunpack.c.l.b16 %v840
    %v1231 = vunpack.c.h.b16 %v840
    %v1232 = vunpack.c.l.b16 %v841
    %v1233 = vunpack.c.h.b16 %v841
    %v1234 = vunpack.c.l.b16 %v842
    %v1235 = vunpack.c.h.b16 %v842
    %v1236 = vunpack.c.l.b16 %v843
    %v1237 = vunpack.c.h.b16 %v843
    %v1238 = vunpack.c.l.b16 %v844
    %v1239 = vunpack.c.h.b16 %v844
    %v1240 = vunpack.c.l.b16 %v845
    %v1241 = vunpack.c.h.b16 %v845
    %v1242 = vunpack.c.l.b16 %v846
    %v1243 = vunpack.c.h.b16 %v846
    %v1244 = vunpack.c.l.b16 %v847
    %v1245 = vunpack.c.h.b16 %v847
    %v1246 = vunpack.c.l.b16 %v848
    %v1247 = vunpack.c.h.b16 %v848
    %v1248 = vunpack.c.l.b16 %v849
    %v1249 = vunpack.c.h.b16 %v849
    %v1250 = vunpack.c.l.b16 %v850
    %v1251 = vunpack.c.h.b16 %v850
    %v1252 = vunpack.c.l.b16 %v851
    %v1253 = vunpack.c.h.b16 %v851
    %v1254 = vunpack.c.l.b16 %v852
    %v1255 = vunpack.c.h.b16 %v852
    %v1256 = vunpack.c.l.b16 %v853
    %v1257 = vunpack.c.h.b16 %v853
    %v1258 = vunpack.c.l.b16 %v854
    %v1259 = vunpack.c.h.b16 %v854
    %v1260 = vunpack.c.l.b16 %v855
    %v1261 = vunpack.c.h.b16 %v855
    %v1262 = vpack.c.b16 %v1010, %v1006
    %v1263 = vpack.c.b16 %v1011, %v1007
    %v1264 = vpack.c.b16 %v1012, %v1008
    %v1265 = vpack.c.b16 %v1013, %v1009
    %v1266 = vpack.c.b16 %v1018, %v1014
    %v1267 = vpack.c.b16 %v1019, %v1015
    %v1268 = vpack.c.b16 %v1020, %v1016
    %v1269 = vpack.c.b16 %v1021, %v1017
    %v1270 = vpack.c.b16 %v1026, %v1022
    %v1271 = vpack.c.b16 %v1027, %v1023
    %v1272 = vpack.c.b16 %v1028, %v1024
    %v1273 = vpack.c.b16 %v1029, %v1025
    %v1274 = vpack.c.b16 %v1034, %v1030
    %v1275 = vpack.c.b16 %v1035, %v1031
    %v1276 = vpack.c.b16 %v1036, %v1032
    %v1277 = vpack.c.b16 %v1037, %v1033
    %v1278 = vpack.c.b16 %v1042, %v1038
    %v1279 = vpack.c.b16 %v1043, %v1039
    %v1280 = vpack.c.b16 %v1044, %v1040
    %v1281 = vpack.c.b16 %v1045, %v1041
    %v1282 = vpack.c.b16 %v1050, %v1046
    %v1283 = vpack.c.b16 %v1051, %v1047
    %v1284 = vpack.c.b16 %v1052, %v1048
    %v1285 = vpack.c.b16 %v1053, %v1049
    %v1286 = vpack.c.b16 %v1058, %v1054
    %v1287 = vpack.c.b16 %v1059, %v1055
    %v1288 = vpack.c.b16 %v1060, %v1056
    %v1289 = vpack.c.b16 %v1061, %v1057
    %v1290 = vpack.c.b16 %v1066, %v1062
    %v1291 = vpack.c.b16 %v1067, %v1063
    %v1292 = vpack.c.b16 %v1068, %v1064
    %v1293 = vpack.c.b16 %v1069, %v1065
    %v1294 = vpack.c.b16 %v1074, %v1070
    %v1295 = vpack.c.b16 %v1075, %v1071
    %v1296 = vpack.c.b16 %v1076, %v1072
    %v1297 = vpack.c.b16 %v1077, %v1073
    %v1298 = vpack.c.b16 %v1082, %v1078
    %v1299 = vpack.c.b16 %v1083, %v1079
    %v1300 = vpack.c.b16 %v1084, %v1080
    %v1301 = vpack.c.b16 %v1085, %v1081
    %v1302 = vpack.c.b16 %v1090, %v1086
    %v1303 = vpack.c.b16 %v1091, %v1087
    %v1304 = vpack.c.b16 %v1092, %v1088
    %v1305 = vpack.c.b16 %v1093, %v1089
    %v1306 = vpack.c.b16 %v1098, %v1094
    %v1307 = vpack.c.b16 %v1099, %v1095
    %v1308 = vpack.c.b16 %v1100, %v1096
    %v1309 = vpack.c.b16 %v1101, %v1097
    %v1310 = vpack.c.b16 %v1106, %v1102
    %v1311 = vpack.c.b16 %v1107, %v1103
    %v1312 = vpack.c.b16 %v1108, %v1104
    %v1313 = vpack.c.b16 %v1109, %v1105
    %v1314 = vpack.c.b16 %v1114, %v1110
    %v1315 = vpack.c.b16 %v1115, %v1111
    %v1316 = vpack.c.b16 %v1116, %v1112
    %v1317 = vpack.c.b16 %v1117, %v1113
    %v1318 = vpack.c.b16 %v1122, %v1118
    %v1319 = vpack.c.b16 %v1123, %v1119
    %v1320 = vpack.c.b16 %v1124, %v1120
    %v1321 = vpack.c.b16 %v1125, %v1121
    %v1322 = vpack.c.b16 %v1130, %v1126
    %v1323 = vpack.c.b16 %v1131, %v1127
    %v1324 = vpack.c.b16 %v1132, %v1128
    %v1325 = vpack.c.b16 %v1133, %v1129
    %v1326 = vpack.c.b16 %v1138, %v1134
    %v1327 = vpack.c.b16 %v1139, %v1135
    %v1328 = vpack.c.b16 %v1140, %v1136
    %v1329 = vpack.c.b16 %v1141, %v1137
    %v1330 = vpack.c.b16 %v1146, %v1142
    %v1331 = vpack.c.b16 %v1147, %v1143
    %v1332 = vpack.c.b16 %v1148, %v1144
    %v1333 = vpack.c.b16 %v1149, %v1145
    %v1334 = vpack.c.b16 %v1154, %v1150
    %v1335 = vpack.c.b16 %v1155, %v1151
    %v1336 = vpack.c.b16 %v1156, %v1152
    %v1337 = vpack.c.b16 %v1157, %v1153
    %v1338 = vpack.c.b16 %v1162, %v1158
    %v1339 = vpack.c.b16 %v1163, %v1159
    %v1340 = vpack.c.b16 %v1164, %v1160
    %v1341 = vpack.c.b16 %v1165, %v1161
    %v1342 = vpack.c.b16 %v1170, %v1166
    %v1343 = vpack.c.b16 %v1171, %v1167
    %v1344 = vpack.c.b16 %v1172, %v1168
    %v1345 = vpack.c.b16 %v1173, %v1169
    %v1346 = vpack.c.b16 %v1178, %v1174
    %v1347 = vpack.c.b16 %v1179, %v1175
    %v1348 = vpack.c.b16 %v1180, %v1176
    %v1349 = vpack.c.b16 %v1181, %v1177
    %v1350 = vpack.c.b16 %v1186, %v1182
    %v1351 = vpack.c.b16 %v1187, %v1183
    %v1352 = vpack.c.b16 %v1188, %v1184
    %v1353 = vpack.c.b16 %v1189, %v1185
    %v1354 = vpack.c.b16 %v1194, %v1190
    %v1355 = vpack.c.b16 %v1195, %v1191
    %v1356 = vpack.c.b16 %v1196, %v1192
    %v1357 = vpack.c.b16 %v1197, %v1193
    %v1358 = vpack.c.b16 %v1202, %v1198
    %v1359 = vpack.c.b16 %v1203, %v1199
    %v1360 = vpack.c.b16 %v1204, %v1200
    %v1361 = vpack.c.b16 %v1205, %v1201
    %v1362 = vpack.c.b16 %v1210, %v1206
    %v1363 = vpack.c.b16 %v1211, %v1207
    %v1364 = vpack.c.b16 %v1212, %v1208
    %v1365 = vpack.c.b16 %v1213, %v1209
    %v1366 = vpack.c.b16 %v1218, %v1214
    %v1367 = vpack.c.b16 %v1219, %v1215
    %v1368 = vpack.c.b16 %v1220, %v1216
    %v1369 = vpack.c.b16 %v1221, %v1217
    %v1370 = vpack.c.b16 %v1226, %v1222
    %v1371 = vpack.c.b16 %v1227, %v1223
    %v1372 = vpack.c.b16 %v1228, %v1224
    %v1373 = vpack.c.b16 %v1229, %v1225
    %v1374 = vpack.c.b16 %v1234, %v1230
    %v1375 = vpack.c.b16 %v1235, %v1231
    %v1376 = vpack.c.b16 %v1236, %v1232
    %v1377 = vpack.c.b16 %v1237, %v1233
    %v1378 = vpack.c.b16 %v1242, %v1238
    %v1379 = vpack.c.b16 %v1243, %v1239
    %v1380 = vpack.c.b16 %v1244, %v1240
    %v1381 = vpack.c.b16 %v1245, %v1241
    %v1382 = vpack.c.b16 %v1250, %v1246
    %v1383 = vpack.c.b16 %v1251, %v1247
    %v1384 = vpack.c.b16 %v1252, %v1248
    %v1385 = vpack.c.b16 %v1253, %v1249
    %v1386 = vpack.c.b16 %v1258, %v1254
    %v1387 = vpack.c.b16 %v1259, %v1255
    %v1388 = vpack.c.b16 %v1260, %v1256
    %v1389 = vpack.c.b16 %v1261, %v1257
    %1518 = vmatprep.subr.bf16.mxu0 %v1263
    %1519 = vmatpush1.bf16.msra.mxu0 %v1262
    %1520 = vmatprep.subr.bf16.mxu0 %v1267
    %1521 = vmatpush1.bf16.msra.mxu0 %v1266
    %1522 = vmatprep.subr.bf16.mxu0 %v1271
    %1523 = vmatpush1.bf16.msra.mxu0 %v1270
    %1524 = vmatprep.subr.bf16.mxu0 %v1275
    %1525 = vmatpush1.bf16.msra.mxu0 %v1274
    %1526 = vmatprep.subr.bf16.mxu0 %v1279
    %1527 = vmatpush1.bf16.msra.mxu0 %v1278
    %1528 = vmatprep.subr.bf16.mxu0 %v1283
    %1529 = vmatpush1.bf16.msra.mxu0 %v1282
    %1530 = vmatprep.subr.bf16.mxu0 %v1287
    %1531 = vmatpush1.bf16.msra.mxu0 %v1286
    %1532 = vmatprep.subr.bf16.mxu0 %v1291
    %1533 = vmatpush1.bf16.msra.mxu0 %v1290
    %1534 = vmatprep.subr.bf16.mxu0 %v1295
    %1535 = vmatpush1.bf16.msra.mxu0 %v1294
    %1536 = vmatprep.subr.bf16.mxu0 %v1299
    %1537 = vmatpush1.bf16.msra.mxu0 %v1298
    %1538 = vmatprep.subr.bf16.mxu0 %v1303
    %1539 = vmatpush1.bf16.msra.mxu0 %v1302
    %1540 = vmatprep.subr.bf16.mxu0 %v1307
    %1541 = vmatpush1.bf16.msra.mxu0 %v1306
    %1542 = vmatprep.subr.bf16.mxu0 %v1311
    %1543 = vmatpush1.bf16.msra.mxu0 %v1310
    %1544 = vmatprep.subr.bf16.mxu0 %v1315
    %1545 = vmatpush1.bf16.msra.mxu0 %v1314
    %1546 = vmatprep.subr.bf16.mxu0 %v1319
    %1547 = vmatpush1.bf16.msra.mxu0 %v1318
    %1548 = vmatprep.subr.bf16.mxu0 %v1323
    %1549 = vmatpush1.bf16.msra.mxu0 %v1322
    %1550 = vmatprep.mubr.bf16.mxu0 %v725
    %1551 = vmatmul.mubr.bf16.gmra.mrb[0].mxu0 %v724
    %v1552 = vpop.f32.mrb[0].mxu0
    %v1553 = vadd.f32 %v861, %v1552
    %v1554 = vpop.f32.mrb[0].mxu0
    %v1555 = vadd.f32 %v865, %v1554
    %v1556 = vpop.f32.mrb[0].mxu0
    %v1557 = vpop.f32.mrb[0].mxu0
    %1558 = vdwg.mxu0
    %1559 = vmatprep.subr.bf16.mxu0 %v1327
    %1560 = vmatpush1.bf16.msra.mxu0 %v1326
    %1561 = vmatprep.subr.bf16.mxu0 %v1331
    %1562 = vmatpush1.bf16.msra.mxu0 %v1330
    %1563 = vmatprep.subr.bf16.mxu0 %v1335
    %1564 = vmatpush1.bf16.msra.mxu0 %v1334
    %1565 = vmatprep.subr.bf16.mxu0 %v1339
    %1566 = vmatpush1.bf16.msra.mxu0 %v1338
    %1567 = vmatprep.subr.bf16.mxu0 %v1343
    %1568 = vmatpush1.bf16.msra.mxu0 %v1342
    %1569 = vmatprep.subr.bf16.mxu0 %v1347
    %1570 = vmatpush1.bf16.msra.mxu0 %v1346
    %1571 = vmatprep.subr.bf16.mxu0 %v1351
    %1572 = vmatpush1.bf16.msra.mxu0 %v1350
    %1573 = vmatprep.subr.bf16.mxu0 %v1355
    %1574 = vmatpush1.bf16.msra.mxu0 %v1354
    %1575 = vmatprep.subr.bf16.mxu0 %v1359
    %1576 = vmatpush1.bf16.msra.mxu0 %v1358
    %1577 = vmatprep.subr.bf16.mxu0 %v1363
    %1578 = vmatpush1.bf16.msra.mxu0 %v1362
    %1579 = vmatprep.subr.bf16.mxu0 %v1367
    %1580 = vmatpush1.bf16.msra.mxu0 %v1366
    %1581 = vmatprep.subr.bf16.mxu0 %v1371
    %1582 = vmatpush1.bf16.msra.mxu0 %v1370
    %1583 = vmatprep.subr.bf16.mxu0 %v1375
    %1584 = vmatpush1.bf16.msra.mxu0 %v1374
    %1585 = vmatprep.subr.bf16.mxu0 %v1379
    %1586 = vmatpush1.bf16.msra.mxu0 %v1378
    %1587 = vmatprep.subr.bf16.mxu0 %v1383
    %1588 = vmatpush1.bf16.msra.mxu0 %v1382
    %1589 = vmatprep.subr.bf16.mxu0 %v1387
    %1590 = vmatpush1.bf16.msra.mxu0 %v1386
    %1591 = vmatprep.mubr.bf16.mxu0 %v727
    %1592 = vmatmul.mubr.bf16.gmra.mrb[0].mxu0 %v726
    %v1593 = vpop.f32.mrb[0].mxu0
    %v1594 = vadd.f32 %v1553, %v1593
    %v1595 = vpop.f32.mrb[0].mxu0
    %v1596 = vadd.f32 %v1555, %v1595
    %v1597 = vpop.f32.mrb[0].mxu0
    %v1598 = vpop.f32.mrb[0].mxu0
    %1599 = vdwg.mxu0
    %1600 = vmatprep.subr.bf16.mxu0 %v1265
    %1601 = vmatpush1.bf16.msra.mxu0 %v1264
    %1602 = vmatprep.subr.bf16.mxu0 %v1269
    %1603 = vmatpush1.bf16.msra.mxu0 %v1268
    %1604 = vmatprep.subr.bf16.mxu0 %v1273
    %1605 = vmatpush1.bf16.msra.mxu0 %v1272
    %1606 = vmatprep.subr.bf16.mxu0 %v1277
    %1607 = vmatpush1.bf16.msra.mxu0 %v1276
    %1608 = vmatprep.subr.bf16.mxu0 %v1281
    %1609 = vmatpush1.bf16.msra.mxu0 %v1280
    %1610 = vmatprep.subr.bf16.mxu0 %v1285
    %1611 = vmatpush1.bf16.msra.mxu0 %v1284
    %1612 = vmatprep.subr.bf16.mxu0 %v1289
    %1613 = vmatpush1.bf16.msra.mxu0 %v1288
    %1614 = vmatprep.subr.bf16.mxu0 %v1293
    %1615 = vmatpush1.bf16.msra.mxu0 %v1292
    %1616 = vmatprep.subr.bf16.mxu0 %v1297
    %1617 = vmatpush1.bf16.msra.mxu0 %v1296
    %1618 = vmatprep.subr.bf16.mxu0 %v1301
    %1619 = vmatpush1.bf16.msra.mxu0 %v1300
    %1620 = vmatprep.subr.bf16.mxu0 %v1305
    %1621 = vmatpush1.bf16.msra.mxu0 %v1304
    %1622 = vmatprep.subr.bf16.mxu0 %v1309
    %1623 = vmatpush1.bf16.msra.mxu0 %v1308
    %1624 = vmatprep.subr.bf16.mxu0 %v1313
    %1625 = vmatpush1.bf16.msra.mxu0 %v1312
    %1626 = vmatprep.subr.bf16.mxu0 %v1317
    %1627 = vmatpush1.bf16.msra.mxu0 %v1316
    %1628 = vmatprep.subr.bf16.mxu0 %v1321
    %1629 = vmatpush1.bf16.msra.mxu0 %v1320
    %1630 = vmatprep.subr.bf16.mxu0 %v1325
    %1631 = vmatpush1.bf16.msra.mxu0 %v1324
    %1632 = vmatprep.mubr.bf16.mxu0 %v725
    %1633 = vmatmul.mubr.bf16.gmra.mrb[0].mxu0 %v724
    %v1634 = vpop.f32.mrb[0].mxu0
    %v1635 = vadd.f32 %v869, %v1634
    %v1636 = vpop.f32.mrb[0].mxu0
    %v1637 = vadd.f32 %v873, %v1636
    %v1638 = vpop.f32.mrb[0].mxu0
    %v1639 = vpop.f32.mrb[0].mxu0
    %1640 = vdwg.mxu0
    %1641 = vmatprep.subr.bf16.mxu0 %v1329
    %1642 = vmatpush1.bf16.msra.mxu0 %v1328
    %1643 = vmatprep.subr.bf16.mxu0 %v1333
    %1644 = vmatpush1.bf16.msra.mxu0 %v1332
    %1645 = vmatprep.subr.bf16.mxu0 %v1337
    %1646 = vmatpush1.bf16.msra.mxu0 %v1336
    %1647 = vmatprep.subr.bf16.mxu0 %v1341
    %1648 = vmatpush1.bf16.msra.mxu0 %v1340
    %1649 = vmatprep.subr.bf16.mxu0 %v1345
    %1650 = vmatpush1.bf16.msra.mxu0 %v1344
    %1651 = vmatprep.subr.bf16.mxu0 %v1349
    %1652 = vmatpush1.bf16.msra.mxu0 %v1348
    %1653 = vmatprep.subr.bf16.mxu0 %v1353
    %1654 = vmatpush1.bf16.msra.mxu0 %v1352
    %1655 = vmatprep.subr.bf16.mxu0 %v1357
    %1656 = vmatpush1.bf16.msra.mxu0 %v1356
    %1657 = vmatprep.subr.bf16.mxu0 %v1361
    %1658 = vmatpush1.bf16.msra.mxu0 %v1360
    %1659 = vmatprep.subr.bf16.mxu0 %v1365
    %1660 = vmatpush1.bf16.msra.mxu0 %v1364
    %1661 = vmatprep.subr.bf16.mxu0 %v1369
    %1662 = vmatpush1.bf16.msra.mxu0 %v1368
    %1663 = vmatprep.subr.bf16.mxu0 %v1373
    %1664 = vmatpush1.bf16.msra.mxu0 %v1372
    %1665 = vmatprep.subr.bf16.mxu0 %v1377
    %1666 = vmatpush1.bf16.msra.mxu0 %v1376
    %1667 = vmatprep.subr.bf16.mxu0 %v1381
    %1668 = vmatpush1.bf16.msra.mxu0 %v1380
    %1669 = vmatprep.subr.bf16.mxu0 %v1385
    %1670 = vmatpush1.bf16.msra.mxu0 %v1384
    %1671 = vmatprep.subr.bf16.mxu0 %v1389
    %1672 = vmatpush1.bf16.msra.mxu0 %v1388
    %1673 = vmatprep.mubr.bf16.mxu0 %v727
    %1674 = vmatmul.mubr.bf16.gmra.mrb[0].mxu0 %v726
    %v1675 = vpop.f32.mrb[0].mxu0
    %v1676 = vadd.f32 %v1635, %v1675
    %v1677 = vpop.f32.mrb[0].mxu0
    %v1678 = vadd.f32 %v1637, %v1677
    %v1679 = vpop.f32.mrb[0].mxu0
    %v1680 = vpop.f32.mrb[0].mxu0
    %1681 = vdwg.mxu0
    %vm1682 = vcmp.gt.f32.partialorder %v1594, 0.0
    %vm1683 = vcmp.gt.f32.partialorder %v1596, 0.0
    %vm1684 = vcmp.gt.f32.partialorder %v1676, 0.0
    %vm1685 = vcmp.gt.f32.partialorder %v1678, 0.0
    %v1686 = vmul.f32 %v1594, 0.2
    %v1687 = vmul.f32 %v1596, 0.2
    %v1688 = vmul.f32 %v1676, 0.2
    %v1689 = vmul.f32 %v1678, 0.2
    %v1690 = vsel %vm1682, %v1594, %v1686
    %v1691 = vsel %vm1683, %v1596, %v1687
    %v1692 = vsel %vm1684, %v1676, %v1688
    %v1693 = vsel %vm1685, %v1678, %v1689
    %v1694 = vpack.c.bf16 %v1690, %v1690
    %v1695 = vpack.c.bf16 %v1691, %v1691
    %v1696 = vpack.c.bf16 %v1692, %v1692
    %v1697 = vpack.c.bf16 %v1693, %v1693
    %v1698 = vld [vmem:[#allocation10] sm:$0xff]
    %v1699 = vld [vmem:[#allocation10 + $0x8] sm:$0xff]
    %v1700 = vld [vmem:[#allocation10 + $0x10] sm:$0xff]
    %v1701 = vld [vmem:[#allocation10 + $0x18] sm:$0xff]
    %v1702 = vld [vmem:[#allocation10 + $0x20] sm:$0xff]
    %v1703 = vld [vmem:[#allocation10 + $0x28] sm:$0xff]
    %v1704 = vld [vmem:[#allocation10 + $0x30] sm:$0xff]
    %v1705 = vld [vmem:[#allocation10 + $0x38] sm:$0xff]
    %v1706 = vld [vmem:[#allocation10 + $0x40] sm:$0xff]
    %v1707 = vld [vmem:[#allocation10 + $0x48] sm:$0xff]
    %v1708 = vld [vmem:[#allocation10 + $0x50] sm:$0xff]
    %v1709 = vld [vmem:[#allocation10 + $0x58] sm:$0xff]
    %v1710 = vld [vmem:[#allocation10 + $0x60] sm:$0xff]
    %v1711 = vld [vmem:[#allocation10 + $0x68] sm:$0xff]
    %v1712 = vld [vmem:[#allocation10 + $0x70] sm:$0xff]
    %v1713 = vld [vmem:[#allocation10 + $0x78] sm:$0xff]
    %v1714 = vld [vmem:[#allocation10 + $0x80] sm:$0xff]
    %v1715 = vld [vmem:[#allocation10 + $0x88] sm:$0xff]
    %v1716 = vld [vmem:[#allocation10 + $0x90] sm:$0xff]
    %v1717 = vld [vmem:[#allocation10 + $0x98] sm:$0xff]
    %v1718 = vld [vmem:[#allocation10 + $0xa0] sm:$0xff]
    %v1719 = vld [vmem:[#allocation10 + $0xa8] sm:$0xff]
    %v1720 = vld [vmem:[#allocation10 + $0xb0] sm:$0xff]
    %v1721 = vld [vmem:[#allocation10 + $0xb8] sm:$0xff]
    %v1722 = vld [vmem:[#allocation10 + $0xc0] sm:$0xff]
    %v1723 = vld [vmem:[#allocation10 + $0xc8] sm:$0xff]
    %v1724 = vld [vmem:[#allocation10 + $0xd0] sm:$0xff]
    %v1725 = vld [vmem:[#allocation10 + $0xd8] sm:$0xff]
    %v1726 = vld [vmem:[#allocation10 + $0xe0] sm:$0xff]
    %v1727 = vld [vmem:[#allocation10 + $0xe8] sm:$0xff]
    %v1728 = vld [vmem:[#allocation10 + $0xf0] sm:$0xff]
    %v1729 = vld [vmem:[#allocation10 + $0xf8] sm:$0xff]
    %v1730 = vld [vmem:[#allocation10 + $0x100] sm:$0xff]
    %v1731 = vld [vmem:[#allocation10 + $0x108] sm:$0xff]
    %v1732 = vld [vmem:[#allocation10 + $0x110] sm:$0xff]
    %v1733 = vld [vmem:[#allocation10 + $0x118] sm:$0xff]
    %v1734 = vld [vmem:[#allocation10 + $0x120] sm:$0xff]
    %v1735 = vld [vmem:[#allocation10 + $0x128] sm:$0xff]
    %v1736 = vld [vmem:[#allocation10 + $0x130] sm:$0xff]
    %v1737 = vld [vmem:[#allocation10 + $0x138] sm:$0xff]
    %v1738 = vld [vmem:[#allocation10 + $0x140] sm:$0xff]
    %v1739 = vld [vmem:[#allocation10 + $0x148] sm:$0xff]
    %v1740 = vld [vmem:[#allocation10 + $0x150] sm:$0xff]
    %v1741 = vld [vmem:[#allocation10 + $0x158] sm:$0xff]
    %v1742 = vld [vmem:[#allocation10 + $0x160] sm:$0xff]
    %v1743 = vld [vmem:[#allocation10 + $0x168] sm:$0xff]
    %v1744 = vld [vmem:[#allocation10 + $0x170] sm:$0xff]
    %v1745 = vld [vmem:[#allocation10 + $0x178] sm:$0xff]
    %v1746 = vld [vmem:[#allocation10 + $0x180] sm:$0xff]
    %v1747 = vld [vmem:[#allocation10 + $0x188] sm:$0xff]
    %v1748 = vld [vmem:[#allocation10 + $0x190] sm:$0xff]
    %v1749 = vld [vmem:[#allocation10 + $0x198] sm:$0xff]
    %v1750 = vld [vmem:[#allocation10 + $0x1a0] sm:$0xff]
    %v1751 = vld [vmem:[#allocation10 + $0x1a8] sm:$0xff]
    %v1752 = vld [vmem:[#allocation10 + $0x1b0] sm:$0xff]
    %v1753 = vld [vmem:[#allocation10 + $0x1b8] sm:$0xff]
    %v1754 = vld [vmem:[#allocation10 + $0x1c0] sm:$0xff]
    %v1755 = vld [vmem:[#allocation10 + $0x1c8] sm:$0xff]
    %v1756 = vld [vmem:[#allocation10 + $0x1d0] sm:$0xff]
    %v1757 = vld [vmem:[#allocation10 + $0x1d8] sm:$0xff]
    %v1758 = vld [vmem:[#allocation10 + $0x1e0] sm:$0xff]
    %v1759 = vld [vmem:[#allocation10 + $0x1e8] sm:$0xff]
    %v1760 = vld [vmem:[#allocation10 + $0x1f0] sm:$0xff]
    %v1761 = vld [vmem:[#allocation10 + $0x1f8] sm:$0xff]
    %v1762 = vld [vmem:[%s7] sm:$0x3]
    %v1764 = vlaneseq
    %v1765 = vshrl.u32 %v1764, 7
    %v1766 = vsub.s32 0, %v1765
    %v1767 = vrot.slane %v1762, %v1766
    %v1768 = vlaneseq
    %v1769 = vshrl.u32 %v1768, 7
    %v1770 = vsub.s32 1, %v1769
    %v1771 = vrot.slane %v1762, %v1770
    %v1838 = vunpack.c.l.b16 %v1698
    %v1839 = vunpack.c.h.b16 %v1698
    %v1840 = vunpack.c.l.b16 %v1699
    %v1841 = vunpack.c.h.b16 %v1699
    %v1842 = vunpack.c.l.b16 %v1700
    %v1843 = vunpack.c.h.b16 %v1700
    %v1844 = vunpack.c.l.b16 %v1701
    %v1845 = vunpack.c.h.b16 %v1701
    %v1846 = vunpack.c.l.b16 %v1702
    %v1847 = vunpack.c.h.b16 %v1702
    %v1848 = vunpack.c.l.b16 %v1703
    %v1849 = vunpack.c.h.b16 %v1703
    %v1850 = vunpack.c.l.b16 %v1704
    %v1851 = vunpack.c.h.b16 %v1704
    %v1852 = vunpack.c.l.b16 %v1705
    %v1853 = vunpack.c.h.b16 %v1705
    %v1854 = vunpack.c.l.b16 %v1706
    %v1855 = vunpack.c.h.b16 %v1706
    %v1856 = vunpack.c.l.b16 %v1707
    %v1857 = vunpack.c.h.b16 %v1707
    %v1858 = vunpack.c.l.b16 %v1708
    %v1859 = vunpack.c.h.b16 %v1708
    %v1860 = vunpack.c.l.b16 %v1709
    %v1861 = vunpack.c.h.b16 %v1709
    %v1862 = vunpack.c.l.b16 %v1710
    %v1863 = vunpack.c.h.b16 %v1710
    %v1864 = vunpack.c.l.b16 %v1711
    %v1865 = vunpack.c.h.b16 %v1711
    %v1866 = vunpack.c.l.b16 %v1712
    %v1867 = vunpack.c.h.b16 %v1712
    %v1868 = vunpack.c.l.b16 %v1713
    %v1869 = vunpack.c.h.b16 %v1713
    %v1870 = vunpack.c.l.b16 %v1714
    %v1871 = vunpack.c.h.b16 %v1714
    %v1872 = vunpack.c.l.b16 %v1715
    %v1873 = vunpack.c.h.b16 %v1715
    %v1874 = vunpack.c.l.b16 %v1716
    %v1875 = vunpack.c.h.b16 %v1716
    %v1876 = vunpack.c.l.b16 %v1717
    %v1877 = vunpack.c.h.b16 %v1717
    %v1878 = vunpack.c.l.b16 %v1718
    %v1879 = vunpack.c.h.b16 %v1718
    %v1880 = vunpack.c.l.b16 %v1719
    %v1881 = vunpack.c.h.b16 %v1719
    %v1882 = vunpack.c.l.b16 %v1720
    %v1883 = vunpack.c.h.b16 %v1720
    %v1884 = vunpack.c.l.b16 %v1721
    %v1885 = vunpack.c.h.b16 %v1721
    %v1886 = vunpack.c.l.b16 %v1722
    %v1887 = vunpack.c.h.b16 %v1722
    %v1888 = vunpack.c.l.b16 %v1723
    %v1889 = vunpack.c.h.b16 %v1723
    %v1890 = vunpack.c.l.b16 %v1724
    %v1891 = vunpack.c.h.b16 %v1724
    %v1892 = vunpack.c.l.b16 %v1725
    %v1893 = vunpack.c.h.b16 %v1725
    %v1894 = vunpack.c.l.b16 %v1726
    %v1895 = vunpack.c.h.b16 %v1726
    %v1896 = vunpack.c.l.b16 %v1727
    %v1897 = vunpack.c.h.b16 %v1727
    %v1898 = vunpack.c.l.b16 %v1728
    %v1899 = vunpack.c.h.b16 %v1728
    %v1900 = vunpack.c.l.b16 %v1729
    %v1901 = vunpack.c.h.b16 %v1729
    %v1902 = vunpack.c.l.b16 %v1730
    %v1903 = vunpack.c.h.b16 %v1730
    %v1904 = vunpack.c.l.b16 %v1731
    %v1905 = vunpack.c.h.b16 %v1731
    %v1906 = vunpack.c.l.b16 %v1732
    %v1907 = vunpack.c.h.b16 %v1732
    %v1908 = vunpack.c.l.b16 %v1733
    %v1909 = vunpack.c.h.b16 %v1733
    %v1910 = vunpack.c.l.b16 %v1734
    %v1911 = vunpack.c.h.b16 %v1734
    %v1912 = vunpack.c.l.b16 %v1735
    %v1913 = vunpack.c.h.b16 %v1735
    %v1914 = vunpack.c.l.b16 %v1736
    %v1915 = vunpack.c.h.b16 %v1736
    %v1916 = vunpack.c.l.b16 %v1737
    %v1917 = vunpack.c.h.b16 %v1737
    %v1918 = vunpack.c.l.b16 %v1738
    %v1919 = vunpack.c.h.b16 %v1738
    %v1920 = vunpack.c.l.b16 %v1739
    %v1921 = vunpack.c.h.b16 %v1739
    %v1922 = vunpack.c.l.b16 %v1740
    %v1923 = vunpack.c.h.b16 %v1740
    %v1924 = vunpack.c.l.b16 %v1741
    %v1925 = vunpack.c.h.b16 %v1741
    %v1926 = vunpack.c.l.b16 %v1742
    %v1927 = vunpack.c.h.b16 %v1742
    %v1928 = vunpack.c.l.b16 %v1743
    %v1929 = vunpack.c.h.b16 %v1743
    %v1930 = vunpack.c.l.b16 %v1744
    %v1931 = vunpack.c.h.b16 %v1744
    %v1932 = vunpack.c.l.b16 %v1745
    %v1933 = vunpack.c.h.b16 %v1745
    %v1934 = vunpack.c.l.b16 %v1746
    %v1935 = vunpack.c.h.b16 %v1746
    %v1936 = vunpack.c.l.b16 %v1747
    %v1937 = vunpack.c.h.b16 %v1747
    %v1938 = vunpack.c.l.b16 %v1748
    %v1939 = vunpack.c.h.b16 %v1748
    %v1940 = vunpack.c.l.b16 %v1749
    %v1941 = vunpack.c.h.b16 %v1749
    %v1942 = vunpack.c.l.b16 %v1750
    %v1943 = vunpack.c.h.b16 %v1750
    %v1944 = vunpack.c.l.b16 %v1751
    %v1945 = vunpack.c.h.b16 %v1751
    %v1946 = vunpack.c.l.b16 %v1752
    %v1947 = vunpack.c.h.b16 %v1752
    %v1948 = vunpack.c.l.b16 %v1753
    %v1949 = vunpack.c.h.b16 %v1753
    %v1950 = vunpack.c.l.b16 %v1754
    %v1951 = vunpack.c.h.b16 %v1754
    %v1952 = vunpack.c.l.b16 %v1755
    %v1953 = vunpack.c.h.b16 %v1755
    %v1954 = vunpack.c.l.b16 %v1756
    %v1955 = vunpack.c.h.b16 %v1756
    %v1956 = vunpack.c.l.b16 %v1757
    %v1957 = vunpack.c.h.b16 %v1757
    %v1958 = vunpack.c.l.b16 %v1758
    %v1959 = vunpack.c.h.b16 %v1758
    %v1960 = vunpack.c.l.b16 %v1759
    %v1961 = vunpack.c.h.b16 %v1759
    %v1962 = vunpack.c.l.b16 %v1760
    %v1963 = vunpack.c.h.b16 %v1760
    %v1964 = vunpack.c.l.b16 %v1761
    %v1965 = vunpack.c.h.b16 %v1761
    %v1966 = vpack.c.b16 %v1840, %v1838
    %v1967 = vpack.c.b16 %v1841, %v1839
    %v1968 = vpack.c.b16 %v1844, %v1842
    %v1969 = vpack.c.b16 %v1845, %v1843
    %v1970 = vpack.c.b16 %v1848, %v1846
    %v1971 = vpack.c.b16 %v1849, %v1847
    %v1972 = vpack.c.b16 %v1852, %v1850
    %v1973 = vpack.c.b16 %v1853, %v1851
    %v1974 = vpack.c.b16 %v1856, %v1854
    %v1975 = vpack.c.b16 %v1857, %v1855
    %v1976 = vpack.c.b16 %v1860, %v1858
    %v1977 = vpack.c.b16 %v1861, %v1859
    %v1978 = vpack.c.b16 %v1864, %v1862
    %v1979 = vpack.c.b16 %v1865, %v1863
    %v1980 = vpack.c.b16 %v1868, %v1866
    %v1981 = vpack.c.b16 %v1869, %v1867
    %v1982 = vpack.c.b16 %v1872, %v1870
    %v1983 = vpack.c.b16 %v1873, %v1871
    %v1984 = vpack.c.b16 %v1876, %v1874
    %v1985 = vpack.c.b16 %v1877, %v1875
    %v1986 = vpack.c.b16 %v1880, %v1878
    %v1987 = vpack.c.b16 %v1881, %v1879
    %v1988 = vpack.c.b16 %v1884, %v1882
    %v1989 = vpack.c.b16 %v1885, %v1883
    %v1990 = vpack.c.b16 %v1888, %v1886
    %v1991 = vpack.c.b16 %v1889, %v1887
    %v1992 = vpack.c.b16 %v1892, %v1890
    %v1993 = vpack.c.b16 %v1893, %v1891
    %v1994 = vpack.c.b16 %v1896, %v1894
    %v1995 = vpack.c.b16 %v1897, %v1895
    %v1996 = vpack.c.b16 %v1900, %v1898
    %v1997 = vpack.c.b16 %v1901, %v1899
    %v1998 = vpack.c.b16 %v1904, %v1902
    %v1999 = vpack.c.b16 %v1905, %v1903
    %v2000 = vpack.c.b16 %v1908, %v1906
    %v2001 = vpack.c.b16 %v1909, %v1907
    %v2002 = vpack.c.b16 %v1912, %v1910
    %v2003 = vpack.c.b16 %v1913, %v1911
    %v2004 = vpack.c.b16 %v1916, %v1914
    %v2005 = vpack.c.b16 %v1917, %v1915
    %v2006 = vpack.c.b16 %v1920, %v1918
    %v2007 = vpack.c.b16 %v1921, %v1919
    %v2008 = vpack.c.b16 %v1924, %v1922
    %v2009 = vpack.c.b16 %v1925, %v1923
    %v2010 = vpack.c.b16 %v1928, %v1926
    %v2011 = vpack.c.b16 %v1929, %v1927
    %v2012 = vpack.c.b16 %v1932, %v1930
    %v2013 = vpack.c.b16 %v1933, %v1931
    %v2014 = vpack.c.b16 %v1936, %v1934
    %v2015 = vpack.c.b16 %v1937, %v1935
    %v2016 = vpack.c.b16 %v1940, %v1938
    %v2017 = vpack.c.b16 %v1941, %v1939
    %v2018 = vpack.c.b16 %v1944, %v1942
    %v2019 = vpack.c.b16 %v1945, %v1943
    %v2020 = vpack.c.b16 %v1948, %v1946
    %v2021 = vpack.c.b16 %v1949, %v1947
    %v2022 = vpack.c.b16 %v1952, %v1950
    %v2023 = vpack.c.b16 %v1953, %v1951
    %v2024 = vpack.c.b16 %v1956, %v1954
    %v2025 = vpack.c.b16 %v1957, %v1955
    %v2026 = vpack.c.b16 %v1960, %v1958
    %v2027 = vpack.c.b16 %v1961, %v1959
    %v2028 = vpack.c.b16 %v1964, %v1962
    %v2029 = vpack.c.b16 %v1965, %v1963
    %2094 = vmatprep.subr.bf16.mxu0 %v1967
    %2095 = vmatpush1.bf16.msra.mxu0 %v1966
    %2096 = vmatprep.subr.bf16.mxu0 %v1969
    %2097 = vmatpush1.bf16.msra.mxu0 %v1968
    %2098 = vmatprep.subr.bf16.mxu0 %v1971
    %2099 = vmatpush1.bf16.msra.mxu0 %v1970
    %2100 = vmatprep.subr.bf16.mxu0 %v1973
    %2101 = vmatpush1.bf16.msra.mxu0 %v1972
    %2102 = vmatprep.subr.bf16.mxu0 %v1975
    %2103 = vmatpush1.bf16.msra.mxu0 %v1974
    %2104 = vmatprep.subr.bf16.mxu0 %v1977
    %2105 = vmatpush1.bf16.msra.mxu0 %v1976
    %2106 = vmatprep.subr.bf16.mxu0 %v1979
    %2107 = vmatpush1.bf16.msra.mxu0 %v1978
    %2108 = vmatprep.subr.bf16.mxu0 %v1981
    %2109 = vmatpush1.bf16.msra.mxu0 %v1980
    %2110 = vmatprep.subr.bf16.mxu0 %v1983
    %2111 = vmatpush1.bf16.msra.mxu0 %v1982
    %2112 = vmatprep.subr.bf16.mxu0 %v1985
    %2113 = vmatpush1.bf16.msra.mxu0 %v1984
    %2114 = vmatprep.subr.bf16.mxu0 %v1987
    %2115 = vmatpush1.bf16.msra.mxu0 %v1986
    %2116 = vmatprep.subr.bf16.mxu0 %v1989
    %2117 = vmatpush1.bf16.msra.mxu0 %v1988
    %2118 = vmatprep.subr.bf16.mxu0 %v1991
    %2119 = vmatpush1.bf16.msra.mxu0 %v1990
    %2120 = vmatprep.subr.bf16.mxu0 %v1993
    %2121 = vmatpush1.bf16.msra.mxu0 %v1992
    %2122 = vmatprep.subr.bf16.mxu0 %v1995
    %2123 = vmatpush1.bf16.msra.mxu0 %v1994
    %2124 = vmatprep.subr.bf16.mxu0 %v1997
    %2125 = vmatpush1.bf16.msra.mxu0 %v1996
    %2126 = vmatprep.mubr.bf16.mxu0 %v1695
    %2127 = vmatmul.mubr.bf16.gmra.mrb[0].mxu0 %v1694
    %v2128 = vpop.f32.mrb[0].mxu0
    %v2129 = vadd.f32 %v1767, %v2128
    %v2130 = vpop.f32.mrb[0].mxu0
    %v2131 = vadd.f32 %v1771, %v2130
    %v2132 = vpop.f32.mrb[0].mxu0
    %v2133 = vpop.f32.mrb[0].mxu0
    %2134 = vdwg.mxu0
    %2135 = vmatprep.subr.bf16.mxu0 %v1999
    %2136 = vmatpush1.bf16.msra.mxu0 %v1998
    %2137 = vmatprep.subr.bf16.mxu0 %v2001
    %2138 = vmatpush1.bf16.msra.mxu0 %v2000
    %2139 = vmatprep.subr.bf16.mxu0 %v2003
    %2140 = vmatpush1.bf16.msra.mxu0 %v2002
    %2141 = vmatprep.subr.bf16.mxu0 %v2005
    %2142 = vmatpush1.bf16.msra.mxu0 %v2004
    %2143 = vmatprep.subr.bf16.mxu0 %v2007
    %2144 = vmatpush1.bf16.msra.mxu0 %v2006
    %2145 = vmatprep.subr.bf16.mxu0 %v2009
    %2146 = vmatpush1.bf16.msra.mxu0 %v2008
    %2147 = vmatprep.subr.bf16.mxu0 %v2011
    %2148 = vmatpush1.bf16.msra.mxu0 %v2010
    %2149 = vmatprep.subr.bf16.mxu0 %v2013
    %2150 = vmatpush1.bf16.msra.mxu0 %v2012
    %2151 = vmatprep.subr.bf16.mxu0 %v2015
    %2152 = vmatpush1.bf16.msra.mxu0 %v2014
    %2153 = vmatprep.subr.bf16.mxu0 %v2017
    %2154 = vmatpush1.bf16.msra.mxu0 %v2016
    %2155 = vmatprep.subr.bf16.mxu0 %v2019
    %2156 = vmatpush1.bf16.msra.mxu0 %v2018
    %2157 = vmatprep.subr.bf16.mxu0 %v2021
    %2158 = vmatpush1.bf16.msra.mxu0 %v2020
    %2159 = vmatprep.subr.bf16.mxu0 %v2023
    %2160 = vmatpush1.bf16.msra.mxu0 %v2022
    %2161 = vmatprep.subr.bf16.mxu0 %v2025
    %2162 = vmatpush1.bf16.msra.mxu0 %v2024
    %2163 = vmatprep.subr.bf16.mxu0 %v2027
    %2164 = vmatpush1.bf16.msra.mxu0 %v2026
    %2165 = vmatprep.subr.bf16.mxu0 %v2029
    %2166 = vmatpush1.bf16.msra.mxu0 %v2028
    %2167 = vmatprep.mubr.bf16.mxu0 %v1697
    %2168 = vmatmul.mubr.bf16.gmra.mrb[0].mxu0 %v1696
    %v2169 = vpop.f32.mrb[0].mxu0
    %v2170 = vadd.f32 %v2129, %v2169
    %v2171 = vpop.f32.mrb[0].mxu0
    %v2172 = vadd.f32 %v2131, %v2171
    %v2173 = vpop.f32.mrb[0].mxu0
    %v2174 = vpop.f32.mrb[0].mxu0
    %2175 = vdwg.mxu0
    %vm2176 = vcmp.gt.f32.partialorder %v2170, 0.0
    %vm2177 = vcmp.gt.f32.partialorder %v2172, 0.0
    %v2178 = vmul.f32 %v2170, 0.2
    %v2179 = vmul.f32 %v2172, 0.2
    %v2180 = vsel %vm2176, %v2170, %v2178
    %v2181 = vsel %vm2177, %v2172, %v2179
    %v2182 = vpack.c.bf16 %v2180, %v2180
    %v2183 = vpack.c.bf16 %v2181, %v2181
    %v2184 = vld [vmem:[#allocation11] sm:$0xf]
    %v2185 = vld [vmem:[#allocation11 + $0x4] sm:$0xf]
    %v2186 = vld [vmem:[#allocation11 + $0x8] sm:$0xf]
    %v2187 = vld [vmem:[#allocation11 + $0xc] sm:$0xf]
    %v2188 = vld [vmem:[#allocation11 + $0x10] sm:$0xf]
    %v2189 = vld [vmem:[#allocation11 + $0x14] sm:$0xf]
    %v2190 = vld [vmem:[#allocation11 + $0x18] sm:$0xf]
    %v2191 = vld [vmem:[#allocation11 + $0x1c] sm:$0xf]
    %v2192 = vld [vmem:[#allocation11 + $0x20] sm:$0xf]
    %v2193 = vld [vmem:[#allocation11 + $0x24] sm:$0xf]
    %v2194 = vld [vmem:[#allocation11 + $0x28] sm:$0xf]
    %v2195 = vld [vmem:[#allocation11 + $0x2c] sm:$0xf]
    %v2196 = vld [vmem:[#allocation11 + $0x30] sm:$0xf]
    %v2197 = vld [vmem:[#allocation11 + $0x34] sm:$0xf]
    %v2198 = vld [vmem:[#allocation11 + $0x38] sm:$0xf]
    %v2199 = vld [vmem:[#allocation11 + $0x3c] sm:$0xf]
    %v2200 = vld [vmem:[#allocation11 + $0x40] sm:$0xf]
    %v2201 = vld [vmem:[#allocation11 + $0x44] sm:$0xf]
    %v2202 = vld [vmem:[#allocation11 + $0x48] sm:$0xf]
    %v2203 = vld [vmem:[#allocation11 + $0x4c] sm:$0xf]
    %v2204 = vld [vmem:[#allocation11 + $0x50] sm:$0xf]
    %v2205 = vld [vmem:[#allocation11 + $0x54] sm:$0xf]
    %v2206 = vld [vmem:[#allocation11 + $0x58] sm:$0xf]
    %v2207 = vld [vmem:[#allocation11 + $0x5c] sm:$0xf]
    %v2208 = vld [vmem:[#allocation11 + $0x60] sm:$0xf]
    %v2209 = vld [vmem:[#allocation11 + $0x64] sm:$0xf]
    %v2210 = vld [vmem:[#allocation11 + $0x68] sm:$0xf]
    %v2211 = vld [vmem:[#allocation11 + $0x6c] sm:$0xf]
    %v2212 = vld [vmem:[#allocation11 + $0x70] sm:$0xf]
    %v2213 = vld [vmem:[#allocation11 + $0x74] sm:$0xf]
    %v2214 = vld [vmem:[#allocation11 + $0x78] sm:$0xf]
    %v2215 = vld [vmem:[#allocation11 + $0x7c] sm:$0xf]
    %v2216 = vld [vmem:[%s9] sm:$0x1]
    %v2218 = vlaneseq
    %v2219 = vshrl.u32 %v2218, 7
    %v2220 = vsub.s32 0, %v2219
    %v2221 = vrot.slane %v2216, %v2220
    %v2255 = vunpack.c.l.b16 %v2184
    %v2256 = vunpack.c.l.b16 %v2185
    %v2257 = vunpack.c.l.b16 %v2186
    %v2258 = vunpack.c.l.b16 %v2187
    %v2259 = vunpack.c.l.b16 %v2188
    %v2260 = vunpack.c.l.b16 %v2189
    %v2261 = vunpack.c.l.b16 %v2190
    %v2262 = vunpack.c.l.b16 %v2191
    %v2263 = vunpack.c.l.b16 %v2192
    %v2264 = vunpack.c.l.b16 %v2193
    %v2265 = vunpack.c.l.b16 %v2194
    %v2266 = vunpack.c.l.b16 %v2195
    %v2267 = vunpack.c.l.b16 %v2196
    %v2268 = vunpack.c.l.b16 %v2197
    %v2269 = vunpack.c.l.b16 %v2198
    %v2270 = vunpack.c.l.b16 %v2199
    %v2271 = vunpack.c.l.b16 %v2200
    %v2272 = vunpack.c.l.b16 %v2201
    %v2273 = vunpack.c.l.b16 %v2202
    %v2274 = vunpack.c.l.b16 %v2203
    %v2275 = vunpack.c.l.b16 %v2204
    %v2276 = vunpack.c.l.b16 %v2205
    %v2277 = vunpack.c.l.b16 %v2206
    %v2278 = vunpack.c.l.b16 %v2207
    %v2279 = vunpack.c.l.b16 %v2208
    %v2280 = vunpack.c.l.b16 %v2209
    %v2281 = vunpack.c.l.b16 %v2210
    %v2282 = vunpack.c.l.b16 %v2211
    %v2283 = vunpack.c.l.b16 %v2212
    %v2284 = vunpack.c.l.b16 %v2213
    %v2285 = vunpack.c.l.b16 %v2214
    %v2286 = vunpack.c.l.b16 %v2215
    %v2287 = vpack.c.b16 %v2256, %v2255
    %v2288 = vpack.c.b16 %v2258, %v2257
    %v2289 = vpack.c.b16 %v2260, %v2259
    %v2290 = vpack.c.b16 %v2262, %v2261
    %v2291 = vpack.c.b16 %v2264, %v2263
    %v2292 = vpack.c.b16 %v2266, %v2265
    %v2293 = vpack.c.b16 %v2268, %v2267
    %v2294 = vpack.c.b16 %v2270, %v2269
    %v2295 = vpack.c.b16 %v2272, %v2271
    %v2296 = vpack.c.b16 %v2274, %v2273
    %v2297 = vpack.c.b16 %v2276, %v2275
    %v2298 = vpack.c.b16 %v2278, %v2277
    %v2299 = vpack.c.b16 %v2280, %v2279
    %v2300 = vpack.c.b16 %v2282, %v2281
    %v2301 = vpack.c.b16 %v2284, %v2283
    %v2302 = vpack.c.b16 %v2286, %v2285
    %2319 = vmatprep.subr.bf16.mxu0 0
    %2320 = vmatpush1.bf16.msra.mxu0 %v2287
    %2321 = vmatprep.subr.bf16.mxu0 0
    %2322 = vmatpush1.bf16.msra.mxu0 %v2288
    %2323 = vmatprep.subr.bf16.mxu0 0
    %2324 = vmatpush1.bf16.msra.mxu0 %v2289
    %2325 = vmatprep.subr.bf16.mxu0 0
    %2326 = vmatpush1.bf16.msra.mxu0 %v2290
    %2327 = vmatprep.subr.bf16.mxu0 0
    %2328 = vmatpush1.bf16.msra.mxu0 %v2291
    %2329 = vmatprep.subr.bf16.mxu0 0
    %2330 = vmatpush1.bf16.msra.mxu0 %v2292
    %2331 = vmatprep.subr.bf16.mxu0 0
    %2332 = vmatpush1.bf16.msra.mxu0 %v2293
    %2333 = vmatprep.subr.bf16.mxu0 0
    %2334 = vmatpush1.bf16.msra.mxu0 %v2294
    %2335 = vmatprep.subr.bf16.mxu0 0
    %2336 = vmatpush1.bf16.msra.mxu0 %v2295
    %2337 = vmatprep.subr.bf16.mxu0 0
    %2338 = vmatpush1.bf16.msra.mxu0 %v2296
    %2339 = vmatprep.subr.bf16.mxu0 0
    %2340 = vmatpush1.bf16.msra.mxu0 %v2297
    %2341 = vmatprep.subr.bf16.mxu0 0
    %2342 = vmatpush1.bf16.msra.mxu0 %v2298
    %2343 = vmatprep.subr.bf16.mxu0 0
    %2344 = vmatpush1.bf16.msra.mxu0 %v2299
    %2345 = vmatprep.subr.bf16.mxu0 0
    %2346 = vmatpush1.bf16.msra.mxu0 %v2300
    %2347 = vmatprep.subr.bf16.mxu0 0
    %2348 = vmatpush1.bf16.msra.mxu0 %v2301
    %2349 = vmatprep.subr.bf16.mxu0 0
    %2350 = vmatpush1.bf16.msra.mxu0 %v2302
    %2351 = vmatprep.mubr.bf16.mxu0 %v2183
    %2352 = vmatmul.mubr.bf16.gmra.mrb[0].mxu0 %v2182
    %v2353 = vpop.f32.mrb[0].mxu0
    %v2354 = vadd.f32 %v2221, %v2353
    %v2355 = vpop.f32.mrb[0].mxu0
    %v2356 = vpop.f32.mrb[0].mxu0
    %v2357 = vpop.f32.mrb[0].mxu0
    %2358 = vdwg.mxu0
    %v2359 = vld [vmem:[#allocation13] sm:$0xf]
    %v2360 = vld [vmem:[#allocation13 + $0x4] sm:$0xf]
    %v2361 = vld [vmem:[#allocation13 + $0x8] sm:$0xf]
    %v2362 = vld [vmem:[#allocation13 + $0xc] sm:$0xf]
    %v2363 = vld [vmem:[#allocation13 + $0x10] sm:$0xf]
    %v2364 = vld [vmem:[#allocation13 + $0x14] sm:$0xf]
    %v2365 = vld [vmem:[#allocation13 + $0x18] sm:$0xf]
    %v2366 = vld [vmem:[#allocation13 + $0x1c] sm:$0xf]
    %v2367 = vld [vmem:[#allocation13 + $0x20] sm:$0xf]
    %v2368 = vld [vmem:[#allocation13 + $0x24] sm:$0xf]
    %v2369 = vld [vmem:[#allocation13 + $0x28] sm:$0xf]
    %v2370 = vld [vmem:[#allocation13 + $0x2c] sm:$0xf]
    %v2371 = vld [vmem:[#allocation13 + $0x30] sm:$0xf]
    %v2372 = vld [vmem:[#allocation13 + $0x34] sm:$0xf]
    %v2373 = vld [vmem:[#allocation13 + $0x38] sm:$0xf]
    %v2374 = vld [vmem:[#allocation13 + $0x3c] sm:$0xf]
    %v2375 = vld [vmem:[#allocation13 + $0x40] sm:$0xf]
    %v2376 = vld [vmem:[#allocation13 + $0x44] sm:$0xf]
    %v2377 = vld [vmem:[#allocation13 + $0x48] sm:$0xf]
    %v2378 = vld [vmem:[#allocation13 + $0x4c] sm:$0xf]
    %v2379 = vld [vmem:[#allocation13 + $0x50] sm:$0xf]
    %v2380 = vld [vmem:[#allocation13 + $0x54] sm:$0xf]
    %v2381 = vld [vmem:[#allocation13 + $0x58] sm:$0xf]
    %v2382 = vld [vmem:[#allocation13 + $0x5c] sm:$0xf]
    %v2383 = vld [vmem:[#allocation13 + $0x60] sm:$0xf]
    %v2384 = vld [vmem:[#allocation13 + $0x64] sm:$0xf]
    %v2385 = vld [vmem:[#allocation13 + $0x68] sm:$0xf]
    %v2386 = vld [vmem:[#allocation13 + $0x6c] sm:$0xf]
    %v2387 = vld [vmem:[#allocation13 + $0x70] sm:$0xf]
    %v2388 = vld [vmem:[#allocation13 + $0x74] sm:$0xf]
    %v2389 = vld [vmem:[#allocation13 + $0x78] sm:$0xf]
    %v2390 = vld [vmem:[#allocation13 + $0x7c] sm:$0xf]
    %v2391 = vld [vmem:[%s11] sm:$0x1]
    %v2393 = vlaneseq
    %v2394 = vshrl.u32 %v2393, 7
    %v2395 = vsub.s32 0, %v2394
    %v2396 = vrot.slane %v2391, %v2395
    %v2430 = vunpack.c.l.b16 %v2359
    %v2431 = vunpack.c.l.b16 %v2360
    %v2432 = vunpack.c.l.b16 %v2361
    %v2433 = vunpack.c.l.b16 %v2362
    %v2434 = vunpack.c.l.b16 %v2363
    %v2435 = vunpack.c.l.b16 %v2364
    %v2436 = vunpack.c.l.b16 %v2365
    %v2437 = vunpack.c.l.b16 %v2366
    %v2438 = vunpack.c.l.b16 %v2367
    %v2439 = vunpack.c.l.b16 %v2368
    %v2440 = vunpack.c.l.b16 %v2369
    %v2441 = vunpack.c.l.b16 %v2370
    %v2442 = vunpack.c.l.b16 %v2371
    %v2443 = vunpack.c.l.b16 %v2372
    %v2444 = vunpack.c.l.b16 %v2373
    %v2445 = vunpack.c.l.b16 %v2374
    %v2446 = vunpack.c.l.b16 %v2375
    %v2447 = vunpack.c.l.b16 %v2376
    %v2448 = vunpack.c.l.b16 %v2377
    %v2449 = vunpack.c.l.b16 %v2378
    %v2450 = vunpack.c.l.b16 %v2379
    %v2451 = vunpack.c.l.b16 %v2380
    %v2452 = vunpack.c.l.b16 %v2381
    %v2453 = vunpack.c.l.b16 %v2382
    %v2454 = vunpack.c.l.b16 %v2383
    %v2455 = vunpack.c.l.b16 %v2384
    %v2456 = vunpack.c.l.b16 %v2385
    %v2457 = vunpack.c.l.b16 %v2386
    %v2458 = vunpack.c.l.b16 %v2387
    %v2459 = vunpack.c.l.b16 %v2388
    %v2460 = vunpack.c.l.b16 %v2389
    %v2461 = vunpack.c.l.b16 %v2390
    %v2462 = vpack.c.b16 %v2431, %v2430
    %v2463 = vpack.c.b16 %v2433, %v2432
    %v2464 = vpack.c.b16 %v2435, %v2434
    %v2465 = vpack.c.b16 %v2437, %v2436
    %v2466 = vpack.c.b16 %v2439, %v2438
    %v2467 = vpack.c.b16 %v2441, %v2440
    %v2468 = vpack.c.b16 %v2443, %v2442
    %v2469 = vpack.c.b16 %v2445, %v2444
    %v2470 = vpack.c.b16 %v2447, %v2446
    %v2471 = vpack.c.b16 %v2449, %v2448
    %v2472 = vpack.c.b16 %v2451, %v2450
    %v2473 = vpack.c.b16 %v2453, %v2452
    %v2474 = vpack.c.b16 %v2455, %v2454
    %v2475 = vpack.c.b16 %v2457, %v2456
    %v2476 = vpack.c.b16 %v2459, %v2458
    %v2477 = vpack.c.b16 %v2461, %v2460
    %2494 = vmatprep.subr.bf16.mxu0 0
    %2495 = vmatpush1.bf16.msra.mxu0 %v2462
    %2496 = vmatprep.subr.bf16.mxu0 0
    %2497 = vmatpush1.bf16.msra.mxu0 %v2463
    %2498 = vmatprep.subr.bf16.mxu0 0
    %2499 = vmatpush1.bf16.msra.mxu0 %v2464
    %2500 = vmatprep.subr.bf16.mxu0 0
    %2501 = vmatpush1.bf16.msra.mxu0 %v2465
    %2502 = vmatprep.subr.bf16.mxu0 0
    %2503 = vmatpush1.bf16.msra.mxu0 %v2466
    %2504 = vmatprep.subr.bf16.mxu0 0
    %2505 = vmatpush1.bf16.msra.mxu0 %v2467
    %2506 = vmatprep.subr.bf16.mxu0 0
    %2507 = vmatpush1.bf16.msra.mxu0 %v2468
    %2508 = vmatprep.subr.bf16.mxu0 0
    %2509 = vmatpush1.bf16.msra.mxu0 %v2469
    %2510 = vmatprep.subr.bf16.mxu0 0
    %2511 = vmatpush1.bf16.msra.mxu0 %v2470
    %2512 = vmatprep.subr.bf16.mxu0 0
    %2513 = vmatpush1.bf16.msra.mxu0 %v2471
    %2514 = vmatprep.subr.bf16.mxu0 0
    %2515 = vmatpush1.bf16.msra.mxu0 %v2472
    %2516 = vmatprep.subr.bf16.mxu0 0
    %2517 = vmatpush1.bf16.msra.mxu0 %v2473
    %2518 = vmatprep.subr.bf16.mxu0 0
    %2519 = vmatpush1.bf16.msra.mxu0 %v2474
    %2520 = vmatprep.subr.bf16.mxu0 0
    %2521 = vmatpush1.bf16.msra.mxu0 %v2475
    %2522 = vmatprep.subr.bf16.mxu0 0
    %2523 = vmatpush1.bf16.msra.mxu0 %v2476
    %2524 = vmatprep.subr.bf16.mxu0 0
    %2525 = vmatpush1.bf16.msra.mxu0 %v2477
    %2526 = vmatprep.mubr.bf16.mxu0 %v2183
    %2527 = vmatmul.mubr.bf16.gmra.mrb[0].mxu0 %v2182
    %v2528 = vpop.f32.mrb[0].mxu0
    %v2529 = vadd.f32 %v2396, %v2528
    %v2530 = vpop.f32.mrb[0].mxu0
    %v2531 = vpop.f32.mrb[0].mxu0
    %v2532 = vpop.f32.mrb[0].mxu0
    %2533 = vdwg.mxu0
    %2534 = vst [vmem:[#allocation20] sm:$0xff] %v2354
    %2535 = vst [vmem:[#allocation21] sm:$0xff] %v2529
    %v2536 = vld [vmem:[#allocation5] sm:$0xff]
    %v2537 = vmul.f32 %v2529, 0.5
    %v2538 = vmul.f32 %v2537, 1.442695
    %v2539 = vpow.pop %v2538
    %v2540 = vmul.f32 %v2536, %v2539
    %v2541 = vadd.f32 %v2354, %v2540
    %v2542 = vpack.c.bf16 %v2541, %v2541
    %v2543 = vld [vmem:[#allocation14] sm:$0xff]
    %v2544 = vld [vmem:[#allocation14 + $0x8] sm:$0xff]
    %v2545 = vld [vmem:[#allocation14 + $0x10] sm:$0xff]
    %v2546 = vld [vmem:[#allocation14 + $0x18] sm:$0xff]
    %v2547 = vld [vmem:[#allocation14 + $0x20] sm:$0xff]
    %v2548 = vld [vmem:[#allocation14 + $0x28] sm:$0xff]
    %v2549 = vld [vmem:[#allocation14 + $0x30] sm:$0xff]
    %v2550 = vld [vmem:[#allocation14 + $0x38] sm:$0xff]
    %v2551 = vld [vmem:[#allocation14 + $0x40] sm:$0xff]
    %v2552 = vld [vmem:[#allocation14 + $0x48] sm:$0xff]
    %v2553 = vld [vmem:[#allocation14 + $0x50] sm:$0xff]
    %v2554 = vld [vmem:[#allocation14 + $0x58] sm:$0xff]
    %v2555 = vld [vmem:[#allocation14 + $0x60] sm:$0xff]
    %v2556 = vld [vmem:[#allocation14 + $0x68] sm:$0xff]
    %v2557 = vld [vmem:[#allocation14 + $0x70] sm:$0xff]
    %v2558 = vld [vmem:[#allocation14 + $0x78] sm:$0xff]
    %v2559 = vld [vmem:[%s13] sm:$0x3]
    %v2561 = vlaneseq
    %v2562 = vshrl.u32 %v2561, 7
    %v2563 = vsub.s32 0, %v2562
    %v2564 = vrot.slane %v2559, %v2563
    %v2565 = vlaneseq
    %v2566 = vshrl.u32 %v2565, 7
    %v2567 = vsub.s32 1, %v2566
    %v2568 = vrot.slane %v2559, %v2567
    %v2587 = vunpack.c.l.b16 %v2543
    %v2588 = vunpack.c.h.b16 %v2543
    %v2589 = vunpack.c.l.b16 %v2544
    %v2590 = vunpack.c.h.b16 %v2544
    %v2591 = vunpack.c.l.b16 %v2545
    %v2592 = vunpack.c.h.b16 %v2545
    %v2593 = vunpack.c.l.b16 %v2546
    %v2594 = vunpack.c.h.b16 %v2546
    %v2595 = vunpack.c.l.b16 %v2547
    %v2596 = vunpack.c.h.b16 %v2547
    %v2597 = vunpack.c.l.b16 %v2548
    %v2598 = vunpack.c.h.b16 %v2548
    %v2599 = vunpack.c.l.b16 %v2549
    %v2600 = vunpack.c.h.b16 %v2549
    %v2601 = vunpack.c.l.b16 %v2550
    %v2602 = vunpack.c.h.b16 %v2550
    %v2603 = vunpack.c.l.b16 %v2551
    %v2604 = vunpack.c.h.b16 %v2551
    %v2605 = vunpack.c.l.b16 %v2552
    %v2606 = vunpack.c.h.b16 %v2552
    %v2607 = vunpack.c.l.b16 %v2553
    %v2608 = vunpack.c.h.b16 %v2553
    %v2609 = vunpack.c.l.b16 %v2554
    %v2610 = vunpack.c.h.b16 %v2554
    %v2611 = vunpack.c.l.b16 %v2555
    %v2612 = vunpack.c.h.b16 %v2555
    %v2613 = vunpack.c.l.b16 %v2556
    %v2614 = vunpack.c.h.b16 %v2556
    %v2615 = vunpack.c.l.b16 %v2557
    %v2616 = vunpack.c.h.b16 %v2557
    %v2617 = vunpack.c.l.b16 %v2558
    %v2618 = vunpack.c.h.b16 %v2558
    %v2619 = vpack.c.b16 %v2589, %v2587
    %v2620 = vpack.c.b16 %v2590, %v2588
    %v2621 = vpack.c.b16 %v2593, %v2591
    %v2622 = vpack.c.b16 %v2594, %v2592
    %v2623 = vpack.c.b16 %v2597, %v2595
    %v2624 = vpack.c.b16 %v2598, %v2596
    %v2625 = vpack.c.b16 %v2601, %v2599
    %v2626 = vpack.c.b16 %v2602, %v2600
    %v2627 = vpack.c.b16 %v2605, %v2603
    %v2628 = vpack.c.b16 %v2606, %v2604
    %v2629 = vpack.c.b16 %v2609, %v2607
    %v2630 = vpack.c.b16 %v2610, %v2608
    %v2631 = vpack.c.b16 %v2613, %v2611
    %v2632 = vpack.c.b16 %v2614, %v2612
    %v2633 = vpack.c.b16 %v2617, %v2615
    %v2634 = vpack.c.b16 %v2618, %v2616
    %2651 = vmatprep.subr.bf16.mxu0 %v2620
    %2652 = vmatpush1.bf16.msra.mxu0 %v2619
    %2653 = vmatprep.subr.bf16.mxu0 %v2622
    %2654 = vmatpush1.bf16.msra.mxu0 %v2621
    %2655 = vmatprep.subr.bf16.mxu0 %v2624
    %2656 = vmatpush1.bf16.msra.mxu0 %v2623
    %2657 = vmatprep.subr.bf16.mxu0 %v2626
    %2658 = vmatpush1.bf16.msra.mxu0 %v2625
    %2659 = vmatprep.subr.bf16.mxu0 %v2628
    %2660 = vmatpush1.bf16.msra.mxu0 %v2627
    %2661 = vmatprep.subr.bf16.mxu0 %v2630
    %2662 = vmatpush1.bf16.msra.mxu0 %v2629
    %2663 = vmatprep.subr.bf16.mxu0 %v2632
    %2664 = vmatpush1.bf16.msra.mxu0 %v2631
    %2665 = vmatprep.subr.bf16.mxu0 %v2634
    %2666 = vmatpush1.bf16.msra.mxu0 %v2633
    %2667 = vmatprep.subr.bf16.mxu0 0
    %2668 = vmatpush1.bf16.msra.mxu0 0
    %2669 = vmatprep.subr.bf16.mxu0 0
    %2670 = vmatpush1.bf16.msra.mxu0 0
    %2671 = vmatprep.subr.bf16.mxu0 0
    %2672 = vmatpush1.bf16.msra.mxu0 0
    %2673 = vmatprep.subr.bf16.mxu0 0
    %2674 = vmatpush1.bf16.msra.mxu0 0
    %2675 = vmatprep.subr.bf16.mxu0 0
    %2676 = vmatpush1.bf16.msra.mxu0 0
    %2677 = vmatprep.subr.bf16.mxu0 0
    %2678 = vmatpush1.bf16.msra.mxu0 0
    %2679 = vmatprep.subr.bf16.mxu0 0
    %2680 = vmatpush1.bf16.msra.mxu0 0
    %2681 = vmatprep.subr.bf16.mxu0 0
    %2682 = vmatpush1.bf16.msra.mxu0 0
    %2683 = vmatprep.mubr.bf16.mxu0 0
    %2684 = vmatmul.mubr.bf16.gmra.mrb[0].mxu0 %v2542
    %v2685 = vpop.f32.mrb[0].mxu0
    %v2686 = vadd.f32 %v2564, %v2685
    %v2687 = vpop.f32.mrb[0].mxu0
    %v2688 = vadd.f32 %v2568, %v2687
    %v2689 = vpop.f32.mrb[0].mxu0
    %v2690 = vpop.f32.mrb[0].mxu0
    %2691 = vdwg.mxu0
    %vm2692 = vcmp.gt.f32.partialorder %v2686, 0.0
    %vm2693 = vcmp.gt.f32.partialorder %v2688, 0.0
    %v2694 = vmul.f32 %v2686, 0.2
    %v2695 = vmul.f32 %v2688, 0.2
    %v2696 = vsel %vm2692, %v2686, %v2694
    %v2697 = vsel %vm2693, %v2688, %v2695
    %v2698 = vpack.c.bf16 %v2696, %v2696
    %v2699 = vpack.c.bf16 %v2697, %v2697
    %v2700 = vld [vmem:[#allocation16] sm:$0xff]
    %v2701 = vld [vmem:[#allocation16 + $0x8] sm:$0xff]
    %v2702 = vld [vmem:[#allocation16 + $0x10] sm:$0xff]
    %v2703 = vld [vmem:[#allocation16 + $0x18] sm:$0xff]
    %v2704 = vld [vmem:[#allocation16 + $0x20] sm:$0xff]
    %v2705 = vld [vmem:[#allocation16 + $0x28] sm:$0xff]
    %v2706 = vld [vmem:[#allocation16 + $0x30] sm:$0xff]
    %v2707 = vld [vmem:[#allocation16 + $0x38] sm:$0xff]
    %v2708 = vld [vmem:[#allocation16 + $0x40] sm:$0xff]
    %v2709 = vld [vmem:[#allocation16 + $0x48] sm:$0xff]
    %v2710 = vld [vmem:[#allocation16 + $0x50] sm:$0xff]
    %v2711 = vld [vmem:[#allocation16 + $0x58] sm:$0xff]
    %v2712 = vld [vmem:[#allocation16 + $0x60] sm:$0xff]
    %v2713 = vld [vmem:[#allocation16 + $0x68] sm:$0xff]
    %v2714 = vld [vmem:[#allocation16 + $0x70] sm:$0xff]
    %v2715 = vld [vmem:[#allocation16 + $0x78] sm:$0xff]
    %v2716 = vld [vmem:[#allocation16 + $0x80] sm:$0xff]
    %v2717 = vld [vmem:[#allocation16 + $0x88] sm:$0xff]
    %v2718 = vld [vmem:[#allocation16 + $0x90] sm:$0xff]
    %v2719 = vld [vmem:[#allocation16 + $0x98] sm:$0xff]
    %v2720 = vld [vmem:[#allocation16 + $0xa0] sm:$0xff]
    %v2721 = vld [vmem:[#allocation16 + $0xa8] sm:$0xff]
    %v2722 = vld [vmem:[#allocation16 + $0xb0] sm:$0xff]
    %v2723 = vld [vmem:[#allocation16 + $0xb8] sm:$0xff]
    %v2724 = vld [vmem:[#allocation16 + $0xc0] sm:$0xff]
    %v2725 = vld [vmem:[#allocation16 + $0xc8] sm:$0xff]
    %v2726 = vld [vmem:[#allocation16 + $0xd0] sm:$0xff]
    %v2727 = vld [vmem:[#allocation16 + $0xd8] sm:$0xff]
    %v2728 = vld [vmem:[#allocation16 + $0xe0] sm:$0xff]
    %v2729 = vld [vmem:[#allocation16 + $0xe8] sm:$0xff]
    %v2730 = vld [vmem:[#allocation16 + $0xf0] sm:$0xff]
    %v2731 = vld [vmem:[#allocation16 + $0xf8] sm:$0xff]
    %v2732 = vld [vmem:[#allocation16 + $0x100] sm:$0xff]
    %v2733 = vld [vmem:[#allocation16 + $0x108] sm:$0xff]
    %v2734 = vld [vmem:[#allocation16 + $0x110] sm:$0xff]
    %v2735 = vld [vmem:[#allocation16 + $0x118] sm:$0xff]
    %v2736 = vld [vmem:[#allocation16 + $0x120] sm:$0xff]
    %v2737 = vld [vmem:[#allocation16 + $0x128] sm:$0xff]
    %v2738 = vld [vmem:[#allocation16 + $0x130] sm:$0xff]
    %v2739 = vld [vmem:[#allocation16 + $0x138] sm:$0xff]
    %v2740 = vld [vmem:[#allocation16 + $0x140] sm:$0xff]
    %v2741 = vld [vmem:[#allocation16 + $0x148] sm:$0xff]
    %v2742 = vld [vmem:[#allocation16 + $0x150] sm:$0xff]
    %v2743 = vld [vmem:[#allocation16 + $0x158] sm:$0xff]
    %v2744 = vld [vmem:[#allocation16 + $0x160] sm:$0xff]
    %v2745 = vld [vmem:[#allocation16 + $0x168] sm:$0xff]
    %v2746 = vld [vmem:[#allocation16 + $0x170] sm:$0xff]
    %v2747 = vld [vmem:[#allocation16 + $0x178] sm:$0xff]
    %v2748 = vld [vmem:[#allocation16 + $0x180] sm:$0xff]
    %v2749 = vld [vmem:[#allocation16 + $0x188] sm:$0xff]
    %v2750 = vld [vmem:[#allocation16 + $0x190] sm:$0xff]
    %v2751 = vld [vmem:[#allocation16 + $0x198] sm:$0xff]
    %v2752 = vld [vmem:[#allocation16 + $0x1a0] sm:$0xff]
    %v2753 = vld [vmem:[#allocation16 + $0x1a8] sm:$0xff]
    %v2754 = vld [vmem:[#allocation16 + $0x1b0] sm:$0xff]
    %v2755 = vld [vmem:[#allocation16 + $0x1b8] sm:$0xff]
    %v2756 = vld [vmem:[#allocation16 + $0x1c0] sm:$0xff]
    %v2757 = vld [vmem:[#allocation16 + $0x1c8] sm:$0xff]
    %v2758 = vld [vmem:[#allocation16 + $0x1d0] sm:$0xff]
    %v2759 = vld [vmem:[#allocation16 + $0x1d8] sm:$0xff]
    %v2760 = vld [vmem:[#allocation16 + $0x1e0] sm:$0xff]
    %v2761 = vld [vmem:[#allocation16 + $0x1e8] sm:$0xff]
    %v2762 = vld [vmem:[#allocation16 + $0x1f0] sm:$0xff]
    %v2763 = vld [vmem:[#allocation16 + $0x1f8] sm:$0xff]
    %v2764 = vld [vmem:[%s15] sm:$0xf]
    %v2766 = vlaneseq
    %v2767 = vshrl.u32 %v2766, 7
    %v2768 = vsub.s32 0, %v2767
    %v2769 = vrot.slane %v2764, %v2768
    %v2770 = vlaneseq
    %v2771 = vshrl.u32 %v2770, 7
    %v2772 = vsub.s32 1, %v2771
    %v2773 = vrot.slane %v2764, %v2772
    %v2774 = vlaneseq
    %v2775 = vshrl.u32 %v2774, 7
    %v2776 = vsub.s32 2, %v2775
    %v2777 = vrot.slane %v2764, %v2776
    %v2778 = vlaneseq
    %v2779 = vshrl.u32 %v2778, 7
    %v2780 = vsub.s32 3, %v2779
    %v2781 = vrot.slane %v2764, %v2780
    %v2850 = vunpack.c.l.b16 %v2700
    %v2851 = vunpack.c.h.b16 %v2700
    %v2852 = vunpack.c.l.b16 %v2701
    %v2853 = vunpack.c.h.b16 %v2701
    %v2854 = vunpack.c.l.b16 %v2702
    %v2855 = vunpack.c.h.b16 %v2702
    %v2856 = vunpack.c.l.b16 %v2703
    %v2857 = vunpack.c.h.b16 %v2703
    %v2858 = vunpack.c.l.b16 %v2704
    %v2859 = vunpack.c.h.b16 %v2704
    %v2860 = vunpack.c.l.b16 %v2705
    %v2861 = vunpack.c.h.b16 %v2705
    %v2862 = vunpack.c.l.b16 %v2706
    %v2863 = vunpack.c.h.b16 %v2706
    %v2864 = vunpack.c.l.b16 %v2707
    %v2865 = vunpack.c.h.b16 %v2707
    %v2866 = vunpack.c.l.b16 %v2708
    %v2867 = vunpack.c.h.b16 %v2708
    %v2868 = vunpack.c.l.b16 %v2709
    %v2869 = vunpack.c.h.b16 %v2709
    %v2870 = vunpack.c.l.b16 %v2710
    %v2871 = vunpack.c.h.b16 %v2710
    %v2872 = vunpack.c.l.b16 %v2711
    %v2873 = vunpack.c.h.b16 %v2711
    %v2874 = vunpack.c.l.b16 %v2712
    %v2875 = vunpack.c.h.b16 %v2712
    %v2876 = vunpack.c.l.b16 %v2713
    %v2877 = vunpack.c.h.b16 %v2713
    %v2878 = vunpack.c.l.b16 %v2714
    %v2879 = vunpack.c.h.b16 %v2714
    %v2880 = vunpack.c.l.b16 %v2715
    %v2881 = vunpack.c.h.b16 %v2715
    %v2882 = vunpack.c.l.b16 %v2716
    %v2883 = vunpack.c.h.b16 %v2716
    %v2884 = vunpack.c.l.b16 %v2717
    %v2885 = vunpack.c.h.b16 %v2717
    %v2886 = vunpack.c.l.b16 %v2718
    %v2887 = vunpack.c.h.b16 %v2718
    %v2888 = vunpack.c.l.b16 %v2719
    %v2889 = vunpack.c.h.b16 %v2719
    %v2890 = vunpack.c.l.b16 %v2720
    %v2891 = vunpack.c.h.b16 %v2720
    %v2892 = vunpack.c.l.b16 %v2721
    %v2893 = vunpack.c.h.b16 %v2721
    %v2894 = vunpack.c.l.b16 %v2722
    %v2895 = vunpack.c.h.b16 %v2722
    %v2896 = vunpack.c.l.b16 %v2723
    %v2897 = vunpack.c.h.b16 %v2723
    %v2898 = vunpack.c.l.b16 %v2724
    %v2899 = vunpack.c.h.b16 %v2724
    %v2900 = vunpack.c.l.b16 %v2725
    %v2901 = vunpack.c.h.b16 %v2725
    %v2902 = vunpack.c.l.b16 %v2726
    %v2903 = vunpack.c.h.b16 %v2726
    %v2904 = vunpack.c.l.b16 %v2727
    %v2905 = vunpack.c.h.b16 %v2727
    %v2906 = vunpack.c.l.b16 %v2728
    %v2907 = vunpack.c.h.b16 %v2728
    %v2908 = vunpack.c.l.b16 %v2729
    %v2909 = vunpack.c.h.b16 %v2729
    %v2910 = vunpack.c.l.b16 %v2730
    %v2911 = vunpack.c.h.b16 %v2730
    %v2912 = vunpack.c.l.b16 %v2731
    %v2913 = vunpack.c.h.b16 %v2731
    %v2914 = vunpack.c.l.b16 %v2732
    %v2915 = vunpack.c.h.b16 %v2732
    %v2916 = vunpack.c.l.b16 %v2733
    %v2917 = vunpack.c.h.b16 %v2733
    %v2918 = vunpack.c.l.b16 %v2734
    %v2919 = vunpack.c.h.b16 %v2734
    %v2920 = vunpack.c.l.b16 %v2735
    %v2921 = vunpack.c.h.b16 %v2735
    %v2922 = vunpack.c.l.b16 %v2736
    %v2923 = vunpack.c.h.b16 %v2736
    %v2924 = vunpack.c.l.b16 %v2737
    %v2925 = vunpack.c.h.b16 %v2737
    %v2926 = vunpack.c.l.b16 %v2738
    %v2927 = vunpack.c.h.b16 %v2738
    %v2928 = vunpack.c.l.b16 %v2739
    %v2929 = vunpack.c.h.b16 %v2739
    %v2930 = vunpack.c.l.b16 %v2740
    %v2931 = vunpack.c.h.b16 %v2740
    %v2932 = vunpack.c.l.b16 %v2741
    %v2933 = vunpack.c.h.b16 %v2741
    %v2934 = vunpack.c.l.b16 %v2742
    %v2935 = vunpack.c.h.b16 %v2742
    %v2936 = vunpack.c.l.b16 %v2743
    %v2937 = vunpack.c.h.b16 %v2743
    %v2938 = vunpack.c.l.b16 %v2744
    %v2939 = vunpack.c.h.b16 %v2744
    %v2940 = vunpack.c.l.b16 %v2745
    %v2941 = vunpack.c.h.b16 %v2745
    %v2942 = vunpack.c.l.b16 %v2746
    %v2943 = vunpack.c.h.b16 %v2746
    %v2944 = vunpack.c.l.b16 %v2747
    %v2945 = vunpack.c.h.b16 %v2747
    %v2946 = vunpack.c.l.b16 %v2748
    %v2947 = vunpack.c.h.b16 %v2748
    %v2948 = vunpack.c.l.b16 %v2749
    %v2949 = vunpack.c.h.b16 %v2749
    %v2950 = vunpack.c.l.b16 %v2750
    %v2951 = vunpack.c.h.b16 %v2750
    %v2952 = vunpack.c.l.b16 %v2751
    %v2953 = vunpack.c.h.b16 %v2751
    %v2954 = vunpack.c.l.b16 %v2752
    %v2955 = vunpack.c.h.b16 %v2752
    %v2956 = vunpack.c.l.b16 %v2753
    %v2957 = vunpack.c.h.b16 %v2753
    %v2958 = vunpack.c.l.b16 %v2754
    %v2959 = vunpack.c.h.b16 %v2754
    %v2960 = vunpack.c.l.b16 %v2755
    %v2961 = vunpack.c.h.b16 %v2755
    %v2962 = vunpack.c.l.b16 %v2756
    %v2963 = vunpack.c.h.b16 %v2756
    %v2964 = vunpack.c.l.b16 %v2757
    %v2965 = vunpack.c.h.b16 %v2757
    %v2966 = vunpack.c.l.b16 %v2758
    %v2967 = vunpack.c.h.b16 %v2758
    %v2968 = vunpack.c.l.b16 %v2759
    %v2969 = vunpack.c.h.b16 %v2759
    %v2970 = vunpack.c.l.b16 %v2760
    %v2971 = vunpack.c.h.b16 %v2760
    %v2972 = vunpack.c.l.b16 %v2761
    %v2973 = vunpack.c.h.b16 %v2761
    %v2974 = vunpack.c.l.b16 %v2762
    %v2975 = vunpack.c.h.b16 %v2762
    %v2976 = vunpack.c.l.b16 %v2763
    %v2977 = vunpack.c.h.b16 %v2763
    %v2978 = vpack.c.b16 %v2854, %v2850
    %v2979 = vpack.c.b16 %v2855, %v2851
    %v2980 = vpack.c.b16 %v2856, %v2852
    %v2981 = vpack.c.b16 %v2857, %v2853
    %v2982 = vpack.c.b16 %v2862, %v2858
    %v2983 = vpack.c.b16 %v2863, %v2859
    %v2984 = vpack.c.b16 %v2864, %v2860
    %v2985 = vpack.c.b16 %v2865, %v2861
    %v2986 = vpack.c.b16 %v2870, %v2866
    %v2987 = vpack.c.b16 %v2871, %v2867
    %v2988 = vpack.c.b16 %v2872, %v2868
    %v2989 = vpack.c.b16 %v2873, %v2869
    %v2990 = vpack.c.b16 %v2878, %v2874
    %v2991 = vpack.c.b16 %v2879, %v2875
    %v2992 = vpack.c.b16 %v2880, %v2876
    %v2993 = vpack.c.b16 %v2881, %v2877
    %v2994 = vpack.c.b16 %v2886, %v2882
    %v2995 = vpack.c.b16 %v2887, %v2883
    %v2996 = vpack.c.b16 %v2888, %v2884
    %v2997 = vpack.c.b16 %v2889, %v2885
    %v2998 = vpack.c.b16 %v2894, %v2890
    %v2999 = vpack.c.b16 %v2895, %v2891
    %v3000 = vpack.c.b16 %v2896, %v2892
    %v3001 = vpack.c.b16 %v2897, %v2893
    %v3002 = vpack.c.b16 %v2902, %v2898
    %v3003 = vpack.c.b16 %v2903, %v2899
    %v3004 = vpack.c.b16 %v2904, %v2900
    %v3005 = vpack.c.b16 %v2905, %v2901
    %v3006 = vpack.c.b16 %v2910, %v2906
    %v3007 = vpack.c.b16 %v2911, %v2907
    %v3008 = vpack.c.b16 %v2912, %v2908
    %v3009 = vpack.c.b16 %v2913, %v2909
    %v3010 = vpack.c.b16 %v2918, %v2914
    %v3011 = vpack.c.b16 %v2919, %v2915
    %v3012 = vpack.c.b16 %v2920, %v2916
    %v3013 = vpack.c.b16 %v2921, %v2917
    %v3014 = vpack.c.b16 %v2926, %v2922
    %v3015 = vpack.c.b16 %v2927, %v2923
    %v3016 = vpack.c.b16 %v2928, %v2924
    %v3017 = vpack.c.b16 %v2929, %v2925
    %v3018 = vpack.c.b16 %v2934, %v2930
    %v3019 = vpack.c.b16 %v2935, %v2931
    %v3020 = vpack.c.b16 %v2936, %v2932
    %v3021 = vpack.c.b16 %v2937, %v2933
    %v3022 = vpack.c.b16 %v2942, %v2938
    %v3023 = vpack.c.b16 %v2943, %v2939
    %v3024 = vpack.c.b16 %v2944, %v2940
    %v3025 = vpack.c.b16 %v2945, %v2941
    %v3026 = vpack.c.b16 %v2950, %v2946
    %v3027 = vpack.c.b16 %v2951, %v2947
    %v3028 = vpack.c.b16 %v2952, %v2948
    %v3029 = vpack.c.b16 %v2953, %v2949
    %v3030 = vpack.c.b16 %v2958, %v2954
    %v3031 = vpack.c.b16 %v2959, %v2955
    %v3032 = vpack.c.b16 %v2960, %v2956
    %v3033 = vpack.c.b16 %v2961, %v2957
    %v3034 = vpack.c.b16 %v2966, %v2962
    %v3035 = vpack.c.b16 %v2967, %v2963
    %v3036 = vpack.c.b16 %v2968, %v2964
    %v3037 = vpack.c.b16 %v2969, %v2965
    %v3038 = vpack.c.b16 %v2974, %v2970
    %v3039 = vpack.c.b16 %v2975, %v2971
    %v3040 = vpack.c.b16 %v2976, %v2972
    %v3041 = vpack.c.b16 %v2977, %v2973
    %3106 = vmatprep.subr.bf16.mxu0 %v2979
    %3107 = vmatpush1.bf16.msra.mxu0 %v2978
    %3108 = vmatprep.subr.bf16.mxu0 %v2983
    %3109 = vmatpush1.bf16.msra.mxu0 %v2982
    %3110 = vmatprep.subr.bf16.mxu0 %v2987
    %3111 = vmatpush1.bf16.msra.mxu0 %v2986
    %3112 = vmatprep.subr.bf16.mxu0 %v2991
    %3113 = vmatpush1.bf16.msra.mxu0 %v2990
    %3114 = vmatprep.subr.bf16.mxu0 %v2995
    %3115 = vmatpush1.bf16.msra.mxu0 %v2994
    %3116 = vmatprep.subr.bf16.mxu0 %v2999
    %3117 = vmatpush1.bf16.msra.mxu0 %v2998
    %3118 = vmatprep.subr.bf16.mxu0 %v3003
    %3119 = vmatpush1.bf16.msra.mxu0 %v3002
    %3120 = vmatprep.subr.bf16.mxu0 %v3007
    %3121 = vmatpush1.bf16.msra.mxu0 %v3006
    %3122 = vmatprep.subr.bf16.mxu0 %v3011
    %3123 = vmatpush1.bf16.msra.mxu0 %v3010
    %3124 = vmatprep.subr.bf16.mxu0 %v3015
    %3125 = vmatpush1.bf16.msra.mxu0 %v3014
    %3126 = vmatprep.subr.bf16.mxu0 %v3019
    %3127 = vmatpush1.bf16.msra.mxu0 %v3018
    %3128 = vmatprep.subr.bf16.mxu0 %v3023
    %3129 = vmatpush1.bf16.msra.mxu0 %v3022
    %3130 = vmatprep.subr.bf16.mxu0 %v3027
    %3131 = vmatpush1.bf16.msra.mxu0 %v3026
    %3132 = vmatprep.subr.bf16.mxu0 %v3031
    %3133 = vmatpush1.bf16.msra.mxu0 %v3030
    %3134 = vmatprep.subr.bf16.mxu0 %v3035
    %3135 = vmatpush1.bf16.msra.mxu0 %v3034
    %3136 = vmatprep.subr.bf16.mxu0 %v3039
    %3137 = vmatpush1.bf16.msra.mxu0 %v3038
    %3138 = vmatprep.mubr.bf16.mxu0 %v2699
    %3139 = vmatmul.mubr.bf16.gmra.mrb[0].mxu0 %v2698
    %v3140 = vpop.f32.mrb[0].mxu0
    %v3141 = vadd.f32 %v2769, %v3140
    %v3142 = vpop.f32.mrb[0].mxu0
    %v3143 = vadd.f32 %v2773, %v3142
    %v3144 = vpop.f32.mrb[0].mxu0
    %v3145 = vpop.f32.mrb[0].mxu0
    %3146 = vdwg.mxu0
    %3147 = vmatprep.subr.bf16.mxu0 %v2981
    %3148 = vmatpush1.bf16.msra.mxu0 %v2980
    %3149 = vmatprep.subr.bf16.mxu0 %v2985
    %3150 = vmatpush1.bf16.msra.mxu0 %v2984
    %3151 = vmatprep.subr.bf16.mxu0 %v2989
    %3152 = vmatpush1.bf16.msra.mxu0 %v2988
    %3153 = vmatprep.subr.bf16.mxu0 %v2993
    %3154 = vmatpush1.bf16.msra.mxu0 %v2992
    %3155 = vmatprep.subr.bf16.mxu0 %v2997
    %3156 = vmatpush1.bf16.msra.mxu0 %v2996
    %3157 = vmatprep.subr.bf16.mxu0 %v3001
    %3158 = vmatpush1.bf16.msra.mxu0 %v3000
    %3159 = vmatprep.subr.bf16.mxu0 %v3005
    %3160 = vmatpush1.bf16.msra.mxu0 %v3004
    %3161 = vmatprep.subr.bf16.mxu0 %v3009
    %3162 = vmatpush1.bf16.msra.mxu0 %v3008
    %3163 = vmatprep.subr.bf16.mxu0 %v3013
    %3164 = vmatpush1.bf16.msra.mxu0 %v3012
    %3165 = vmatprep.subr.bf16.mxu0 %v3017
    %3166 = vmatpush1.bf16.msra.mxu0 %v3016
    %3167 = vmatprep.subr.bf16.mxu0 %v3021
    %3168 = vmatpush1.bf16.msra.mxu0 %v3020
    %3169 = vmatprep.subr.bf16.mxu0 %v3025
    %3170 = vmatpush1.bf16.msra.mxu0 %v3024
    %3171 = vmatprep.subr.bf16.mxu0 %v3029
    %3172 = vmatpush1.bf16.msra.mxu0 %v3028
    %3173 = vmatprep.subr.bf16.mxu0 %v3033
    %3174 = vmatpush1.bf16.msra.mxu0 %v3032
    %3175 = vmatprep.subr.bf16.mxu0 %v3037
    %3176 = vmatpush1.bf16.msra.mxu0 %v3036
    %3177 = vmatprep.subr.bf16.mxu0 %v3041
    %3178 = vmatpush1.bf16.msra.mxu0 %v3040
    %3179 = vmatprep.mubr.bf16.mxu0 %v2699
    %3180 = vmatmul.mubr.bf16.gmra.mrb[0].mxu0 %v2698
    %v3181 = vpop.f32.mrb[0].mxu0
    %v3182 = vadd.f32 %v2777, %v3181
    %v3183 = vpop.f32.mrb[0].mxu0
    %v3184 = vadd.f32 %v2781, %v3183
    %v3185 = vpop.f32.mrb[0].mxu0
    %v3186 = vpop.f32.mrb[0].mxu0
    %3187 = vdwg.mxu0
    %vm3188 = vcmp.gt.f32.partialorder %v3141, 0.0
    %vm3189 = vcmp.gt.f32.partialorder %v3143, 0.0
    %vm3190 = vcmp.gt.f32.partialorder %v3182, 0.0
    %vm3191 = vcmp.gt.f32.partialorder %v3184, 0.0
    %v3192 = vmul.f32 %v3141, 0.2
    %v3193 = vmul.f32 %v3143, 0.2
    %v3194 = vmul.f32 %v3182, 0.2
    %v3195 = vmul.f32 %v3184, 0.2
    %v3196 = vsel %vm3188, %v3141, %v3192
    %v3197 = vsel %vm3189, %v3143, %v3193
    %v3198 = vsel %vm3190, %v3182, %v3194
    %v3199 = vsel %vm3191, %v3184, %v3195
    %v3200 = vpack.c.bf16 %v3196, %v3196
    %v3201 = vpack.c.bf16 %v3197, %v3197
    %v3202 = vpack.c.bf16 %v3198, %v3198
    %v3203 = vpack.c.bf16 %v3199, %v3199
    %v3204 = vld [vmem:[#allocation17] sm:$0xff]
    %v3205 = vld [vmem:[#allocation17 + $0x8] sm:$0xff]
    %v3206 = vld [vmem:[#allocation17 + $0x10] sm:$0xff]
    %v3207 = vld [vmem:[#allocation17 + $0x18] sm:$0xff]
    %v3208 = vld [vmem:[#allocation17 + $0x20] sm:$0xff]
    %v3209 = vld [vmem:[#allocation17 + $0x28] sm:$0xff]
    %v3210 = vld [vmem:[#allocation17 + $0x30] sm:$0xff]
    %v3211 = vld [vmem:[#allocation17 + $0x38] sm:$0xff]
    %v3212 = vld [vmem:[#allocation17 + $0x40] sm:$0xff]
    %v3213 = vld [vmem:[#allocation17 + $0x48] sm:$0xff]
    %v3214 = vld [vmem:[#allocation17 + $0x50] sm:$0xff]
    %v3215 = vld [vmem:[#allocation17 + $0x58] sm:$0xff]
    %v3216 = vld [vmem:[#allocation17 + $0x60] sm:$0xff]
    %v3217 = vld [vmem:[#allocation17 + $0x68] sm:$0xff]
    %v3218 = vld [vmem:[#allocation17 + $0x70] sm:$0xff]
    %v3219 = vld [vmem:[#allocation17 + $0x78] sm:$0xff]
    %v3220 = vld [vmem:[#allocation17 + $0x80] sm:$0xff]
    %v3221 = vld [vmem:[#allocation17 + $0x88] sm:$0xff]
    %v3222 = vld [vmem:[#allocation17 + $0x90] sm:$0xff]
    %v3223 = vld [vmem:[#allocation17 + $0x98] sm:$0xff]
    %v3224 = vld [vmem:[#allocation17 + $0xa0] sm:$0xff]
    %v3225 = vld [vmem:[#allocation17 + $0xa8] sm:$0xff]
    %v3226 = vld [vmem:[#allocation17 + $0xb0] sm:$0xff]
    %v3227 = vld [vmem:[#allocation17 + $0xb8] sm:$0xff]
    %v3228 = vld [vmem:[#allocation17 + $0xc0] sm:$0xff]
    %v3229 = vld [vmem:[#allocation17 + $0xc8] sm:$0xff]
    %v3230 = vld [vmem:[#allocation17 + $0xd0] sm:$0xff]
    %v3231 = vld [vmem:[#allocation17 + $0xd8] sm:$0xff]
    %v3232 = vld [vmem:[#allocation17 + $0xe0] sm:$0xff]
    %v3233 = vld [vmem:[#allocation17 + $0xe8] sm:$0xff]
    %v3234 = vld [vmem:[#allocation17 + $0xf0] sm:$0xff]
    %v3235 = vld [vmem:[#allocation17 + $0xf8] sm:$0xff]
    %v3236 = vld [vmem:[#allocation17 + $0x100] sm:$0xff]
    %v3237 = vld [vmem:[#allocation17 + $0x108] sm:$0xff]
    %v3238 = vld [vmem:[#allocation17 + $0x110] sm:$0xff]
    %v3239 = vld [vmem:[#allocation17 + $0x118] sm:$0xff]
    %v3240 = vld [vmem:[#allocation17 + $0x120] sm:$0xff]
    %v3241 = vld [vmem:[#allocation17 + $0x128] sm:$0xff]
    %v3242 = vld [vmem:[#allocation17 + $0x130] sm:$0xff]
    %v3243 = vld [vmem:[#allocation17 + $0x138] sm:$0xff]
    %v3244 = vld [vmem:[#allocation17 + $0x140] sm:$0xff]
    %v3245 = vld [vmem:[#allocation17 + $0x148] sm:$0xff]
    %v3246 = vld [vmem:[#allocation17 + $0x150] sm:$0xff]
    %v3247 = vld [vmem:[#allocation17 + $0x158] sm:$0xff]
    %v3248 = vld [vmem:[#allocation17 + $0x160] sm:$0xff]
    %v3249 = vld [vmem:[#allocation17 + $0x168] sm:$0xff]
    %v3250 = vld [vmem:[#allocation17 + $0x170] sm:$0xff]
    %v3251 = vld [vmem:[#allocation17 + $0x178] sm:$0xff]
    %v3252 = vld [vmem:[#allocation17 + $0x180] sm:$0xff]
    %v3253 = vld [vmem:[#allocation17 + $0x188] sm:$0xff]
    %v3254 = vld [vmem:[#allocation17 + $0x190] sm:$0xff]
    %v3255 = vld [vmem:[#allocation17 + $0x198] sm:$0xff]
    %v3256 = vld [vmem:[#allocation17 + $0x1a0] sm:$0xff]
    %v3257 = vld [vmem:[#allocation17 + $0x1a8] sm:$0xff]
    %v3258 = vld [vmem:[#allocation17 + $0x1b0] sm:$0xff]
    %v3259 = vld [vmem:[#allocation17 + $0x1b8] sm:$0xff]
    %v3260 = vld [vmem:[#allocation17 + $0x1c0] sm:$0xff]
    %v3261 = vld [vmem:[#allocation17 + $0x1c8] sm:$0xff]
    %v3262 = vld [vmem:[#allocation17 + $0x1d0] sm:$0xff]
    %v3263 = vld [vmem:[#allocation17 + $0x1d8] sm:$0xff]
    %v3264 = vld [vmem:[#allocation17 + $0x1e0] sm:$0xff]
    %v3265 = vld [vmem:[#allocation17 + $0x1e8] sm:$0xff]
    %v3266 = vld [vmem:[#allocation17 + $0x1f0] sm:$0xff]
    %v3267 = vld [vmem:[#allocation17 + $0x1f8] sm:$0xff]
    %v3268 = vld [vmem:[#allocation17 + $0x200] sm:$0xff]
    %v3269 = vld [vmem:[#allocation17 + $0x208] sm:$0xff]
    %v3270 = vld [vmem:[#allocation17 + $0x210] sm:$0xff]
    %v3271 = vld [vmem:[#allocation17 + $0x218] sm:$0xff]
    %v3272 = vld [vmem:[#allocation17 + $0x220] sm:$0xff]
    %v3273 = vld [vmem:[#allocation17 + $0x228] sm:$0xff]
    %v3274 = vld [vmem:[#allocation17 + $0x230] sm:$0xff]
    %v3275 = vld [vmem:[#allocation17 + $0x238] sm:$0xff]
    %v3276 = vld [vmem:[#allocation17 + $0x240] sm:$0xff]
    %v3277 = vld [vmem:[#allocation17 + $0x248] sm:$0xff]
    %v3278 = vld [vmem:[#allocation17 + $0x250] sm:$0xff]
    %v3279 = vld [vmem:[#allocation17 + $0x258] sm:$0xff]
    %v3280 = vld [vmem:[#allocation17 + $0x260] sm:$0xff]
    %v3281 = vld [vmem:[#allocation17 + $0x268] sm:$0xff]
    %v3282 = vld [vmem:[#allocation17 + $0x270] sm:$0xff]
    %v3283 = vld [vmem:[#allocation17 + $0x278] sm:$0xff]
    %v3284 = vld [vmem:[#allocation17 + $0x280] sm:$0xff]
    %v3285 = vld [vmem:[#allocation17 + $0x288] sm:$0xff]
    %v3286 = vld [vmem:[#allocation17 + $0x290] sm:$0xff]
    %v3287 = vld [vmem:[#allocation17 + $0x298] sm:$0xff]
    %v3288 = vld [vmem:[#allocation17 + $0x2a0] sm:$0xff]
    %v3289 = vld [vmem:[#allocation17 + $0x2a8] sm:$0xff]
    %v3290 = vld [vmem:[#allocation17 + $0x2b0] sm:$0xff]
    %v3291 = vld [vmem:[#allocation17 + $0x2b8] sm:$0xff]
    %v3292 = vld [vmem:[#allocation17 + $0x2c0] sm:$0xff]
    %v3293 = vld [vmem:[#allocation17 + $0x2c8] sm:$0xff]
    %v3294 = vld [vmem:[#allocation17 + $0x2d0] sm:$0xff]
    %v3295 = vld [vmem:[#allocation17 + $0x2d8] sm:$0xff]
    %v3296 = vld [vmem:[#allocation17 + $0x2e0] sm:$0xff]
    %v3297 = vld [vmem:[#allocation17 + $0x2e8] sm:$0xff]
    %v3298 = vld [vmem:[#allocation17 + $0x2f0] sm:$0xff]
    %v3299 = vld [vmem:[#allocation17 + $0x2f8] sm:$0xff]
    %v3300 = vld [vmem:[#allocation17 + $0x300] sm:$0xff]
    %v3301 = vld [vmem:[#allocation17 + $0x308] sm:$0xff]
    %v3302 = vld [vmem:[#allocation17 + $0x310] sm:$0xff]
    %v3303 = vld [vmem:[#allocation17 + $0x318] sm:$0xff]
    %v3304 = vld [vmem:[#allocation17 + $0x320] sm:$0xff]
    %v3305 = vld [vmem:[#allocation17 + $0x328] sm:$0xff]
    %v3306 = vld [vmem:[#allocation17 + $0x330] sm:$0xff]
    %v3307 = vld [vmem:[#allocation17 + $0x338] sm:$0xff]
    %v3308 = vld [vmem:[#allocation17 + $0x340] sm:$0xff]
    %v3309 = vld [vmem:[#allocation17 + $0x348] sm:$0xff]
    %v3310 = vld [vmem:[#allocation17 + $0x350] sm:$0xff]
    %v3311 = vld [vmem:[#allocation17 + $0x358] sm:$0xff]
    %v3312 = vld [vmem:[#allocation17 + $0x360] sm:$0xff]
    %v3313 = vld [vmem:[#allocation17 + $0x368] sm:$0xff]
    %v3314 = vld [vmem:[#allocation17 + $0x370] sm:$0xff]
    %v3315 = vld [vmem:[#allocation17 + $0x378] sm:$0xff]
    %v3316 = vld [vmem:[#allocation17 + $0x380] sm:$0xff]
    %v3317 = vld [vmem:[#allocation17 + $0x388] sm:$0xff]
    %v3318 = vld [vmem:[#allocation17 + $0x390] sm:$0xff]
    %v3319 = vld [vmem:[#allocation17 + $0x398] sm:$0xff]
    %v3320 = vld [vmem:[#allocation17 + $0x3a0] sm:$0xff]
    %v3321 = vld [vmem:[#allocation17 + $0x3a8] sm:$0xff]
    %v3322 = vld [vmem:[#allocation17 + $0x3b0] sm:$0xff]
    %v3323 = vld [vmem:[#allocation17 + $0x3b8] sm:$0xff]
    %v3324 = vld [vmem:[#allocation17 + $0x3c0] sm:$0xff]
    %v3325 = vld [vmem:[#allocation17 + $0x3c8] sm:$0xff]
    %v3326 = vld [vmem:[#allocation17 + $0x3d0] sm:$0xff]
    %v3327 = vld [vmem:[#allocation17 + $0x3d8] sm:$0xff]
    %v3328 = vld [vmem:[#allocation17 + $0x3e0] sm:$0xff]
    %v3329 = vld [vmem:[#allocation17 + $0x3e8] sm:$0xff]
    %v3330 = vld [vmem:[#allocation17 + $0x3f0] sm:$0xff]
    %v3331 = vld [vmem:[#allocation17 + $0x3f8] sm:$0xff]
    %v3332 = vld [vmem:[%s17] sm:$0xf]
    %v3334 = vlaneseq
    %v3335 = vshrl.u32 %v3334, 7
    %v3336 = vsub.s32 0, %v3335
    %v3337 = vrot.slane %v3332, %v3336
    %v3338 = vlaneseq
    %v3339 = vshrl.u32 %v3338, 7
    %v3340 = vsub.s32 1, %v3339
    %v3341 = vrot.slane %v3332, %v3340
    %v3342 = vlaneseq
    %v3343 = vshrl.u32 %v3342, 7
    %v3344 = vsub.s32 2, %v3343
    %v3345 = vrot.slane %v3332, %v3344
    %v3346 = vlaneseq
    %v3347 = vshrl.u32 %v3346, 7
    %v3348 = vsub.s32 3, %v3347
    %v3349 = vrot.slane %v3332, %v3348
    %v3482 = vunpack.c.l.b16 %v3204
    %v3483 = vunpack.c.h.b16 %v3204
    %v3484 = vunpack.c.l.b16 %v3205
    %v3485 = vunpack.c.h.b16 %v3205
    %v3486 = vunpack.c.l.b16 %v3206
    %v3487 = vunpack.c.h.b16 %v3206
    %v3488 = vunpack.c.l.b16 %v3207
    %v3489 = vunpack.c.h.b16 %v3207
    %v3490 = vunpack.c.l.b16 %v3208
    %v3491 = vunpack.c.h.b16 %v3208
    %v3492 = vunpack.c.l.b16 %v3209
    %v3493 = vunpack.c.h.b16 %v3209
    %v3494 = vunpack.c.l.b16 %v3210
    %v3495 = vunpack.c.h.b16 %v3210
    %v3496 = vunpack.c.l.b16 %v3211
    %v3497 = vunpack.c.h.b16 %v3211
    %v3498 = vunpack.c.l.b16 %v3212
    %v3499 = vunpack.c.h.b16 %v3212
    %v3500 = vunpack.c.l.b16 %v3213
    %v3501 = vunpack.c.h.b16 %v3213
    %v3502 = vunpack.c.l.b16 %v3214
    %v3503 = vunpack.c.h.b16 %v3214
    %v3504 = vunpack.c.l.b16 %v3215
    %v3505 = vunpack.c.h.b16 %v3215
    %v3506 = vunpack.c.l.b16 %v3216
    %v3507 = vunpack.c.h.b16 %v3216
    %v3508 = vunpack.c.l.b16 %v3217
    %v3509 = vunpack.c.h.b16 %v3217
    %v3510 = vunpack.c.l.b16 %v3218
    %v3511 = vunpack.c.h.b16 %v3218
    %v3512 = vunpack.c.l.b16 %v3219
    %v3513 = vunpack.c.h.b16 %v3219
    %v3514 = vunpack.c.l.b16 %v3220
    %v3515 = vunpack.c.h.b16 %v3220
    %v3516 = vunpack.c.l.b16 %v3221
    %v3517 = vunpack.c.h.b16 %v3221
    %v3518 = vunpack.c.l.b16 %v3222
    %v3519 = vunpack.c.h.b16 %v3222
    %v3520 = vunpack.c.l.b16 %v3223
    %v3521 = vunpack.c.h.b16 %v3223
    %v3522 = vunpack.c.l.b16 %v3224
    %v3523 = vunpack.c.h.b16 %v3224
    %v3524 = vunpack.c.l.b16 %v3225
    %v3525 = vunpack.c.h.b16 %v3225
    %v3526 = vunpack.c.l.b16 %v3226
    %v3527 = vunpack.c.h.b16 %v3226
    %v3528 = vunpack.c.l.b16 %v3227
    %v3529 = vunpack.c.h.b16 %v3227
    %v3530 = vunpack.c.l.b16 %v3228
    %v3531 = vunpack.c.h.b16 %v3228
    %v3532 = vunpack.c.l.b16 %v3229
    %v3533 = vunpack.c.h.b16 %v3229
    %v3534 = vunpack.c.l.b16 %v3230
    %v3535 = vunpack.c.h.b16 %v3230
    %v3536 = vunpack.c.l.b16 %v3231
    %v3537 = vunpack.c.h.b16 %v3231
    %v3538 = vunpack.c.l.b16 %v3232
    %v3539 = vunpack.c.h.b16 %v3232
    %v3540 = vunpack.c.l.b16 %v3233
    %v3541 = vunpack.c.h.b16 %v3233
    %v3542 = vunpack.c.l.b16 %v3234
    %v3543 = vunpack.c.h.b16 %v3234
    %v3544 = vunpack.c.l.b16 %v3235
    %v3545 = vunpack.c.h.b16 %v3235
    %v3546 = vunpack.c.l.b16 %v3236
    %v3547 = vunpack.c.h.b16 %v3236
    %v3548 = vunpack.c.l.b16 %v3237
    %v3549 = vunpack.c.h.b16 %v3237
    %v3550 = vunpack.c.l.b16 %v3238
    %v3551 = vunpack.c.h.b16 %v3238
    %v3552 = vunpack.c.l.b16 %v3239
    %v3553 = vunpack.c.h.b16 %v3239
    %v3554 = vunpack.c.l.b16 %v3240
    %v3555 = vunpack.c.h.b16 %v3240
    %v3556 = vunpack.c.l.b16 %v3241
    %v3557 = vunpack.c.h.b16 %v3241
    %v3558 = vunpack.c.l.b16 %v3242
    %v3559 = vunpack.c.h.b16 %v3242
    %v3560 = vunpack.c.l.b16 %v3243
    %v3561 = vunpack.c.h.b16 %v3243
    %v3562 = vunpack.c.l.b16 %v3244
    %v3563 = vunpack.c.h.b16 %v3244
    %v3564 = vunpack.c.l.b16 %v3245
    %v3565 = vunpack.c.h.b16 %v3245
    %v3566 = vunpack.c.l.b16 %v3246
    %v3567 = vunpack.c.h.b16 %v3246
    %v3568 = vunpack.c.l.b16 %v3247
    %v3569 = vunpack.c.h.b16 %v3247
    %v3570 = vunpack.c.l.b16 %v3248
    %v3571 = vunpack.c.h.b16 %v3248
    %v3572 = vunpack.c.l.b16 %v3249
    %v3573 = vunpack.c.h.b16 %v3249
    %v3574 = vunpack.c.l.b16 %v3250
    %v3575 = vunpack.c.h.b16 %v3250
    %v3576 = vunpack.c.l.b16 %v3251
    %v3577 = vunpack.c.h.b16 %v3251
    %v3578 = vunpack.c.l.b16 %v3252
    %v3579 = vunpack.c.h.b16 %v3252
    %v3580 = vunpack.c.l.b16 %v3253
    %v3581 = vunpack.c.h.b16 %v3253
    %v3582 = vunpack.c.l.b16 %v3254
    %v3583 = vunpack.c.h.b16 %v3254
    %v3584 = vunpack.c.l.b16 %v3255
    %v3585 = vunpack.c.h.b16 %v3255
    %v3586 = vunpack.c.l.b16 %v3256
    %v3587 = vunpack.c.h.b16 %v3256
    %v3588 = vunpack.c.l.b16 %v3257
    %v3589 = vunpack.c.h.b16 %v3257
    %v3590 = vunpack.c.l.b16 %v3258
    %v3591 = vunpack.c.h.b16 %v3258
    %v3592 = vunpack.c.l.b16 %v3259
    %v3593 = vunpack.c.h.b16 %v3259
    %v3594 = vunpack.c.l.b16 %v3260
    %v3595 = vunpack.c.h.b16 %v3260
    %v3596 = vunpack.c.l.b16 %v3261
    %v3597 = vunpack.c.h.b16 %v3261
    %v3598 = vunpack.c.l.b16 %v3262
    %v3599 = vunpack.c.h.b16 %v3262
    %v3600 = vunpack.c.l.b16 %v3263
    %v3601 = vunpack.c.h.b16 %v3263
    %v3602 = vunpack.c.l.b16 %v3264
    %v3603 = vunpack.c.h.b16 %v3264
    %v3604 = vunpack.c.l.b16 %v3265
    %v3605 = vunpack.c.h.b16 %v3265
    %v3606 = vunpack.c.l.b16 %v3266
    %v3607 = vunpack.c.h.b16 %v3266
    %v3608 = vunpack.c.l.b16 %v3267
    %v3609 = vunpack.c.h.b16 %v3267
    %v3610 = vunpack.c.l.b16 %v3268
    %v3611 = vunpack.c.h.b16 %v3268
    %v3612 = vunpack.c.l.b16 %v3269
    %v3613 = vunpack.c.h.b16 %v3269
    %v3614 = vunpack.c.l.b16 %v3270
    %v3615 = vunpack.c.h.b16 %v3270
    %v3616 = vunpack.c.l.b16 %v3271
    %v3617 = vunpack.c.h.b16 %v3271
    %v3618 = vunpack.c.l.b16 %v3272
    %v3619 = vunpack.c.h.b16 %v3272
    %v3620 = vunpack.c.l.b16 %v3273
    %v3621 = vunpack.c.h.b16 %v3273
    %v3622 = vunpack.c.l.b16 %v3274
    %v3623 = vunpack.c.h.b16 %v3274
    %v3624 = vunpack.c.l.b16 %v3275
    %v3625 = vunpack.c.h.b16 %v3275
    %v3626 = vunpack.c.l.b16 %v3276
    %v3627 = vunpack.c.h.b16 %v3276
    %v3628 = vunpack.c.l.b16 %v3277
    %v3629 = vunpack.c.h.b16 %v3277
    %v3630 = vunpack.c.l.b16 %v3278
    %v3631 = vunpack.c.h.b16 %v3278
    %v3632 = vunpack.c.l.b16 %v3279
    %v3633 = vunpack.c.h.b16 %v3279
    %v3634 = vunpack.c.l.b16 %v3280
    %v3635 = vunpack.c.h.b16 %v3280
    %v3636 = vunpack.c.l.b16 %v3281
    %v3637 = vunpack.c.h.b16 %v3281
    %v3638 = vunpack.c.l.b16 %v3282
    %v3639 = vunpack.c.h.b16 %v3282
    %v3640 = vunpack.c.l.b16 %v3283
    %v3641 = vunpack.c.h.b16 %v3283
    %v3642 = vunpack.c.l.b16 %v3284
    %v3643 = vunpack.c.h.b16 %v3284
    %v3644 = vunpack.c.l.b16 %v3285
    %v3645 = vunpack.c.h.b16 %v3285
    %v3646 = vunpack.c.l.b16 %v3286
    %v3647 = vunpack.c.h.b16 %v3286
    %v3648 = vunpack.c.l.b16 %v3287
    %v3649 = vunpack.c.h.b16 %v3287
    %v3650 = vunpack.c.l.b16 %v3288
    %v3651 = vunpack.c.h.b16 %v3288
    %v3652 = vunpack.c.l.b16 %v3289
    %v3653 = vunpack.c.h.b16 %v3289
    %v3654 = vunpack.c.l.b16 %v3290
    %v3655 = vunpack.c.h.b16 %v3290
    %v3656 = vunpack.c.l.b16 %v3291
    %v3657 = vunpack.c.h.b16 %v3291
    %v3658 = vunpack.c.l.b16 %v3292
    %v3659 = vunpack.c.h.b16 %v3292
    %v3660 = vunpack.c.l.b16 %v3293
    %v3661 = vunpack.c.h.b16 %v3293
    %v3662 = vunpack.c.l.b16 %v3294
    %v3663 = vunpack.c.h.b16 %v3294
    %v3664 = vunpack.c.l.b16 %v3295
    %v3665 = vunpack.c.h.b16 %v3295
    %v3666 = vunpack.c.l.b16 %v3296
    %v3667 = vunpack.c.h.b16 %v3296
    %v3668 = vunpack.c.l.b16 %v3297
    %v3669 = vunpack.c.h.b16 %v3297
    %v3670 = vunpack.c.l.b16 %v3298
    %v3671 = vunpack.c.h.b16 %v3298
    %v3672 = vunpack.c.l.b16 %v3299
    %v3673 = vunpack.c.h.b16 %v3299
    %v3674 = vunpack.c.l.b16 %v3300
    %v3675 = vunpack.c.h.b16 %v3300
    %v3676 = vunpack.c.l.b16 %v3301
    %v3677 = vunpack.c.h.b16 %v3301
    %v3678 = vunpack.c.l.b16 %v3302
    %v3679 = vunpack.c.h.b16 %v3302
    %v3680 = vunpack.c.l.b16 %v3303
    %v3681 = vunpack.c.h.b16 %v3303
    %v3682 = vunpack.c.l.b16 %v3304
    %v3683 = vunpack.c.h.b16 %v3304
    %v3684 = vunpack.c.l.b16 %v3305
    %v3685 = vunpack.c.h.b16 %v3305
    %v3686 = vunpack.c.l.b16 %v3306
    %v3687 = vunpack.c.h.b16 %v3306
    %v3688 = vunpack.c.l.b16 %v3307
    %v3689 = vunpack.c.h.b16 %v3307
    %v3690 = vunpack.c.l.b16 %v3308
    %v3691 = vunpack.c.h.b16 %v3308
    %v3692 = vunpack.c.l.b16 %v3309
    %v3693 = vunpack.c.h.b16 %v3309
    %v3694 = vunpack.c.l.b16 %v3310
    %v3695 = vunpack.c.h.b16 %v3310
    %v3696 = vunpack.c.l.b16 %v3311
    %v3697 = vunpack.c.h.b16 %v3311
    %v3698 = vunpack.c.l.b16 %v3312
    %v3699 = vunpack.c.h.b16 %v3312
    %v3700 = vunpack.c.l.b16 %v3313
    %v3701 = vunpack.c.h.b16 %v3313
    %v3702 = vunpack.c.l.b16 %v3314
    %v3703 = vunpack.c.h.b16 %v3314
    %v3704 = vunpack.c.l.b16 %v3315
    %v3705 = vunpack.c.h.b16 %v3315
    %v3706 = vunpack.c.l.b16 %v3316
    %v3707 = vunpack.c.h.b16 %v3316
    %v3708 = vunpack.c.l.b16 %v3317
    %v3709 = vunpack.c.h.b16 %v3317
    %v3710 = vunpack.c.l.b16 %v3318
    %v3711 = vunpack.c.h.b16 %v3318
    %v3712 = vunpack.c.l.b16 %v3319
    %v3713 = vunpack.c.h.b16 %v3319
    %v3714 = vunpack.c.l.b16 %v3320
    %v3715 = vunpack.c.h.b16 %v3320
    %v3716 = vunpack.c.l.b16 %v3321
    %v3717 = vunpack.c.h.b16 %v3321
    %v3718 = vunpack.c.l.b16 %v3322
    %v3719 = vunpack.c.h.b16 %v3322
    %v3720 = vunpack.c.l.b16 %v3323
    %v3721 = vunpack.c.h.b16 %v3323
    %v3722 = vunpack.c.l.b16 %v3324
    %v3723 = vunpack.c.h.b16 %v3324
    %v3724 = vunpack.c.l.b16 %v3325
    %v3725 = vunpack.c.h.b16 %v3325
    %v3726 = vunpack.c.l.b16 %v3326
    %v3727 = vunpack.c.h.b16 %v3326
    %v3728 = vunpack.c.l.b16 %v3327
    %v3729 = vunpack.c.h.b16 %v3327
    %v3730 = vunpack.c.l.b16 %v3328
    %v3731 = vunpack.c.h.b16 %v3328
    %v3732 = vunpack.c.l.b16 %v3329
    %v3733 = vunpack.c.h.b16 %v3329
    %v3734 = vunpack.c.l.b16 %v3330
    %v3735 = vunpack.c.h.b16 %v3330
    %v3736 = vunpack.c.l.b16 %v3331
    %v3737 = vunpack.c.h.b16 %v3331
    %v3738 = vpack.c.b16 %v3486, %v3482
    %v3739 = vpack.c.b16 %v3487, %v3483
    %v3740 = vpack.c.b16 %v3488, %v3484
    %v3741 = vpack.c.b16 %v3489, %v3485
    %v3742 = vpack.c.b16 %v3494, %v3490
    %v3743 = vpack.c.b16 %v3495, %v3491
    %v3744 = vpack.c.b16 %v3496, %v3492
    %v3745 = vpack.c.b16 %v3497, %v3493
    %v3746 = vpack.c.b16 %v3502, %v3498
    %v3747 = vpack.c.b16 %v3503, %v3499
    %v3748 = vpack.c.b16 %v3504, %v3500
    %v3749 = vpack.c.b16 %v3505, %v3501
    %v3750 = vpack.c.b16 %v3510, %v3506
    %v3751 = vpack.c.b16 %v3511, %v3507
    %v3752 = vpack.c.b16 %v3512, %v3508
    %v3753 = vpack.c.b16 %v3513, %v3509
    %v3754 = vpack.c.b16 %v3518, %v3514
    %v3755 = vpack.c.b16 %v3519, %v3515
    %v3756 = vpack.c.b16 %v3520, %v3516
    %v3757 = vpack.c.b16 %v3521, %v3517
    %v3758 = vpack.c.b16 %v3526, %v3522
    %v3759 = vpack.c.b16 %v3527, %v3523
    %v3760 = vpack.c.b16 %v3528, %v3524
    %v3761 = vpack.c.b16 %v3529, %v3525
    %v3762 = vpack.c.b16 %v3534, %v3530
    %v3763 = vpack.c.b16 %v3535, %v3531
    %v3764 = vpack.c.b16 %v3536, %v3532
    %v3765 = vpack.c.b16 %v3537, %v3533
    %v3766 = vpack.c.b16 %v3542, %v3538
    %v3767 = vpack.c.b16 %v3543, %v3539
    %v3768 = vpack.c.b16 %v3544, %v3540
    %v3769 = vpack.c.b16 %v3545, %v3541
    %v3770 = vpack.c.b16 %v3550, %v3546
    %v3771 = vpack.c.b16 %v3551, %v3547
    %v3772 = vpack.c.b16 %v3552, %v3548
    %v3773 = vpack.c.b16 %v3553, %v3549
    %v3774 = vpack.c.b16 %v3558, %v3554
    %v3775 = vpack.c.b16 %v3559, %v3555
    %v3776 = vpack.c.b16 %v3560, %v3556
    %v3777 = vpack.c.b16 %v3561, %v3557
    %v3778 = vpack.c.b16 %v3566, %v3562
    %v3779 = vpack.c.b16 %v3567, %v3563
    %v3780 = vpack.c.b16 %v3568, %v3564
    %v3781 = vpack.c.b16 %v3569, %v3565
    %v3782 = vpack.c.b16 %v3574, %v3570
    %v3783 = vpack.c.b16 %v3575, %v3571
    %v3784 = vpack.c.b16 %v3576, %v3572
    %v3785 = vpack.c.b16 %v3577, %v3573
    %v3786 = vpack.c.b16 %v3582, %v3578
    %v3787 = vpack.c.b16 %v3583, %v3579
    %v3788 = vpack.c.b16 %v3584, %v3580
    %v3789 = vpack.c.b16 %v3585, %v3581
    %v3790 = vpack.c.b16 %v3590, %v3586
    %v3791 = vpack.c.b16 %v3591, %v3587
    %v3792 = vpack.c.b16 %v3592, %v3588
    %v3793 = vpack.c.b16 %v3593, %v3589
    %v3794 = vpack.c.b16 %v3598, %v3594
    %v3795 = vpack.c.b16 %v3599, %v3595
    %v3796 = vpack.c.b16 %v3600, %v3596
    %v3797 = vpack.c.b16 %v3601, %v3597
    %v3798 = vpack.c.b16 %v3606, %v3602
    %v3799 = vpack.c.b16 %v3607, %v3603
    %v3800 = vpack.c.b16 %v3608, %v3604
    %v3801 = vpack.c.b16 %v3609, %v3605
    %v3802 = vpack.c.b16 %v3614, %v3610
    %v3803 = vpack.c.b16 %v3615, %v3611
    %v3804 = vpack.c.b16 %v3616, %v3612
    %v3805 = vpack.c.b16 %v3617, %v3613
    %v3806 = vpack.c.b16 %v3622, %v3618
    %v3807 = vpack.c.b16 %v3623, %v3619
    %v3808 = vpack.c.b16 %v3624, %v3620
    %v3809 = vpack.c.b16 %v3625, %v3621
    %v3810 = vpack.c.b16 %v3630, %v3626
    %v3811 = vpack.c.b16 %v3631, %v3627
    %v3812 = vpack.c.b16 %v3632, %v3628
    %v3813 = vpack.c.b16 %v3633, %v3629
    %v3814 = vpack.c.b16 %v3638, %v3634
    %v3815 = vpack.c.b16 %v3639, %v3635
    %v3816 = vpack.c.b16 %v3640, %v3636
    %v3817 = vpack.c.b16 %v3641, %v3637
    %v3818 = vpack.c.b16 %v3646, %v3642
    %v3819 = vpack.c.b16 %v3647, %v3643
    %v3820 = vpack.c.b16 %v3648, %v3644
    %v3821 = vpack.c.b16 %v3649, %v3645
    %v3822 = vpack.c.b16 %v3654, %v3650
    %v3823 = vpack.c.b16 %v3655, %v3651
    %v3824 = vpack.c.b16 %v3656, %v3652
    %v3825 = vpack.c.b16 %v3657, %v3653
    %v3826 = vpack.c.b16 %v3662, %v3658
    %v3827 = vpack.c.b16 %v3663, %v3659
    %v3828 = vpack.c.b16 %v3664, %v3660
    %v3829 = vpack.c.b16 %v3665, %v3661
    %v3830 = vpack.c.b16 %v3670, %v3666
    %v3831 = vpack.c.b16 %v3671, %v3667
    %v3832 = vpack.c.b16 %v3672, %v3668
    %v3833 = vpack.c.b16 %v3673, %v3669
    %v3834 = vpack.c.b16 %v3678, %v3674
    %v3835 = vpack.c.b16 %v3679, %v3675
    %v3836 = vpack.c.b16 %v3680, %v3676
    %v3837 = vpack.c.b16 %v3681, %v3677
    %v3838 = vpack.c.b16 %v3686, %v3682
    %v3839 = vpack.c.b16 %v3687, %v3683
    %v3840 = vpack.c.b16 %v3688, %v3684
    %v3841 = vpack.c.b16 %v3689, %v3685
    %v3842 = vpack.c.b16 %v3694, %v3690
    %v3843 = vpack.c.b16 %v3695, %v3691
    %v3844 = vpack.c.b16 %v3696, %v3692
    %v3845 = vpack.c.b16 %v3697, %v3693
    %v3846 = vpack.c.b16 %v3702, %v3698
    %v3847 = vpack.c.b16 %v3703, %v3699
    %v3848 = vpack.c.b16 %v3704, %v3700
    %v3849 = vpack.c.b16 %v3705, %v3701
    %v3850 = vpack.c.b16 %v3710, %v3706
    %v3851 = vpack.c.b16 %v3711, %v3707
    %v3852 = vpack.c.b16 %v3712, %v3708
    %v3853 = vpack.c.b16 %v3713, %v3709
    %v3854 = vpack.c.b16 %v3718, %v3714
    %v3855 = vpack.c.b16 %v3719, %v3715
    %v3856 = vpack.c.b16 %v3720, %v3716
    %v3857 = vpack.c.b16 %v3721, %v3717
    %v3858 = vpack.c.b16 %v3726, %v3722
    %v3859 = vpack.c.b16 %v3727, %v3723
    %v3860 = vpack.c.b16 %v3728, %v3724
    %v3861 = vpack.c.b16 %v3729, %v3725
    %v3862 = vpack.c.b16 %v3734, %v3730
    %v3863 = vpack.c.b16 %v3735, %v3731
    %v3864 = vpack.c.b16 %v3736, %v3732
    %v3865 = vpack.c.b16 %v3737, %v3733
    %3994 = vmatprep.subr.bf16.mxu0 %v3739
    %3995 = vmatpush1.bf16.msra.mxu0 %v3738
    %3996 = vmatprep.subr.bf16.mxu0 %v3743
    %3997 = vmatpush1.bf16.msra.mxu0 %v3742
    %3998 = vmatprep.subr.bf16.mxu0 %v3747
    %3999 = vmatpush1.bf16.msra.mxu0 %v3746
    %4000 = vmatprep.subr.bf16.mxu0 %v3751
    %4001 = vmatpush1.bf16.msra.mxu0 %v3750
    %4002 = vmatprep.subr.bf16.mxu0 %v3755
    %4003 = vmatpush1.bf16.msra.mxu0 %v3754
    %4004 = vmatprep.subr.bf16.mxu0 %v3759
    %4005 = vmatpush1.bf16.msra.mxu0 %v3758
    %4006 = vmatprep.subr.bf16.mxu0 %v3763
    %4007 = vmatpush1.bf16.msra.mxu0 %v3762
    %4008 = vmatprep.subr.bf16.mxu0 %v3767
    %4009 = vmatpush1.bf16.msra.mxu0 %v3766
    %4010 = vmatprep.subr.bf16.mxu0 %v3771
    %4011 = vmatpush1.bf16.msra.mxu0 %v3770
    %4012 = vmatprep.subr.bf16.mxu0 %v3775
    %4013 = vmatpush1.bf16.msra.mxu0 %v3774
    %4014 = vmatprep.subr.bf16.mxu0 %v3779
    %4015 = vmatpush1.bf16.msra.mxu0 %v3778
    %4016 = vmatprep.subr.bf16.mxu0 %v3783
    %4017 = vmatpush1.bf16.msra.mxu0 %v3782
    %4018 = vmatprep.subr.bf16.mxu0 %v3787
    %4019 = vmatpush1.bf16.msra.mxu0 %v3786
    %4020 = vmatprep.subr.bf16.mxu0 %v3791
    %4021 = vmatpush1.bf16.msra.mxu0 %v3790
    %4022 = vmatprep.subr.bf16.mxu0 %v3795
    %4023 = vmatpush1.bf16.msra.mxu0 %v3794
    %4024 = vmatprep.subr.bf16.mxu0 %v3799
    %4025 = vmatpush1.bf16.msra.mxu0 %v3798
    %4026 = vmatprep.mubr.bf16.mxu0 %v3201
    %4027 = vmatmul.mubr.bf16.gmra.mrb[0].mxu0 %v3200
    %v4028 = vpop.f32.mrb[0].mxu0
    %v4029 = vadd.f32 %v3337, %v4028
    %v4030 = vpop.f32.mrb[0].mxu0
    %v4031 = vadd.f32 %v3341, %v4030
    %v4032 = vpop.f32.mrb[0].mxu0
    %v4033 = vpop.f32.mrb[0].mxu0
    %4034 = vdwg.mxu0
    %4035 = vmatprep.subr.bf16.mxu0 %v3803
    %4036 = vmatpush1.bf16.msra.mxu0 %v3802
    %4037 = vmatprep.subr.bf16.mxu0 %v3807
    %4038 = vmatpush1.bf16.msra.mxu0 %v3806
    %4039 = vmatprep.subr.bf16.mxu0 %v3811
    %4040 = vmatpush1.bf16.msra.mxu0 %v3810
    %4041 = vmatprep.subr.bf16.mxu0 %v3815
    %4042 = vmatpush1.bf16.msra.mxu0 %v3814
    %4043 = vmatprep.subr.bf16.mxu0 %v3819
    %4044 = vmatpush1.bf16.msra.mxu0 %v3818
    %4045 = vmatprep.subr.bf16.mxu0 %v3823
    %4046 = vmatpush1.bf16.msra.mxu0 %v3822
    %4047 = vmatprep.subr.bf16.mxu0 %v3827
    %4048 = vmatpush1.bf16.msra.mxu0 %v3826
    %4049 = vmatprep.subr.bf16.mxu0 %v3831
    %4050 = vmatpush1.bf16.msra.mxu0 %v3830
    %4051 = vmatprep.subr.bf16.mxu0 %v3835
    %4052 = vmatpush1.bf16.msra.mxu0 %v3834
    %4053 = vmatprep.subr.bf16.mxu0 %v3839
    %4054 = vmatpush1.bf16.msra.mxu0 %v3838
    %4055 = vmatprep.subr.bf16.mxu0 %v3843
    %4056 = vmatpush1.bf16.msra.mxu0 %v3842
    %4057 = vmatprep.subr.bf16.mxu0 %v3847
    %4058 = vmatpush1.bf16.msra.mxu0 %v3846
    %4059 = vmatprep.subr.bf16.mxu0 %v3851
    %4060 = vmatpush1.bf16.msra.mxu0 %v3850
    %4061 = vmatprep.subr.bf16.mxu0 %v3855
    %4062 = vmatpush1.bf16.msra.mxu0 %v3854
    %4063 = vmatprep.subr.bf16.mxu0 %v3859
    %4064 = vmatpush1.bf16.msra.mxu0 %v3858
    %4065 = vmatprep.subr.bf16.mxu0 %v3863
    %4066 = vmatpush1.bf16.msra.mxu0 %v3862
    %4067 = vmatprep.mubr.bf16.mxu0 %v3203
    %4068 = vmatmul.mubr.bf16.gmra.mrb[0].mxu0 %v3202
    %v4069 = vpop.f32.mrb[0].mxu0
    %v4070 = vadd.f32 %v4029, %v4069
    %v4071 = vpop.f32.mrb[0].mxu0
    %v4072 = vadd.f32 %v4031, %v4071
    %v4073 = vpop.f32.mrb[0].mxu0
    %v4074 = vpop.f32.mrb[0].mxu0
    %4075 = vdwg.mxu0
    %4076 = vmatprep.subr.bf16.mxu0 %v3741
    %4077 = vmatpush1.bf16.msra.mxu0 %v3740
    %4078 = vmatprep.subr.bf16.mxu0 %v3745
    %4079 = vmatpush1.bf16.msra.mxu0 %v3744
    %4080 = vmatprep.subr.bf16.mxu0 %v3749
    %4081 = vmatpush1.bf16.msra.mxu0 %v3748
    %4082 = vmatprep.subr.bf16.mxu0 %v3753
    %4083 = vmatpush1.bf16.msra.mxu0 %v3752
    %4084 = vmatprep.subr.bf16.mxu0 %v3757
    %4085 = vmatpush1.bf16.msra.mxu0 %v3756
    %4086 = vmatprep.subr.bf16.mxu0 %v3761
    %4087 = vmatpush1.bf16.msra.mxu0 %v3760
    %4088 = vmatprep.subr.bf16.mxu0 %v3765
    %4089 = vmatpush1.bf16.msra.mxu0 %v3764
    %4090 = vmatprep.subr.bf16.mxu0 %v3769
    %4091 = vmatpush1.bf16.msra.mxu0 %v3768
    %4092 = vmatprep.subr.bf16.mxu0 %v3773
    %4093 = vmatpush1.bf16.msra.mxu0 %v3772
    %4094 = vmatprep.subr.bf16.mxu0 %v3777
    %4095 = vmatpush1.bf16.msra.mxu0 %v3776
    %4096 = vmatprep.subr.bf16.mxu0 %v3781
    %4097 = vmatpush1.bf16.msra.mxu0 %v3780
    %4098 = vmatprep.subr.bf16.mxu0 %v3785
    %4099 = vmatpush1.bf16.msra.mxu0 %v3784
    %4100 = vmatprep.subr.bf16.mxu0 %v3789
    %4101 = vmatpush1.bf16.msra.mxu0 %v3788
    %4102 = vmatprep.subr.bf16.mxu0 %v3793
    %4103 = vmatpush1.bf16.msra.mxu0 %v3792
    %4104 = vmatprep.subr.bf16.mxu0 %v3797
    %4105 = vmatpush1.bf16.msra.mxu0 %v3796
    %4106 = vmatprep.subr.bf16.mxu0 %v3801
    %4107 = vmatpush1.bf16.msra.mxu0 %v3800
    %4108 = vmatprep.mubr.bf16.mxu0 %v3201
    %4109 = vmatmul.mubr.bf16.gmra.mrb[0].mxu0 %v3200
    %v4110 = vpop.f32.mrb[0].mxu0
    %v4111 = vadd.f32 %v3345, %v4110
    %v4112 = vpop.f32.mrb[0].mxu0
    %v4113 = vadd.f32 %v3349, %v4112
    %v4114 = vpop.f32.mrb[0].mxu0
    %v4115 = vpop.f32.mrb[0].mxu0
    %4116 = vdwg.mxu0
    %4117 = vmatprep.subr.bf16.mxu0 %v3805
    %4118 = vmatpush1.bf16.msra.mxu0 %v3804
    %4119 = vmatprep.subr.bf16.mxu0 %v3809
    %4120 = vmatpush1.bf16.msra.mxu0 %v3808
    %4121 = vmatprep.subr.bf16.mxu0 %v3813
    %4122 = vmatpush1.bf16.msra.mxu0 %v3812
    %4123 = vmatprep.subr.bf16.mxu0 %v3817
    %4124 = vmatpush1.bf16.msra.mxu0 %v3816
    %4125 = vmatprep.subr.bf16.mxu0 %v3821
    %4126 = vmatpush1.bf16.msra.mxu0 %v3820
    %4127 = vmatprep.subr.bf16.mxu0 %v3825
    %4128 = vmatpush1.bf16.msra.mxu0 %v3824
    %4129 = vmatprep.subr.bf16.mxu0 %v3829
    %4130 = vmatpush1.bf16.msra.mxu0 %v3828
    %4131 = vmatprep.subr.bf16.mxu0 %v3833
    %4132 = vmatpush1.bf16.msra.mxu0 %v3832
    %4133 = vmatprep.subr.bf16.mxu0 %v3837
    %4134 = vmatpush1.bf16.msra.mxu0 %v3836
    %4135 = vmatprep.subr.bf16.mxu0 %v3841
    %4136 = vmatpush1.bf16.msra.mxu0 %v3840
    %4137 = vmatprep.subr.bf16.mxu0 %v3845
    %4138 = vmatpush1.bf16.msra.mxu0 %v3844
    %4139 = vmatprep.subr.bf16.mxu0 %v3849
    %4140 = vmatpush1.bf16.msra.mxu0 %v3848
    %4141 = vmatprep.subr.bf16.mxu0 %v3853
    %4142 = vmatpush1.bf16.msra.mxu0 %v3852
    %4143 = vmatprep.subr.bf16.mxu0 %v3857
    %4144 = vmatpush1.bf16.msra.mxu0 %v3856
    %4145 = vmatprep.subr.bf16.mxu0 %v3861
    %4146 = vmatpush1.bf16.msra.mxu0 %v3860
    %4147 = vmatprep.subr.bf16.mxu0 %v3865
    %4148 = vmatpush1.bf16.msra.mxu0 %v3864
    %4149 = vmatprep.mubr.bf16.mxu0 %v3203
    %4150 = vmatmul.mubr.bf16.gmra.mrb[0].mxu0 %v3202
    %v4151 = vpop.f32.mrb[0].mxu0
    %v4152 = vadd.f32 %v4111, %v4151
    %v4153 = vpop.f32.mrb[0].mxu0
    %v4154 = vadd.f32 %v4113, %v4153
    %v4155 = vpop.f32.mrb[0].mxu0
    %v4156 = vpop.f32.mrb[0].mxu0
    %4157 = vdwg.mxu0
    %vm4158 = vcmp.gt.f32.partialorder %v4070, 0.0
    %vm4159 = vcmp.gt.f32.partialorder %v4072, 0.0
    %vm4160 = vcmp.gt.f32.partialorder %v4152, 0.0
    %vm4161 = vcmp.gt.f32.partialorder %v4154, 0.0
    %v4162 = vmul.f32 %v4070, 0.2
    %v4163 = vmul.f32 %v4072, 0.2
    %v4164 = vmul.f32 %v4152, 0.2
    %v4165 = vmul.f32 %v4154, 0.2
    %v4166 = vsel %vm4158, %v4070, %v4162
    %v4167 = vsel %vm4159, %v4072, %v4163
    %v4168 = vsel %vm4160, %v4152, %v4164
    %v4169 = vsel %vm4161, %v4154, %v4165
    %v4170 = vpack.c.bf16 %v4166, %v4166
    %v4171 = vpack.c.bf16 %v4167, %v4167
    %v4172 = vpack.c.bf16 %v4168, %v4168
    %v4173 = vpack.c.bf16 %v4169, %v4169
    %v4174 = vld [vmem:[#allocation19] sm:$0xff]
    %v4175 = vld [vmem:[#allocation19 + $0x8] sm:$0xff]
    %v4176 = vld [vmem:[#allocation19 + $0x10] sm:$0xff]
    %v4177 = vld [vmem:[#allocation19 + $0x18] sm:$0xff]
    %v4178 = vld [vmem:[#allocation19 + $0x20] sm:$0xff]
    %v4179 = vld [vmem:[#allocation19 + $0x28] sm:$0xff]
    %v4180 = vld [vmem:[#allocation19 + $0x30] sm:$0xff]
    %v4181 = vld [vmem:[#allocation19 + $0x38] sm:$0xff]
    %v4182 = vld [vmem:[#allocation19 + $0x40] sm:$0xff]
    %v4183 = vld [vmem:[#allocation19 + $0x48] sm:$0xff]
    %v4184 = vld [vmem:[#allocation19 + $0x50] sm:$0xff]
    %v4185 = vld [vmem:[#allocation19 + $0x58] sm:$0xff]
    %v4186 = vld [vmem:[#allocation19 + $0x60] sm:$0xff]
    %v4187 = vld [vmem:[#allocation19 + $0x68] sm:$0xff]
    %v4188 = vld [vmem:[#allocation19 + $0x70] sm:$0xff]
    %v4189 = vld [vmem:[#allocation19 + $0x78] sm:$0xff]
    %v4190 = vld [vmem:[#allocation19 + $0x80] sm:$0xff]
    %v4191 = vld [vmem:[#allocation19 + $0x88] sm:$0xff]
    %v4192 = vld [vmem:[#allocation19 + $0x90] sm:$0xff]
    %v4193 = vld [vmem:[#allocation19 + $0x98] sm:$0xff]
    %v4194 = vld [vmem:[#allocation19 + $0xa0] sm:$0xff]
    %v4195 = vld [vmem:[#allocation19 + $0xa8] sm:$0xff]
    %v4196 = vld [vmem:[#allocation19 + $0xb0] sm:$0xff]
    %v4197 = vld [vmem:[#allocation19 + $0xb8] sm:$0xff]
    %v4198 = vld [vmem:[#allocation19 + $0xc0] sm:$0xff]
    %v4199 = vld [vmem:[#allocation19 + $0xc8] sm:$0xff]
    %v4200 = vld [vmem:[#allocation19 + $0xd0] sm:$0xff]
    %v4201 = vld [vmem:[#allocation19 + $0xd8] sm:$0xff]
    %v4202 = vld [vmem:[#allocation19 + $0xe0] sm:$0xff]
    %v4203 = vld [vmem:[#allocation19 + $0xe8] sm:$0xff]
    %v4204 = vld [vmem:[#allocation19 + $0xf0] sm:$0xff]
    %v4205 = vld [vmem:[#allocation19 + $0xf8] sm:$0xff]
    %v4206 = vld [vmem:[#allocation19 + $0x100] sm:$0xff]
    %v4207 = vld [vmem:[#allocation19 + $0x108] sm:$0xff]
    %v4208 = vld [vmem:[#allocation19 + $0x110] sm:$0xff]
    %v4209 = vld [vmem:[#allocation19 + $0x118] sm:$0xff]
    %v4210 = vld [vmem:[#allocation19 + $0x120] sm:$0xff]
    %v4211 = vld [vmem:[#allocation19 + $0x128] sm:$0xff]
    %v4212 = vld [vmem:[#allocation19 + $0x130] sm:$0xff]
    %v4213 = vld [vmem:[#allocation19 + $0x138] sm:$0xff]
    %v4214 = vld [vmem:[#allocation19 + $0x140] sm:$0xff]
    %v4215 = vld [vmem:[#allocation19 + $0x148] sm:$0xff]
    %v4216 = vld [vmem:[#allocation19 + $0x150] sm:$0xff]
    %v4217 = vld [vmem:[#allocation19 + $0x158] sm:$0xff]
    %v4218 = vld [vmem:[#allocation19 + $0x160] sm:$0xff]
    %v4219 = vld [vmem:[#allocation19 + $0x168] sm:$0xff]
    %v4220 = vld [vmem:[#allocation19 + $0x170] sm:$0xff]
    %v4221 = vld [vmem:[#allocation19 + $0x178] sm:$0xff]
    %v4222 = vld [vmem:[#allocation19 + $0x180] sm:$0xff]
    %v4223 = vld [vmem:[#allocation19 + $0x188] sm:$0xff]
    %v4224 = vld [vmem:[#allocation19 + $0x190] sm:$0xff]
    %v4225 = vld [vmem:[#allocation19 + $0x198] sm:$0xff]
    %v4226 = vld [vmem:[#allocation19 + $0x1a0] sm:$0xff]
    %v4227 = vld [vmem:[#allocation19 + $0x1a8] sm:$0xff]
    %v4228 = vld [vmem:[#allocation19 + $0x1b0] sm:$0xff]
    %v4229 = vld [vmem:[#allocation19 + $0x1b8] sm:$0xff]
    %v4230 = vld [vmem:[#allocation19 + $0x1c0] sm:$0xff]
    %v4231 = vld [vmem:[#allocation19 + $0x1c8] sm:$0xff]
    %v4232 = vld [vmem:[#allocation19 + $0x1d0] sm:$0xff]
    %v4233 = vld [vmem:[#allocation19 + $0x1d8] sm:$0xff]
    %v4234 = vld [vmem:[#allocation19 + $0x1e0] sm:$0xff]
    %v4235 = vld [vmem:[#allocation19 + $0x1e8] sm:$0xff]
    %v4236 = vld [vmem:[#allocation19 + $0x1f0] sm:$0xff]
    %v4237 = vld [vmem:[#allocation19 + $0x1f8] sm:$0xff]
    %v4238 = vld [vmem:[%s19] sm:$0x3]
    %v4240 = vlaneseq
    %v4241 = vshrl.u32 %v4240, 7
    %v4242 = vsub.s32 0, %v4241
    %v4243 = vrot.slane %v4238, %v4242
    %v4244 = vlaneseq
    %v4245 = vshrl.u32 %v4244, 7
    %v4246 = vsub.s32 1, %v4245
    %v4247 = vrot.slane %v4238, %v4246
    %v4314 = vunpack.c.l.b16 %v4174
    %v4315 = vunpack.c.h.b16 %v4174
    %v4316 = vunpack.c.l.b16 %v4175
    %v4317 = vunpack.c.h.b16 %v4175
    %v4318 = vunpack.c.l.b16 %v4176
    %v4319 = vunpack.c.h.b16 %v4176
    %v4320 = vunpack.c.l.b16 %v4177
    %v4321 = vunpack.c.h.b16 %v4177
    %v4322 = vunpack.c.l.b16 %v4178
    %v4323 = vunpack.c.h.b16 %v4178
    %v4324 = vunpack.c.l.b16 %v4179
    %v4325 = vunpack.c.h.b16 %v4179
    %v4326 = vunpack.c.l.b16 %v4180
    %v4327 = vunpack.c.h.b16 %v4180
    %v4328 = vunpack.c.l.b16 %v4181
    %v4329 = vunpack.c.h.b16 %v4181
    %v4330 = vunpack.c.l.b16 %v4182
    %v4331 = vunpack.c.h.b16 %v4182
    %v4332 = vunpack.c.l.b16 %v4183
    %v4333 = vunpack.c.h.b16 %v4183
    %v4334 = vunpack.c.l.b16 %v4184
    %v4335 = vunpack.c.h.b16 %v4184
    %v4336 = vunpack.c.l.b16 %v4185
    %v4337 = vunpack.c.h.b16 %v4185
    %v4338 = vunpack.c.l.b16 %v4186
    %v4339 = vunpack.c.h.b16 %v4186
    %v4340 = vunpack.c.l.b16 %v4187
    %v4341 = vunpack.c.h.b16 %v4187
    %v4342 = vunpack.c.l.b16 %v4188
    %v4343 = vunpack.c.h.b16 %v4188
    %v4344 = vunpack.c.l.b16 %v4189
    %v4345 = vunpack.c.h.b16 %v4189
    %v4346 = vunpack.c.l.b16 %v4190
    %v4347 = vunpack.c.h.b16 %v4190
    %v4348 = vunpack.c.l.b16 %v4191
    %v4349 = vunpack.c.h.b16 %v4191
    %v4350 = vunpack.c.l.b16 %v4192
    %v4351 = vunpack.c.h.b16 %v4192
    %v4352 = vunpack.c.l.b16 %v4193
    %v4353 = vunpack.c.h.b16 %v4193
    %v4354 = vunpack.c.l.b16 %v4194
    %v4355 = vunpack.c.h.b16 %v4194
    %v4356 = vunpack.c.l.b16 %v4195
    %v4357 = vunpack.c.h.b16 %v4195
    %v4358 = vunpack.c.l.b16 %v4196
    %v4359 = vunpack.c.h.b16 %v4196
    %v4360 = vunpack.c.l.b16 %v4197
    %v4361 = vunpack.c.h.b16 %v4197
    %v4362 = vunpack.c.l.b16 %v4198
    %v4363 = vunpack.c.h.b16 %v4198
    %v4364 = vunpack.c.l.b16 %v4199
    %v4365 = vunpack.c.h.b16 %v4199
    %v4366 = vunpack.c.l.b16 %v4200
    %v4367 = vunpack.c.h.b16 %v4200
    %v4368 = vunpack.c.l.b16 %v4201
    %v4369 = vunpack.c.h.b16 %v4201
    %v4370 = vunpack.c.l.b16 %v4202
    %v4371 = vunpack.c.h.b16 %v4202
    %v4372 = vunpack.c.l.b16 %v4203
    %v4373 = vunpack.c.h.b16 %v4203
    %v4374 = vunpack.c.l.b16 %v4204
    %v4375 = vunpack.c.h.b16 %v4204
    %v4376 = vunpack.c.l.b16 %v4205
    %v4377 = vunpack.c.h.b16 %v4205
    %v4378 = vunpack.c.l.b16 %v4206
    %v4379 = vunpack.c.h.b16 %v4206
    %v4380 = vunpack.c.l.b16 %v4207
    %v4381 = vunpack.c.h.b16 %v4207
    %v4382 = vunpack.c.l.b16 %v4208
    %v4383 = vunpack.c.h.b16 %v4208
    %v4384 = vunpack.c.l.b16 %v4209
    %v4385 = vunpack.c.h.b16 %v4209
    %v4386 = vunpack.c.l.b16 %v4210
    %v4387 = vunpack.c.h.b16 %v4210
    %v4388 = vunpack.c.l.b16 %v4211
    %v4389 = vunpack.c.h.b16 %v4211
    %v4390 = vunpack.c.l.b16 %v4212
    %v4391 = vunpack.c.h.b16 %v4212
    %v4392 = vunpack.c.l.b16 %v4213
    %v4393 = vunpack.c.h.b16 %v4213
    %v4394 = vunpack.c.l.b16 %v4214
    %v4395 = vunpack.c.h.b16 %v4214
    %v4396 = vunpack.c.l.b16 %v4215
    %v4397 = vunpack.c.h.b16 %v4215
    %v4398 = vunpack.c.l.b16 %v4216
    %v4399 = vunpack.c.h.b16 %v4216
    %v4400 = vunpack.c.l.b16 %v4217
    %v4401 = vunpack.c.h.b16 %v4217
    %v4402 = vunpack.c.l.b16 %v4218
    %v4403 = vunpack.c.h.b16 %v4218
    %v4404 = vunpack.c.l.b16 %v4219
    %v4405 = vunpack.c.h.b16 %v4219
    %v4406 = vunpack.c.l.b16 %v4220
    %v4407 = vunpack.c.h.b16 %v4220
    %v4408 = vunpack.c.l.b16 %v4221
    %v4409 = vunpack.c.h.b16 %v4221
    %v4410 = vunpack.c.l.b16 %v4222
    %v4411 = vunpack.c.h.b16 %v4222
    %v4412 = vunpack.c.l.b16 %v4223
    %v4413 = vunpack.c.h.b16 %v4223
    %v4414 = vunpack.c.l.b16 %v4224
    %v4415 = vunpack.c.h.b16 %v4224
    %v4416 = vunpack.c.l.b16 %v4225
    %v4417 = vunpack.c.h.b16 %v4225
    %v4418 = vunpack.c.l.b16 %v4226
    %v4419 = vunpack.c.h.b16 %v4226
    %v4420 = vunpack.c.l.b16 %v4227
    %v4421 = vunpack.c.h.b16 %v4227
    %v4422 = vunpack.c.l.b16 %v4228
    %v4423 = vunpack.c.h.b16 %v4228
    %v4424 = vunpack.c.l.b16 %v4229
    %v4425 = vunpack.c.h.b16 %v4229
    %v4426 = vunpack.c.l.b16 %v4230
    %v4427 = vunpack.c.h.b16 %v4230
    %v4428 = vunpack.c.l.b16 %v4231
    %v4429 = vunpack.c.h.b16 %v4231
    %v4430 = vunpack.c.l.b16 %v4232
    %v4431 = vunpack.c.h.b16 %v4232
    %v4432 = vunpack.c.l.b16 %v4233
    %v4433 = vunpack.c.h.b16 %v4233
    %v4434 = vunpack.c.l.b16 %v4234
    %v4435 = vunpack.c.h.b16 %v4234
    %v4436 = vunpack.c.l.b16 %v4235
    %v4437 = vunpack.c.h.b16 %v4235
    %v4438 = vunpack.c.l.b16 %v4236
    %v4439 = vunpack.c.h.b16 %v4236
    %v4440 = vunpack.c.l.b16 %v4237
    %v4441 = vunpack.c.h.b16 %v4237
    %v4442 = vpack.c.b16 %v4316, %v4314
    %v4443 = vpack.c.b16 %v4317, %v4315
    %v4444 = vpack.c.b16 %v4320, %v4318
    %v4445 = vpack.c.b16 %v4321, %v4319
    %v4446 = vpack.c.b16 %v4324, %v4322
    %v4447 = vpack.c.b16 %v4325, %v4323
    %v4448 = vpack.c.b16 %v4328, %v4326
    %v4449 = vpack.c.b16 %v4329, %v4327
    %v4450 = vpack.c.b16 %v4332, %v4330
    %v4451 = vpack.c.b16 %v4333, %v4331
    %v4452 = vpack.c.b16 %v4336, %v4334
    %v4453 = vpack.c.b16 %v4337, %v4335
    %v4454 = vpack.c.b16 %v4340, %v4338
    %v4455 = vpack.c.b16 %v4341, %v4339
    %v4456 = vpack.c.b16 %v4344, %v4342
    %v4457 = vpack.c.b16 %v4345, %v4343
    %v4458 = vpack.c.b16 %v4348, %v4346
    %v4459 = vpack.c.b16 %v4349, %v4347
    %v4460 = vpack.c.b16 %v4352, %v4350
    %v4461 = vpack.c.b16 %v4353, %v4351
    %v4462 = vpack.c.b16 %v4356, %v4354
    %v4463 = vpack.c.b16 %v4357, %v4355
    %v4464 = vpack.c.b16 %v4360, %v4358
    %v4465 = vpack.c.b16 %v4361, %v4359
    %v4466 = vpack.c.b16 %v4364, %v4362
    %v4467 = vpack.c.b16 %v4365, %v4363
    %v4468 = vpack.c.b16 %v4368, %v4366
    %v4469 = vpack.c.b16 %v4369, %v4367
    %v4470 = vpack.c.b16 %v4372, %v4370
    %v4471 = vpack.c.b16 %v4373, %v4371
    %v4472 = vpack.c.b16 %v4376, %v4374
    %v4473 = vpack.c.b16 %v4377, %v4375
    %v4474 = vpack.c.b16 %v4380, %v4378
    %v4475 = vpack.c.b16 %v4381, %v4379
    %v4476 = vpack.c.b16 %v4384, %v4382
    %v4477 = vpack.c.b16 %v4385, %v4383
    %v4478 = vpack.c.b16 %v4388, %v4386
    %v4479 = vpack.c.b16 %v4389, %v4387
    %v4480 = vpack.c.b16 %v4392, %v4390
    %v4481 = vpack.c.b16 %v4393, %v4391
    %v4482 = vpack.c.b16 %v4396, %v4394
    %v4483 = vpack.c.b16 %v4397, %v4395
    %v4484 = vpack.c.b16 %v4400, %v4398
    %v4485 = vpack.c.b16 %v4401, %v4399
    %v4486 = vpack.c.b16 %v4404, %v4402
    %v4487 = vpack.c.b16 %v4405, %v4403
    %v4488 = vpack.c.b16 %v4408, %v4406
    %v4489 = vpack.c.b16 %v4409, %v4407
    %v4490 = vpack.c.b16 %v4412, %v4410
    %v4491 = vpack.c.b16 %v4413, %v4411
    %v4492 = vpack.c.b16 %v4416, %v4414
    %v4493 = vpack.c.b16 %v4417, %v4415
    %v4494 = vpack.c.b16 %v4420, %v4418
    %v4495 = vpack.c.b16 %v4421, %v4419
    %v4496 = vpack.c.b16 %v4424, %v4422
    %v4497 = vpack.c.b16 %v4425, %v4423
    %v4498 = vpack.c.b16 %v4428, %v4426
    %v4499 = vpack.c.b16 %v4429, %v4427
    %v4500 = vpack.c.b16 %v4432, %v4430
    %v4501 = vpack.c.b16 %v4433, %v4431
    %v4502 = vpack.c.b16 %v4436, %v4434
    %v4503 = vpack.c.b16 %v4437, %v4435
    %v4504 = vpack.c.b16 %v4440, %v4438
    %v4505 = vpack.c.b16 %v4441, %v4439
    %4570 = vmatprep.subr.bf16.mxu0 %v4443
    %4571 = vmatpush1.bf16.msra.mxu0 %v4442
    %4572 = vmatprep.subr.bf16.mxu0 %v4445
    %4573 = vmatpush1.bf16.msra.mxu0 %v4444
    %4574 = vmatprep.subr.bf16.mxu0 %v4447
    %4575 = vmatpush1.bf16.msra.mxu0 %v4446
    %4576 = vmatprep.subr.bf16.mxu0 %v4449
    %4577 = vmatpush1.bf16.msra.mxu0 %v4448
    %4578 = vmatprep.subr.bf16.mxu0 %v4451
    %4579 = vmatpush1.bf16.msra.mxu0 %v4450
    %4580 = vmatprep.subr.bf16.mxu0 %v4453
    %4581 = vmatpush1.bf16.msra.mxu0 %v4452
    %4582 = vmatprep.subr.bf16.mxu0 %v4455
    %4583 = vmatpush1.bf16.msra.mxu0 %v4454
    %4584 = vmatprep.subr.bf16.mxu0 %v4457
    %4585 = vmatpush1.bf16.msra.mxu0 %v4456
    %4586 = vmatprep.subr.bf16.mxu0 %v4459
    %4587 = vmatpush1.bf16.msra.mxu0 %v4458
    %4588 = vmatprep.subr.bf16.mxu0 %v4461
    %4589 = vmatpush1.bf16.msra.mxu0 %v4460
    %4590 = vmatprep.subr.bf16.mxu0 %v4463
    %4591 = vmatpush1.bf16.msra.mxu0 %v4462
    %4592 = vmatprep.subr.bf16.mxu0 %v4465
    %4593 = vmatpush1.bf16.msra.mxu0 %v4464
    %4594 = vmatprep.subr.bf16.mxu0 %v4467
    %4595 = vmatpush1.bf16.msra.mxu0 %v4466
    %4596 = vmatprep.subr.bf16.mxu0 %v4469
    %4597 = vmatpush1.bf16.msra.mxu0 %v4468
    %4598 = vmatprep.subr.bf16.mxu0 %v4471
    %4599 = vmatpush1.bf16.msra.mxu0 %v4470
    %4600 = vmatprep.subr.bf16.mxu0 %v4473
    %4601 = vmatpush1.bf16.msra.mxu0 %v4472
    %4602 = vmatprep.mubr.bf16.mxu0 %v4171
    %4603 = vmatmul.mubr.bf16.gmra.mrb[0].mxu0 %v4170
    %v4604 = vpop.f32.mrb[0].mxu0
    %v4605 = vadd.f32 %v4243, %v4604
    %v4606 = vpop.f32.mrb[0].mxu0
    %v4607 = vadd.f32 %v4247, %v4606
    %v4608 = vpop.f32.mrb[0].mxu0
    %v4609 = vpop.f32.mrb[0].mxu0
    %4610 = vdwg.mxu0
    %4611 = vmatprep.subr.bf16.mxu0 %v4475
    %4612 = vmatpush1.bf16.msra.mxu0 %v4474
    %4613 = vmatprep.subr.bf16.mxu0 %v4477
    %4614 = vmatpush1.bf16.msra.mxu0 %v4476
    %4615 = vmatprep.subr.bf16.mxu0 %v4479
    %4616 = vmatpush1.bf16.msra.mxu0 %v4478
    %4617 = vmatprep.subr.bf16.mxu0 %v4481
    %4618 = vmatpush1.bf16.msra.mxu0 %v4480
    %4619 = vmatprep.subr.bf16.mxu0 %v4483
    %4620 = vmatpush1.bf16.msra.mxu0 %v4482
    %4621 = vmatprep.subr.bf16.mxu0 %v4485
    %4622 = vmatpush1.bf16.msra.mxu0 %v4484
    %4623 = vmatprep.subr.bf16.mxu0 %v4487
    %4624 = vmatpush1.bf16.msra.mxu0 %v4486
    %4625 = vmatprep.subr.bf16.mxu0 %v4489
    %4626 = vmatpush1.bf16.msra.mxu0 %v4488
    %4627 = vmatprep.subr.bf16.mxu0 %v4491
    %4628 = vmatpush1.bf16.msra.mxu0 %v4490
    %4629 = vmatprep.subr.bf16.mxu0 %v4493
    %4630 = vmatpush1.bf16.msra.mxu0 %v4492
    %4631 = vmatprep.subr.bf16.mxu0 %v4495
    %4632 = vmatpush1.bf16.msra.mxu0 %v4494
    %4633 = vmatprep.subr.bf16.mxu0 %v4497
    %4634 = vmatpush1.bf16.msra.mxu0 %v4496
    %4635 = vmatprep.subr.bf16.mxu0 %v4499
    %4636 = vmatpush1.bf16.msra.mxu0 %v4498
    %4637 = vmatprep.subr.bf16.mxu0 %v4501
    %4638 = vmatpush1.bf16.msra.mxu0 %v4500
    %4639 = vmatprep.subr.bf16.mxu0 %v4503
    %4640 = vmatpush1.bf16.msra.mxu0 %v4502
    %4641 = vmatprep.subr.bf16.mxu0 %v4505
    %4642 = vmatpush1.bf16.msra.mxu0 %v4504
    %4643 = vmatprep.mubr.bf16.mxu0 %v4173
    %4644 = vmatmul.mubr.bf16.gmra.mrb[0].mxu0 %v4172
    %v4645 = vpop.f32.mrb[0].mxu0
    %v4646 = vadd.f32 %v4605, %v4645
    %v4647 = vpop.f32.mrb[0].mxu0
    %v4648 = vadd.f32 %v4607, %v4647
    %v4649 = vpop.f32.mrb[0].mxu0
    %v4650 = vpop.f32.mrb[0].mxu0
    %4651 = vdwg.mxu0
    %v4652 = vxor.u32 %v4646, 2147483648
    %v4653 = vxor.u32 %v4648, 2147483648
    %v4654 = vmul.f32 %v4652, 1.442695
    %v4655 = vpow.pop %v4654
    %v4656 = vmul.f32 %v4653, 1.442695
    %v4657 = vpow.pop %v4656
    %v4658 = vadd.f32 %v4655, 1.0
    %v4659 = vadd.f32 %v4657, 1.0
    %v4660 = vrcp.pop %v4658
    %v4661 = vmul.f32 1.0, %v4660
    %v4662 = vrcp.pop %v4659
    %v4663 = vmul.f32 1.0, %v4662
    %4664 = vst [vmem:[#allocation23] sm:$0xff] %v4661
    %4665 = vst [vmem:[#allocation23 + $0x8] sm:$0xff] %v4663
    // Predicated region
    $region126: #{tpu_custom_call.1} parent=1 // pred_check
      _
    $region127: #{tpu_custom_call.1} parent=1 // pred_check_branch
      %4667 = sbr.rel (0) target = $region129
    $region128: #{tpu_custom_call.1} parent=1 // pred_region
      %s4669 = ssub.s32 128, 128
      %4670 = vsyncadd [#allocation4], %s4669
      %s4672 = sshll.u32 [#allocation20], 4
      %s4673 = int_to_ptr.vmem [resolvable:$true] %s4672
      %4675 = dma.vmem_to_hbm [thread:$0]  %s4673, 128, %s20, [#allocation4]
    $region129: #{tpu_custom_call.1} parent=1 // pred_fallthru
      _
    // Predicated region
    $region130: #{tpu_custom_call.1} parent=1 // pred_check
      _
    $region131: #{tpu_custom_call.1} parent=1 // pred_check_branch
      %4677 = sbr.rel (0) target = $region133
    $region132: #{tpu_custom_call.1} parent=1 // pred_region
      %s4679 = ssub.s32 128, 128
      %4680 = vsyncadd [#allocation22], %s4679
      %s4682 = sshll.u32 [#allocation21], 4
      %s4683 = int_to_ptr.vmem [resolvable:$true] %s4682
      %4685 = dma.vmem_to_hbm [thread:$0]  %s4683, 128, %s21, [#allocation22]
    $region133: #{tpu_custom_call.1} parent=1 // pred_fallthru
      _
    // Predicated region
    $region134: #{tpu_custom_call.1} parent=1 // pred_check
      _
    $region135: #{tpu_custom_call.1} parent=1 // pred_check_branch
      %4687 = sbr.rel (0) target = $region137
    $region136: #{tpu_custom_call.1} parent=1 // pred_region
      %s4689 = ssub.s32 256, 256
      %4690 = vsyncadd [#allocation22], %s4689
      %s4692 = sshll.u32 [#allocation23], 4
      %s4693 = int_to_ptr.vmem [resolvable:$true] %s4692
      %4695 = dma.vmem_to_hbm [thread:$0]  %s4693, 256, %s22, [#allocation22]
    $region137: #{tpu_custom_call.1} parent=1 // pred_fallthru
      _
    // Predicated region
    $region138: #{tpu_custom_call.1} parent=1 // pred_check
      _
    $region139: #{tpu_custom_call.1} parent=1 // pred_check_branch
      %4697 = sbr.rel (0) target = $region141
    $region140: #{tpu_custom_call.1} parent=1 // pred_region
      %4698 = dma.done [#allocation4], 128
    $region141: #{tpu_custom_call.1} parent=1 // pred_fallthru
      _
    // Predicated region
    $region142: #{tpu_custom_call.1} parent=1 // pred_check
      _
    $region143: #{tpu_custom_call.1} parent=1 // pred_check_branch
      %4700 = sbr.rel (0) target = $region145
    $region144: #{tpu_custom_call.1} parent=1 // pred_region
      %4701 = dma.done [#allocation22], 128
    $region145: #{tpu_custom_call.1} parent=1 // pred_fallthru
      _
    // Predicated region
    $region146: #{tpu_custom_call.1} parent=1 // pred_check
      _
    $region147: #{tpu_custom_call.1} parent=1 // pred_check_branch
      %4703 = sbr.rel (0) target = $region149
    $region148: #{tpu_custom_call.1} parent=1 // pred_region
      %4704 = dma.done [#allocation22], 256
    $region149: #{tpu_custom_call.1} parent=1 // pred_fallthru
      _
    %4705 = vsyncpa [#allocation3], 1
    %4706 = vsyncpa [#allocation6], 1
    %4707 = vsyncpa [#allocation9], 1
    %4708 = vsyncpa [#allocation12], 1
    %4709 = vsyncpa [#allocation15], 1
    %4710 = vsyncpa [#allocation18], 1
    %4711 = vsyncpa [#allocation4], 1
    %4712 = vsyncpa [#allocation22], 1

</llo_original>
